<compile_context>
chip_gen: v5e
topology: v5e:2x2
jax: 0.10.0
libtpu: 0.0.40
codegen_flags: <defaults>
</compile_context>

<pallas_src>
import jax
import jax.numpy as jnp
from jax import lax
from jax.experimental import pallas as pl
from jax.experimental.pallas import tpu as pltpu

# f32 keeps numerical parity with the PyTorch module.  On v6e/v7x this can be
# set to jnp.bfloat16 to halve operand bytes; accumulation and the
# bias/ReLU/tanh epilogue stay f32 inside the kernel either way.
COMPUTE_DTYPE = jnp.float32


# ----------------------------------------------------------------------------
# Weight -> operator preprocessing (pure JAX, runs once per weight set)
# ----------------------------------------------------------------------------
def _conv_row_select(H, OH, k, s, p):
    """(k, OH, H): R_i[oh, h] = 1 iff h == s*oh + i - p (zero row => zero pad)."""
    oh = jnp.arange(OH)[:, None]
    h = jnp.arange(H)[None, :]
    return jnp.stack([(h == s * oh + i - p).astype(jnp.float32) for i in range(k)])


def _convT_row_select(H, OH, k, s, p):
    """(k, OH, H): R_i[oh, h] = 1 iff oh == s*h + i - p (cropping handled by range)."""
    oh = jnp.arange(OH)[:, None]
    h = jnp.arange(H)[None, :]
    return jnp.stack([(oh == s * h + i - p).astype(jnp.float32) for i in range(k)])


def _conv_col_weights(w, W, OW, s, p):
    """w: (OC, IC, k, k) -> (k, W*IC, OW*OC); C_i[(w,c),(ow,oc)] = w[oc,c,i,w-s*ow+p]."""
    OC, IC, k, _ = w.shape
    wv = jnp.arange(W)[:, None]
    ov = jnp.arange(OW)[None, :]
    j = wv - s * ov + p                          # (W, OW) width tap index
    valid = (j >= 0) & (j < k)
    jc = jnp.clip(j, 0, k - 1)
    mats = []
    for i in range(k):
        g = w[:, :, i, :][:, :, jc]              # (OC, IC, W, OW)
        g = jnp.where(valid[None, None], g, 0.0)
        mats.append(g.transpose(2, 1, 3, 0).reshape(W * IC, OW * OC))
    return jnp.stack(mats)


def _convT_col_weights(wt, W, OW, s, p):
    """wt: (IC, OC, k, k) -> (k, W*IC, OW*OC); C_i[(w,c),(ow,oc)] = wt[c,oc,i,ow-s*w+p]."""
    IC, OC, k, _ = wt.shape
    wv = jnp.arange(W)[:, None]
    ov = jnp.arange(OW)[None, :]
    j = ov - s * wv + p
    valid = (j >= 0) & (j < k)
    jc = jnp.clip(j, 0, k - 1)
    mats = []
    for i in range(k):
        g = wt[:, :, i, :][:, :, jc]             # (IC, OC, W, OW)
        g = jnp.where(valid[None, None], g, 0.0)
        mats.append(g.transpose(2, 0, 3, 1).reshape(W * IC, OW * OC))
    return jnp.stack(mats)


def _pool_selects(H, W, C):
    """MaxPool2d(2,2): row selectors (2, H/2, H) and column selectors (2, W*C, W/2*C)."""
    OH, OW = H // 2, W // 2
    oh = jnp.arange(OH)[:, None]
    h = jnp.arange(H)[None, :]
    rows = jnp.stack([(h == 2 * oh + d).astype(jnp.float32) for d in range(2)])
    wv = jnp.arange(W)[:, None]
    ow = jnp.arange(OW)[None, :]
    eye = jnp.eye(C, dtype=jnp.float32)
    cols = jnp.stack([jnp.kron((wv == 2 * ow + d).astype(jnp.float32), eye)
                      for d in range(2)])
    return rows, cols


def build_operators(params, H, W):
    """Fold all conv/deconv weights into per-tap (row-gather, col-weight) operators."""
    # encoder conv1: 3 -> 16, k4 s2 p1
    H1, W1 = H // 2, W // 2
    r1 = _conv_row_select(H, H1, 4, 2, 1)
    c1 = _conv_col_weights(params["conv1_w"], W, W1, 2, 1)
    b1 = jnp.tile(params["conv1_b"], W1)[None, :]
    # encoder conv2: 16 -> 4, k4 s2 p1
    H2, W2 = H1 // 2, W1 // 2
    r2 = _conv_row_select(H1, H2, 4, 2, 1)
    c2 = _conv_col_weights(params["conv2_w"], W1, W2, 2, 1)
    b2 = jnp.tile(params["conv2_b"], W2)[None, :]
    # maxpool 2x2 (channels = conv2 out channels)
    C2 = params["conv2_w"].shape[0]
    H3, W3 = H2 // 2, W2 // 2
    rp, sp = _pool_selects(H2, W2, C2)
    # decoder deconv1: ConvTranspose2d(4, 16, 4, stride=4)
    H4, W4 = (H3 - 1) * 4 + 4, (W3 - 1) * 4 + 4
    r3 = _convT_row_select(H3, H4, 4, 4, 0)
    c3 = _convT_col_weights(params["deconv1_w"], W3, W4, 4, 0)
    b3 = jnp.tile(params["deconv1_b"], W4)[None, :]
    # decoder deconv2: ConvTranspose2d(16, 3, 4, stride=2, padding=1)
    H5, W5 = (H4 - 1) * 2 + 2, (W4 - 1) * 2 + 2
    r4 = _convT_row_select(H4, H5, 4, 2, 1)
    c4 = _convT_col_weights(params["deconv2_w"], W4, W5, 2, 1)
    b4 = jnp.tile(params["deconv2_b"], W5)[None, :]

    ops = (r1, c1, b1, r2, c2, b2, rp, sp, r3, c3, b3, r4, c4, b4)
    return tuple(o.astype(COMPUTE_DTYPE) for o in ops), (H5, W5)


# ----------------------------------------------------------------------------
# The single fused Pallas kernel (one image per grid step, all stages in VMEM)
# ----------------------------------------------------------------------------
def _fused_autoencoder_kernel(a0_ref,
                              r1_ref, c1_ref, b1_ref,
                              r2_ref, c2_ref, b2_ref,
                              rp_ref, sp_ref,
                              r3_ref, c3_ref, b3_ref,
                              r4_ref, c4_ref, b4_ref,
                              out_ref):
    dt = a0_ref.dtype

    def layer(a, r_ref, c_ref, b_ref):
        # act-free core:  sum_i (R_i @ A) @ C_i  + bias ; f32 MXU accumulation.
        acc = None
        for i in range(r_ref.shape[0]):
            t = jnp.dot(r_ref[i], a, preferred_element_type=jnp.float32)
            t = jnp.dot(t, c_ref[i], preferred_element_type=jnp.float32)
            acc = t if acc is None else acc + t
        return acc + b_ref[...].astype(jnp.float32)

    a0 = a0_ref[...]
    # ---- encoder ----
    a1 = jnp.maximum(layer(a0, r1_ref, c1_ref, b1_ref), 0.0).astype(dt)
    a2 = jnp.maximum(layer(a1, r2_ref, c2_ref, b2_ref), 0.0).astype(dt)
    # MaxPool2d(2,2): pure 0/1 selections commute with elementwise max.
    pooled = None
    for dh in range(2):
        ra = jnp.dot(rp_ref[dh], a2, preferred_element_type=jnp.float32)
        for dw in range(2):
            t = jnp.dot(ra, sp_ref[dw], preferred_element_type=jnp.float32)
            pooled = t if pooled is None else jnp.maximum(pooled, t)
    a3 = pooled.astype(dt)
    # ---- decoder ----
    a4 = jnp.maximum(layer(a3, r3_ref, c3_ref, b3_ref), 0.0).astype(dt)
    a5 = jnp.tanh(layer(a4, r4_ref, c4_ref, b4_ref))
    out_ref[...] = a5.astype(out_ref.dtype)


def fused_forward(ops, x, out_channels):
    N, C, H, W = x.shape
    # single layout conversion at the model input boundary: NCHW -> (N*H, W*C)
    a0 = x.transpose(0, 2, 3, 1).reshape(N * H, W * C).astype(COMPUTE_DTYPE)
    out_cols = W * out_channels              # autoencoder reconstructs (H, W)

    in_specs = [pl.BlockSpec((H, W * C), lambda b: (b, 0))]
    for o in ops:
        in_specs.append(pl.BlockSpec(o.shape, lambda b, _nd=o.ndim: (0,) * _nd))

    y = pl.pallas_call(
        _fused_autoencoder_kernel,
        out_shape=jax.ShapeDtypeStruct((N * H, out_cols), jnp.float32),
        grid=(N,),                           # one image per step; scales in batch
        in_specs=in_specs,
        out_specs=pl.BlockSpec((H, out_cols), lambda b: (b, 0)),
        compiler_params=pltpu.CompilerParams(
            dimension_semantics=("parallel",)),   # megacore split on v7x
    )(a0, *ops)
    # single layout conversion at the model output boundary: -> NCHW
    return y.reshape(N, H, W, out_channels).transpose(0, 3, 1, 2)


def conv_autoencoder_forward(params, x):
    N, C, H, W = x.shape
    ops, _ = build_operators(params, H, W)
    out_channels = params["deconv2_w"].shape[1]
    return fused_forward(ops, x, out_channels)


# ----------------------------------------------------------------------------
# Pure-JAX reference (lax convolutions) used only to validate the kernel
# ----------------------------------------------------------------------------
def reference_forward(params, x):
    dn = ("NCHW", "OIHW", "NCHW")
    hp = lax.Precision.HIGHEST

    def conv(h, w, b, s, p):
        y = lax.conv_general_dilated(h, w, (s, s), [(p, p), (p, p)],
                                     dimension_numbers=dn, precision=hp)
        return y + b[None, :, None, None]

    def conv_t(h, w, b, s, p):
        k = w.shape[2]
        wf = jnp.flip(w, (2, 3)).transpose(1, 0, 2, 3)
        y = lax.conv_general_dilated(h, wf, (1, 1), [(k - 1 - p, k - 1 - p)] * 2,
                                     lhs_dilation=(s, s), dimension_numbers=dn,
                                     precision=hp)
        return y + b[None, :, None, None]

    h = jax.nn.relu(conv(x, params["conv1_w"], params["conv1_b"], 2, 1))
    h = jax.nn.relu(conv(h, params["conv2_w"], params["conv2_b"], 2, 1))
    h = lax.reduce_window(h, -jnp.inf, lax.max, (1, 1, 2, 2), (1, 1, 2, 2), "VALID")
    h = jax.nn.relu(conv_t(h, params["deconv1_w"], params["deconv1_b"], 4, 0))
    h = jnp.tanh(conv_t(h, params["deconv2_w"], params["deconv2_b"], 2, 1))
    return h


# ----------------------------------------------------------------------------
# Deterministic synthetic parameters + demo
# ----------------------------------------------------------------------------
def init_params(key):
    ks = jax.random.split(key, 8)
    w = lambda k, shape: 0.1 * jax.random.normal(k, shape, jnp.float32)
    return {
        "conv1_w": w(ks[0], (16, 3, 4, 4)),   "conv1_b": w(ks[1], (16,)),
        "conv2_w": w(ks[2], (4, 16, 4, 4)),   "conv2_b": w(ks[3], (4,)),
        "deconv1_w": w(ks[4], (4, 16, 4, 4)), "deconv1_b": w(ks[5], (16,)),
        "deconv2_w": w(ks[6], (16, 3, 4, 4)), "deconv2_b": w(ks[7], (3,)),
    }


if __name__ == "__main__":
    key = jax.random.PRNGKey(0)
    pkey, xkey = jax.random.split(key)
    params = init_params(pkey)
    # Small NCHW input consistent with the module (3-channel square images).
    x = jax.random.normal(xkey, (2, 3, 32, 32), jnp.float32)

    y = jax.jit(conv_autoencoder_forward)(params, x)
    jax.block_until_ready(y)

    assert y.shape == (2, 3, 32, 32), y.shape
    assert bool(jnp.all(jnp.abs(y) <= 1.0)), "tanh output must lie in [-1, 1]"

    # Cross-check against the pure-JAX reference implementation.
    y_ref = jax.jit(reference_forward)(params, x)
    err = float(jnp.max(jnp.abs(y - y_ref)))
    assert err < 5e-2, f"mismatch vs pure-JAX reference: max abs err {err}"

    print("KERNEL_OK")
</pallas_src>

<mosaic_0001>
module attributes {stable_mosaic.version = 11 : i64} {
  func.func @_fused_autoencoder_kernel(%arg0: i32, %arg1: memref<32x96xf32, #tpu.memory_space<vmem>>, %arg2: memref<4x16x32xf32, #tpu.memory_space<vmem>>, %arg3: memref<4x96x256xf32, #tpu.memory_space<vmem>>, %arg4: memref<1x256xf32, #tpu.memory_space<vmem>>, %arg5: memref<4x8x16xf32, #tpu.memory_space<vmem>>, %arg6: memref<4x256x32xf32, #tpu.memory_space<vmem>>, %arg7: memref<1x32xf32, #tpu.memory_space<vmem>>, %arg8: memref<2x4x8xf32, #tpu.memory_space<vmem>>, %arg9: memref<2x32x16xf32, #tpu.memory_space<vmem>>, %arg10: memref<4x16x4xf32, #tpu.memory_space<vmem>>, %arg11: memref<4x16x256xf32, #tpu.memory_space<vmem>>, %arg12: memref<1x256xf32, #tpu.memory_space<vmem>>, %arg13: memref<4x32x16xf32, #tpu.memory_space<vmem>>, %arg14: memref<4x256x96xf32, #tpu.memory_space<vmem>>, %arg15: memref<1x96xf32, #tpu.memory_space<vmem>>, %arg16: memref<32x96xf32, #tpu.memory_space<vmem>>) attributes {dimension_semantics = [#tpu.dimension_semantics<parallel>], iteration_bounds = array<i64: 2>, scalar_prefetch = 0 : i64, scratch_operands = 0 : i64, tpu.core_type = #tpu.core_type<tc>, window_params = [{transform_indices = @transform_0, window_bounds = array<i64: 32, 96>}, {pipeline_mode = #tpu.pipeline_mode<synchronous>, transform_indices = @transform_1, window_bounds = array<i64: 4, 16, 32>}, {pipeline_mode = #tpu.pipeline_mode<synchronous>, transform_indices = @transform_2, window_bounds = array<i64: 4, 96, 256>}, {pipeline_mode = #tpu.pipeline_mode<synchronous>, transform_indices = @transform_3, window_bounds = array<i64: 1, 256>}, {pipeline_mode = #tpu.pipeline_mode<synchronous>, transform_indices = @transform_4, window_bounds = array<i64: 4, 8, 16>}, {pipeline_mode = #tpu.pipeline_mode<synchronous>, transform_indices = @transform_5, window_bounds = array<i64: 4, 256, 32>}, {pipeline_mode = #tpu.pipeline_mode<synchronous>, transform_indices = @transform_6, window_bounds = array<i64: 1, 32>}, {pipeline_mode = #tpu.pipeline_mode<synchronous>, transform_indices = @transform_7, window_bounds = array<i64: 2, 4, 8>}, {pipeline_mode = #tpu.pipeline_mode<synchronous>, transform_indices = @transform_8, window_bounds = array<i64: 2, 32, 16>}, {pipeline_mode = #tpu.pipeline_mode<synchronous>, transform_indices = @transform_9, window_bounds = array<i64: 4, 16, 4>}, {pipeline_mode = #tpu.pipeline_mode<synchronous>, transform_indices = @transform_10, window_bounds = array<i64: 4, 16, 256>}, {pipeline_mode = #tpu.pipeline_mode<synchronous>, transform_indices = @transform_11, window_bounds = array<i64: 1, 256>}, {pipeline_mode = #tpu.pipeline_mode<synchronous>, transform_indices = @transform_12, window_bounds = array<i64: 4, 32, 16>}, {pipeline_mode = #tpu.pipeline_mode<synchronous>, transform_indices = @transform_13, window_bounds = array<i64: 4, 256, 96>}, {pipeline_mode = #tpu.pipeline_mode<synchronous>, transform_indices = @transform_14, window_bounds = array<i64: 1, 96>}, {transform_indices = @transform_15, window_bounds = array<i64: 32, 96>}]} {
    %c0 = arith.constant 0 : index
    %c0_0 = arith.constant 0 : index
    %0 = vector.load %arg1[%c0, %c0_0] : memref<32x96xf32, #tpu.memory_space<vmem>>, vector<32x96xf32>
    %c0_1 = arith.constant 0 : index
    %c0_2 = arith.constant 0 : index
    %c0_3 = arith.constant 0 : index
    %1 = vector.load %arg2[%c0_1, %c0_2, %c0_3] : memref<4x16x32xf32, #tpu.memory_space<vmem>>, vector<1x16x32xf32>
    %2 = vector.shape_cast %1 : vector<1x16x32xf32> to vector<16x32xf32>
    %cst = arith.constant dense<0.000000e+00> : vector<16x96xf32>
    %3 = tpu.matmul %2, %0, %cst {dimension_numbers = #tpu.dot_dimension_numbers<[1], [0], [0], [1], [0, 0, 1, 1], [], []>} : vector<16x32xf32>, vector<32x96xf32>, vector<16x96xf32> -> vector<16x96xf32>
    %c0_4 = arith.constant 0 : index
    %c0_5 = arith.constant 0 : index
    %c0_6 = arith.constant 0 : index
    %4 = vector.load %arg3[%c0_4, %c0_5, %c0_6] : memref<4x96x256xf32, #tpu.memory_space<vmem>>, vector<1x96x256xf32>
    %5 = vector.shape_cast %4 : vector<1x96x256xf32> to vector<96x256xf32>
    %cst_7 = arith.constant dense<0.000000e+00> : vector<16x256xf32>
    %6 = tpu.matmul %3, %5, %cst_7 {dimension_numbers = #tpu.dot_dimension_numbers<[1], [0], [0], [1], [0, 0, 1, 1], [], []>} : vector<16x96xf32>, vector<96x256xf32>, vector<16x256xf32> -> vector<16x256xf32>
    %c1 = arith.constant 1 : index
    %c0_8 = arith.constant 0 : index
    %c0_9 = arith.constant 0 : index
    %7 = vector.load %arg2[%c1, %c0_8, %c0_9] : memref<4x16x32xf32, #tpu.memory_space<vmem>>, vector<1x16x32xf32>
    %8 = vector.shape_cast %7 : vector<1x16x32xf32> to vector<16x32xf32>
    %cst_10 = arith.constant dense<0.000000e+00> : vector<16x96xf32>
    %9 = tpu.matmul %8, %0, %cst_10 {dimension_numbers = #tpu.dot_dimension_numbers<[1], [0], [0], [1], [0, 0, 1, 1], [], []>} : vector<16x32xf32>, vector<32x96xf32>, vector<16x96xf32> -> vector<16x96xf32>
    %c1_11 = arith.constant 1 : index
    %c0_12 = arith.constant 0 : index
    %c0_13 = arith.constant 0 : index
    %10 = vector.load %arg3[%c1_11, %c0_12, %c0_13] : memref<4x96x256xf32, #tpu.memory_space<vmem>>, vector<1x96x256xf32>
    %11 = vector.shape_cast %10 : vector<1x96x256xf32> to vector<96x256xf32>
    %cst_14 = arith.constant dense<0.000000e+00> : vector<16x256xf32>
    %12 = tpu.matmul %9, %11, %cst_14 {dimension_numbers = #tpu.dot_dimension_numbers<[1], [0], [0], [1], [0, 0, 1, 1], [], []>} : vector<16x96xf32>, vector<96x256xf32>, vector<16x256xf32> -> vector<16x256xf32>
    %13 = arith.addf %6, %12 : vector<16x256xf32>
    %c2 = arith.constant 2 : index
    %c0_15 = arith.constant 0 : index
    %c0_16 = arith.constant 0 : index
    %14 = vector.load %arg2[%c2, %c0_15, %c0_16] : memref<4x16x32xf32, #tpu.memory_space<vmem>>, vector<1x16x32xf32>
    %15 = vector.shape_cast %14 : vector<1x16x32xf32> to vector<16x32xf32>
    %cst_17 = arith.constant dense<0.000000e+00> : vector<16x96xf32>
    %16 = tpu.matmul %15, %0, %cst_17 {dimension_numbers = #tpu.dot_dimension_numbers<[1], [0], [0], [1], [0, 0, 1, 1], [], []>} : vector<16x32xf32>, vector<32x96xf32>, vector<16x96xf32> -> vector<16x96xf32>
    %c2_18 = arith.constant 2 : index
    %c0_19 = arith.constant 0 : index
    %c0_20 = arith.constant 0 : index
    %17 = vector.load %arg3[%c2_18, %c0_19, %c0_20] : memref<4x96x256xf32, #tpu.memory_space<vmem>>, vector<1x96x256xf32>
    %18 = vector.shape_cast %17 : vector<1x96x256xf32> to vector<96x256xf32>
    %cst_21 = arith.constant dense<0.000000e+00> : vector<16x256xf32>
    %19 = tpu.matmul %16, %18, %cst_21 {dimension_numbers = #tpu.dot_dimension_numbers<[1], [0], [0], [1], [0, 0, 1, 1], [], []>} : vector<16x96xf32>, vector<96x256xf32>, vector<16x256xf32> -> vector<16x256xf32>
    %20 = arith.addf %13, %19 : vector<16x256xf32>
    %c3 = arith.constant 3 : index
    %c0_22 = arith.constant 0 : index
    %c0_23 = arith.constant 0 : index
    %21 = vector.load %arg2[%c3, %c0_22, %c0_23] : memref<4x16x32xf32, #tpu.memory_space<vmem>>, vector<1x16x32xf32>
    %22 = vector.shape_cast %21 : vector<1x16x32xf32> to vector<16x32xf32>
    %cst_24 = arith.constant dense<0.000000e+00> : vector<16x96xf32>
    %23 = tpu.matmul %22, %0, %cst_24 {dimension_numbers = #tpu.dot_dimension_numbers<[1], [0], [0], [1], [0, 0, 1, 1], [], []>} : vector<16x32xf32>, vector<32x96xf32>, vector<16x96xf32> -> vector<16x96xf32>
    %c3_25 = arith.constant 3 : index
    %c0_26 = arith.constant 0 : index
    %c0_27 = arith.constant 0 : index
    %24 = vector.load %arg3[%c3_25, %c0_26, %c0_27] : memref<4x96x256xf32, #tpu.memory_space<vmem>>, vector<1x96x256xf32>
    %25 = vector.shape_cast %24 : vector<1x96x256xf32> to vector<96x256xf32>
    %cst_28 = arith.constant dense<0.000000e+00> : vector<16x256xf32>
    %26 = tpu.matmul %23, %25, %cst_28 {dimension_numbers = #tpu.dot_dimension_numbers<[1], [0], [0], [1], [0, 0, 1, 1], [], []>} : vector<16x96xf32>, vector<96x256xf32>, vector<16x256xf32> -> vector<16x256xf32>
    %27 = arith.addf %20, %26 : vector<16x256xf32>
    %c0_29 = arith.constant 0 : index
    %c0_30 = arith.constant 0 : index
    %28 = vector.load %arg4[%c0_29, %c0_30] : memref<1x256xf32, #tpu.memory_space<vmem>>, vector<1x256xf32>
    %29 = vector.broadcast %28 : vector<1x256xf32> to vector<16x256xf32>
    %30 = arith.addf %27, %29 : vector<16x256xf32>
    %cst_31 = arith.constant 0.000000e+00 : f32
    %31 = vector.broadcast %cst_31 : f32 to vector<16x256xf32>
    %32 = arith.maximumf %30, %31 : vector<16x256xf32>
    %c0_32 = arith.constant 0 : index
    %c0_33 = arith.constant 0 : index
    %c0_34 = arith.constant 0 : index
    %33 = vector.load %arg5[%c0_32, %c0_33, %c0_34] : memref<4x8x16xf32, #tpu.memory_space<vmem>>, vector<1x8x16xf32>
    %34 = vector.shape_cast %33 : vector<1x8x16xf32> to vector<8x16xf32>
    %cst_35 = arith.constant dense<0.000000e+00> : vector<8x256xf32>
    %35 = tpu.matmul %34, %32, %cst_35 {dimension_numbers = #tpu.dot_dimension_numbers<[1], [0], [0], [1], [0, 0, 1, 1], [], []>} : vector<8x16xf32>, vector<16x256xf32>, vector<8x256xf32> -> vector<8x256xf32>
    %c0_36 = arith.constant 0 : index
    %c0_37 = arith.constant 0 : index
    %c0_38 = arith.constant 0 : index
    %36 = vector.load %arg6[%c0_36, %c0_37, %c0_38] : memref<4x256x32xf32, #tpu.memory_space<vmem>>, vector<1x256x32xf32>
    %37 = vector.shape_cast %36 : vector<1x256x32xf32> to vector<256x32xf32>
    %cst_39 = arith.constant dense<0.000000e+00> : vector<8x32xf32>
    %38 = tpu.matmul %35, %37, %cst_39 {dimension_numbers = #tpu.dot_dimension_numbers<[1], [0], [0], [1], [0, 0, 1, 1], [], []>} : vector<8x256xf32>, vector<256x32xf32>, vector<8x32xf32> -> vector<8x32xf32>
    %c1_40 = arith.constant 1 : index
    %c0_41 = arith.constant 0 : index
    %c0_42 = arith.constant 0 : index
    %39 = vector.load %arg5[%c1_40, %c0_41, %c0_42] : memref<4x8x16xf32, #tpu.memory_space<vmem>>, vector<1x8x16xf32>
    %40 = vector.shape_cast %39 : vector<1x8x16xf32> to vector<8x16xf32>
    %cst_43 = arith.constant dense<0.000000e+00> : vector<8x256xf32>
    %41 = tpu.matmul %40, %32, %cst_43 {dimension_numbers = #tpu.dot_dimension_numbers<[1], [0], [0], [1], [0, 0, 1, 1], [], []>} : vector<8x16xf32>, vector<16x256xf32>, vector<8x256xf32> -> vector<8x256xf32>
    %c1_44 = arith.constant 1 : index
    %c0_45 = arith.constant 0 : index
    %c0_46 = arith.constant 0 : index
    %42 = vector.load %arg6[%c1_44, %c0_45, %c0_46] : memref<4x256x32xf32, #tpu.memory_space<vmem>>, vector<1x256x32xf32>
    %43 = vector.shape_cast %42 : vector<1x256x32xf32> to vector<256x32xf32>
    %cst_47 = arith.constant dense<0.000000e+00> : vector<8x32xf32>
    %44 = tpu.matmul %41, %43, %cst_47 {dimension_numbers = #tpu.dot_dimension_numbers<[1], [0], [0], [1], [0, 0, 1, 1], [], []>} : vector<8x256xf32>, vector<256x32xf32>, vector<8x32xf32> -> vector<8x32xf32>
    %45 = arith.addf %38, %44 : vector<8x32xf32>
    %c2_48 = arith.constant 2 : index
    %c0_49 = arith.constant 0 : index
    %c0_50 = arith.constant 0 : index
    %46 = vector.load %arg5[%c2_48, %c0_49, %c0_50] : memref<4x8x16xf32, #tpu.memory_space<vmem>>, vector<1x8x16xf32>
    %47 = vector.shape_cast %46 : vector<1x8x16xf32> to vector<8x16xf32>
    %cst_51 = arith.constant dense<0.000000e+00> : vector<8x256xf32>
    %48 = tpu.matmul %47, %32, %cst_51 {dimension_numbers = #tpu.dot_dimension_numbers<[1], [0], [0], [1], [0, 0, 1, 1], [], []>} : vector<8x16xf32>, vector<16x256xf32>, vector<8x256xf32> -> vector<8x256xf32>
    %c2_52 = arith.constant 2 : index
    %c0_53 = arith.constant 0 : index
    %c0_54 = arith.constant 0 : index
    %49 = vector.load %arg6[%c2_52, %c0_53, %c0_54] : memref<4x256x32xf32, #tpu.memory_space<vmem>>, vector<1x256x32xf32>
    %50 = vector.shape_cast %49 : vector<1x256x32xf32> to vector<256x32xf32>
    %cst_55 = arith.constant dense<0.000000e+00> : vector<8x32xf32>
    %51 = tpu.matmul %48, %50, %cst_55 {dimension_numbers = #tpu.dot_dimension_numbers<[1], [0], [0], [1], [0, 0, 1, 1], [], []>} : vector<8x256xf32>, vector<256x32xf32>, vector<8x32xf32> -> vector<8x32xf32>
    %52 = arith.addf %45, %51 : vector<8x32xf32>
    %c3_56 = arith.constant 3 : index
    %c0_57 = arith.constant 0 : index
    %c0_58 = arith.constant 0 : index
    %53 = vector.load %arg5[%c3_56, %c0_57, %c0_58] : memref<4x8x16xf32, #tpu.memory_space<vmem>>, vector<1x8x16xf32>
    %54 = vector.shape_cast %53 : vector<1x8x16xf32> to vector<8x16xf32>
    %cst_59 = arith.constant dense<0.000000e+00> : vector<8x256xf32>
    %55 = tpu.matmul %54, %32, %cst_59 {dimension_numbers = #tpu.dot_dimension_numbers<[1], [0], [0], [1], [0, 0, 1, 1], [], []>} : vector<8x16xf32>, vector<16x256xf32>, vector<8x256xf32> -> vector<8x256xf32>
    %c3_60 = arith.constant 3 : index
    %c0_61 = arith.constant 0 : index
    %c0_62 = arith.constant 0 : index
    %56 = vector.load %arg6[%c3_60, %c0_61, %c0_62] : memref<4x256x32xf32, #tpu.memory_space<vmem>>, vector<1x256x32xf32>
    %57 = vector.shape_cast %56 : vector<1x256x32xf32> to vector<256x32xf32>
    %cst_63 = arith.constant dense<0.000000e+00> : vector<8x32xf32>
    %58 = tpu.matmul %55, %57, %cst_63 {dimension_numbers = #tpu.dot_dimension_numbers<[1], [0], [0], [1], [0, 0, 1, 1], [], []>} : vector<8x256xf32>, vector<256x32xf32>, vector<8x32xf32> -> vector<8x32xf32>
    %59 = arith.addf %52, %58 : vector<8x32xf32>
    %c0_64 = arith.constant 0 : index
    %c0_65 = arith.constant 0 : index
    %60 = vector.load %arg7[%c0_64, %c0_65] : memref<1x32xf32, #tpu.memory_space<vmem>>, vector<1x32xf32>
    %61 = vector.broadcast %60 : vector<1x32xf32> to vector<8x32xf32>
    %62 = arith.addf %59, %61 : vector<8x32xf32>
    %cst_66 = arith.constant 0.000000e+00 : f32
    %63 = vector.broadcast %cst_66 : f32 to vector<8x32xf32>
    %64 = arith.maximumf %62, %63 : vector<8x32xf32>
    %c0_67 = arith.constant 0 : index
    %c0_68 = arith.constant 0 : index
    %c0_69 = arith.constant 0 : index
    %65 = vector.load %arg8[%c0_67, %c0_68, %c0_69] : memref<2x4x8xf32, #tpu.memory_space<vmem>>, vector<1x4x8xf32>
    %66 = vector.shape_cast %65 : vector<1x4x8xf32> to vector<4x8xf32>
    %cst_70 = arith.constant dense<0.000000e+00> : vector<4x32xf32>
    %67 = tpu.matmul %66, %64, %cst_70 {dimension_numbers = #tpu.dot_dimension_numbers<[1], [0], [0], [1], [0, 0, 1, 1], [], []>} : vector<4x8xf32>, vector<8x32xf32>, vector<4x32xf32> -> vector<4x32xf32>
    %c0_71 = arith.constant 0 : index
    %c0_72 = arith.constant 0 : index
    %c0_73 = arith.constant 0 : index
    %68 = vector.load %arg9[%c0_71, %c0_72, %c0_73] : memref<2x32x16xf32, #tpu.memory_space<vmem>>, vector<1x32x16xf32>
    %69 = vector.shape_cast %68 : vector<1x32x16xf32> to vector<32x16xf32>
    %cst_74 = arith.constant dense<0.000000e+00> : vector<4x16xf32>
    %70 = tpu.matmul %67, %69, %cst_74 {dimension_numbers = #tpu.dot_dimension_numbers<[1], [0], [0], [1], [0, 0, 1, 1], [], []>} : vector<4x32xf32>, vector<32x16xf32>, vector<4x16xf32> -> vector<4x16xf32>
    %c1_75 = arith.constant 1 : index
    %c0_76 = arith.constant 0 : index
    %c0_77 = arith.constant 0 : index
    %71 = vector.load %arg9[%c1_75, %c0_76, %c0_77] : memref<2x32x16xf32, #tpu.memory_space<vmem>>, vector<1x32x16xf32>
    %72 = vector.shape_cast %71 : vector<1x32x16xf32> to vector<32x16xf32>
    %cst_78 = arith.constant dense<0.000000e+00> : vector<4x16xf32>
    %73 = tpu.matmul %67, %72, %cst_78 {dimension_numbers = #tpu.dot_dimension_numbers<[1], [0], [0], [1], [0, 0, 1, 1], [], []>} : vector<4x32xf32>, vector<32x16xf32>, vector<4x16xf32> -> vector<4x16xf32>
    %74 = arith.maximumf %70, %73 : vector<4x16xf32>
    %c1_79 = arith.constant 1 : index
    %c0_80 = arith.constant 0 : index
    %c0_81 = arith.constant 0 : index
    %75 = vector.load %arg8[%c1_79, %c0_80, %c0_81] : memref<2x4x8xf32, #tpu.memory_space<vmem>>, vector<1x4x8xf32>
    %76 = vector.shape_cast %75 : vector<1x4x8xf32> to vector<4x8xf32>
    %cst_82 = arith.constant dense<0.000000e+00> : vector<4x32xf32>
    %77 = tpu.matmul %76, %64, %cst_82 {dimension_numbers = #tpu.dot_dimension_numbers<[1], [0], [0], [1], [0, 0, 1, 1], [], []>} : vector<4x8xf32>, vector<8x32xf32>, vector<4x32xf32> -> vector<4x32xf32>
    %c0_83 = arith.constant 0 : index
    %c0_84 = arith.constant 0 : index
    %c0_85 = arith.constant 0 : index
    %78 = vector.load %arg9[%c0_83, %c0_84, %c0_85] : memref<2x32x16xf32, #tpu.memory_space<vmem>>, vector<1x32x16xf32>
    %79 = vector.shape_cast %78 : vector<1x32x16xf32> to vector<32x16xf32>
    %cst_86 = arith.constant dense<0.000000e+00> : vector<4x16xf32>
    %80 = tpu.matmul %77, %79, %cst_86 {dimension_numbers = #tpu.dot_dimension_numbers<[1], [0], [0], [1], [0, 0, 1, 1], [], []>} : vector<4x32xf32>, vector<32x16xf32>, vector<4x16xf32> -> vector<4x16xf32>
    %81 = arith.maximumf %74, %80 : vector<4x16xf32>
    %c1_87 = arith.constant 1 : index
    %c0_88 = arith.constant 0 : index
    %c0_89 = arith.constant 0 : index
    %82 = vector.load %arg9[%c1_87, %c0_88, %c0_89] : memref<2x32x16xf32, #tpu.memory_space<vmem>>, vector<1x32x16xf32>
    %83 = vector.shape_cast %82 : vector<1x32x16xf32> to vector<32x16xf32>
    %cst_90 = arith.constant dense<0.000000e+00> : vector<4x16xf32>
    %84 = tpu.matmul %77, %83, %cst_90 {dimension_numbers = #tpu.dot_dimension_numbers<[1], [0], [0], [1], [0, 0, 1, 1], [], []>} : vector<4x32xf32>, vector<32x16xf32>, vector<4x16xf32> -> vector<4x16xf32>
    %85 = arith.maximumf %81, %84 : vector<4x16xf32>
    %c0_91 = arith.constant 0 : index
    %c0_92 = arith.constant 0 : index
    %c0_93 = arith.constant 0 : index
    %86 = vector.load %arg10[%c0_91, %c0_92, %c0_93] : memref<4x16x4xf32, #tpu.memory_space<vmem>>, vector<1x16x4xf32>
    %87 = vector.shape_cast %86 : vector<1x16x4xf32> to vector<16x4xf32>
    %cst_94 = arith.constant dense<0.000000e+00> : vector<16x16xf32>
    %88 = tpu.matmul %87, %85, %cst_94 {dimension_numbers = #tpu.dot_dimension_numbers<[1], [0], [0], [1], [0, 0, 1, 1], [], []>} : vector<16x4xf32>, vector<4x16xf32>, vector<16x16xf32> -> vector<16x16xf32>
    %c0_95 = arith.constant 0 : index
    %c0_96 = arith.constant 0 : index
    %c0_97 = arith.constant 0 : index
    %89 = vector.load %arg11[%c0_95, %c0_96, %c0_97] : memref<4x16x256xf32, #tpu.memory_space<vmem>>, vector<1x16x256xf32>
    %90 = vector.shape_cast %89 : vector<1x16x256xf32> to vector<16x256xf32>
    %cst_98 = arith.constant dense<0.000000e+00> : vector<16x256xf32>
    %91 = tpu.matmul %88, %90, %cst_98 {dimension_numbers = #tpu.dot_dimension_numbers<[1], [0], [0], [1], [0, 0, 1, 1], [], []>} : vector<16x16xf32>, vector<16x256xf32>, vector<16x256xf32> -> vector<16x256xf32>
    %c1_99 = arith.constant 1 : index
    %c0_100 = arith.constant 0 : index
    %c0_101 = arith.constant 0 : index
    %92 = vector.load %arg10[%c1_99, %c0_100, %c0_101] : memref<4x16x4xf32, #tpu.memory_space<vmem>>, vector<1x16x4xf32>
    %93 = vector.shape_cast %92 : vector<1x16x4xf32> to vector<16x4xf32>
    %cst_102 = arith.constant dense<0.000000e+00> : vector<16x16xf32>
    %94 = tpu.matmul %93, %85, %cst_102 {dimension_numbers = #tpu.dot_dimension_numbers<[1], [0], [0], [1], [0, 0, 1, 1], [], []>} : vector<16x4xf32>, vector<4x16xf32>, vector<16x16xf32> -> vector<16x16xf32>
    %c1_103 = arith.constant 1 : index
    %c0_104 = arith.constant 0 : index
    %c0_105 = arith.constant 0 : index
    %95 = vector.load %arg11[%c1_103, %c0_104, %c0_105] : memref<4x16x256xf32, #tpu.memory_space<vmem>>, vector<1x16x256xf32>
    %96 = vector.shape_cast %95 : vector<1x16x256xf32> to vector<16x256xf32>
    %cst_106 = arith.constant dense<0.000000e+00> : vector<16x256xf32>
    %97 = tpu.matmul %94, %96, %cst_106 {dimension_numbers = #tpu.dot_dimension_numbers<[1], [0], [0], [1], [0, 0, 1, 1], [], []>} : vector<16x16xf32>, vector<16x256xf32>, vector<16x256xf32> -> vector<16x256xf32>
    %98 = arith.addf %91, %97 : vector<16x256xf32>
    %c2_107 = arith.constant 2 : index
    %c0_108 = arith.constant 0 : index
    %c0_109 = arith.constant 0 : index
    %99 = vector.load %arg10[%c2_107, %c0_108, %c0_109] : memref<4x16x4xf32, #tpu.memory_space<vmem>>, vector<1x16x4xf32>
    %100 = vector.shape_cast %99 : vector<1x16x4xf32> to vector<16x4xf32>
    %cst_110 = arith.constant dense<0.000000e+00> : vector<16x16xf32>
    %101 = tpu.matmul %100, %85, %cst_110 {dimension_numbers = #tpu.dot_dimension_numbers<[1], [0], [0], [1], [0, 0, 1, 1], [], []>} : vector<16x4xf32>, vector<4x16xf32>, vector<16x16xf32> -> vector<16x16xf32>
    %c2_111 = arith.constant 2 : index
    %c0_112 = arith.constant 0 : index
    %c0_113 = arith.constant 0 : index
    %102 = vector.load %arg11[%c2_111, %c0_112, %c0_113] : memref<4x16x256xf32, #tpu.memory_space<vmem>>, vector<1x16x256xf32>
    %103 = vector.shape_cast %102 : vector<1x16x256xf32> to vector<16x256xf32>
    %cst_114 = arith.constant dense<0.000000e+00> : vector<16x256xf32>
    %104 = tpu.matmul %101, %103, %cst_114 {dimension_numbers = #tpu.dot_dimension_numbers<[1], [0], [0], [1], [0, 0, 1, 1], [], []>} : vector<16x16xf32>, vector<16x256xf32>, vector<16x256xf32> -> vector<16x256xf32>
    %105 = arith.addf %98, %104 : vector<16x256xf32>
    %c3_115 = arith.constant 3 : index
    %c0_116 = arith.constant 0 : index
    %c0_117 = arith.constant 0 : index
    %106 = vector.load %arg10[%c3_115, %c0_116, %c0_117] : memref<4x16x4xf32, #tpu.memory_space<vmem>>, vector<1x16x4xf32>
    %107 = vector.shape_cast %106 : vector<1x16x4xf32> to vector<16x4xf32>
    %cst_118 = arith.constant dense<0.000000e+00> : vector<16x16xf32>
    %108 = tpu.matmul %107, %85, %cst_118 {dimension_numbers = #tpu.dot_dimension_numbers<[1], [0], [0], [1], [0, 0, 1, 1], [], []>} : vector<16x4xf32>, vector<4x16xf32>, vector<16x16xf32> -> vector<16x16xf32>
    %c3_119 = arith.constant 3 : index
    %c0_120 = arith.constant 0 : index
    %c0_121 = arith.constant 0 : index
    %109 = vector.load %arg11[%c3_119, %c0_120, %c0_121] : memref<4x16x256xf32, #tpu.memory_space<vmem>>, vector<1x16x256xf32>
    %110 = vector.shape_cast %109 : vector<1x16x256xf32> to vector<16x256xf32>
    %cst_122 = arith.constant dense<0.000000e+00> : vector<16x256xf32>
    %111 = tpu.matmul %108, %110, %cst_122 {dimension_numbers = #tpu.dot_dimension_numbers<[1], [0], [0], [1], [0, 0, 1, 1], [], []>} : vector<16x16xf32>, vector<16x256xf32>, vector<16x256xf32> -> vector<16x256xf32>
    %112 = arith.addf %105, %111 : vector<16x256xf32>
    %c0_123 = arith.constant 0 : index
    %c0_124 = arith.constant 0 : index
    %113 = vector.load %arg12[%c0_123, %c0_124] : memref<1x256xf32, #tpu.memory_space<vmem>>, vector<1x256xf32>
    %114 = vector.broadcast %113 : vector<1x256xf32> to vector<16x256xf32>
    %115 = arith.addf %112, %114 : vector<16x256xf32>
    %cst_125 = arith.constant 0.000000e+00 : f32
    %116 = vector.broadcast %cst_125 : f32 to vector<16x256xf32>
    %117 = arith.maximumf %115, %116 : vector<16x256xf32>
    %c0_126 = arith.constant 0 : index
    %c0_127 = arith.constant 0 : index
    %c0_128 = arith.constant 0 : index
    %118 = vector.load %arg13[%c0_126, %c0_127, %c0_128] : memref<4x32x16xf32, #tpu.memory_space<vmem>>, vector<1x32x16xf32>
    %119 = vector.shape_cast %118 : vector<1x32x16xf32> to vector<32x16xf32>
    %cst_129 = arith.constant dense<0.000000e+00> : vector<32x256xf32>
    %120 = tpu.matmul %119, %117, %cst_129 {dimension_numbers = #tpu.dot_dimension_numbers<[1], [0], [0], [1], [0, 0, 1, 1], [], []>} : vector<32x16xf32>, vector<16x256xf32>, vector<32x256xf32> -> vector<32x256xf32>
    %c0_130 = arith.constant 0 : index
    %c0_131 = arith.constant 0 : index
    %c0_132 = arith.constant 0 : index
    %121 = vector.load %arg14[%c0_130, %c0_131, %c0_132] : memref<4x256x96xf32, #tpu.memory_space<vmem>>, vector<1x256x96xf32>
    %122 = vector.shape_cast %121 : vector<1x256x96xf32> to vector<256x96xf32>
    %cst_133 = arith.constant dense<0.000000e+00> : vector<32x96xf32>
    %123 = tpu.matmul %120, %122, %cst_133 {dimension_numbers = #tpu.dot_dimension_numbers<[1], [0], [0], [1], [0, 0, 1, 1], [], []>} : vector<32x256xf32>, vector<256x96xf32>, vector<32x96xf32> -> vector<32x96xf32>
    %c1_134 = arith.constant 1 : index
    %c0_135 = arith.constant 0 : index
    %c0_136 = arith.constant 0 : index
    %124 = vector.load %arg13[%c1_134, %c0_135, %c0_136] : memref<4x32x16xf32, #tpu.memory_space<vmem>>, vector<1x32x16xf32>
    %125 = vector.shape_cast %124 : vector<1x32x16xf32> to vector<32x16xf32>
    %cst_137 = arith.constant dense<0.000000e+00> : vector<32x256xf32>
    %126 = tpu.matmul %125, %117, %cst_137 {dimension_numbers = #tpu.dot_dimension_numbers<[1], [0], [0], [1], [0, 0, 1, 1], [], []>} : vector<32x16xf32>, vector<16x256xf32>, vector<32x256xf32> -> vector<32x256xf32>
    %c1_138 = arith.constant 1 : index
    %c0_139 = arith.constant 0 : index
    %c0_140 = arith.constant 0 : index
    %127 = vector.load %arg14[%c1_138, %c0_139, %c0_140] : memref<4x256x96xf32, #tpu.memory_space<vmem>>, vector<1x256x96xf32>
    %128 = vector.shape_cast %127 : vector<1x256x96xf32> to vector<256x96xf32>
    %cst_141 = arith.constant dense<0.000000e+00> : vector<32x96xf32>
    %129 = tpu.matmul %126, %128, %cst_141 {dimension_numbers = #tpu.dot_dimension_numbers<[1], [0], [0], [1], [0, 0, 1, 1], [], []>} : vector<32x256xf32>, vector<256x96xf32>, vector<32x96xf32> -> vector<32x96xf32>
    %130 = arith.addf %123, %129 : vector<32x96xf32>
    %c2_142 = arith.constant 2 : index
    %c0_143 = arith.constant 0 : index
    %c0_144 = arith.constant 0 : index
    %131 = vector.load %arg13[%c2_142, %c0_143, %c0_144] : memref<4x32x16xf32, #tpu.memory_space<vmem>>, vector<1x32x16xf32>
    %132 = vector.shape_cast %131 : vector<1x32x16xf32> to vector<32x16xf32>
    %cst_145 = arith.constant dense<0.000000e+00> : vector<32x256xf32>
    %133 = tpu.matmul %132, %117, %cst_145 {dimension_numbers = #tpu.dot_dimension_numbers<[1], [0], [0], [1], [0, 0, 1, 1], [], []>} : vector<32x16xf32>, vector<16x256xf32>, vector<32x256xf32> -> vector<32x256xf32>
    %c2_146 = arith.constant 2 : index
    %c0_147 = arith.constant 0 : index
    %c0_148 = arith.constant 0 : index
    %134 = vector.load %arg14[%c2_146, %c0_147, %c0_148] : memref<4x256x96xf32, #tpu.memory_space<vmem>>, vector<1x256x96xf32>
    %135 = vector.shape_cast %134 : vector<1x256x96xf32> to vector<256x96xf32>
    %cst_149 = arith.constant dense<0.000000e+00> : vector<32x96xf32>
    %136 = tpu.matmul %133, %135, %cst_149 {dimension_numbers = #tpu.dot_dimension_numbers<[1], [0], [0], [1], [0, 0, 1, 1], [], []>} : vector<32x256xf32>, vector<256x96xf32>, vector<32x96xf32> -> vector<32x96xf32>
    %137 = arith.addf %130, %136 : vector<32x96xf32>
    %c3_150 = arith.constant 3 : index
    %c0_151 = arith.constant 0 : index
    %c0_152 = arith.constant 0 : index
    %138 = vector.load %arg13[%c3_150, %c0_151, %c0_152] : memref<4x32x16xf32, #tpu.memory_space<vmem>>, vector<1x32x16xf32>
    %139 = vector.shape_cast %138 : vector<1x32x16xf32> to vector<32x16xf32>
    %cst_153 = arith.constant dense<0.000000e+00> : vector<32x256xf32>
    %140 = tpu.matmul %139, %117, %cst_153 {dimension_numbers = #tpu.dot_dimension_numbers<[1], [0], [0], [1], [0, 0, 1, 1], [], []>} : vector<32x16xf32>, vector<16x256xf32>, vector<32x256xf32> -> vector<32x256xf32>
    %c3_154 = arith.constant 3 : index
    %c0_155 = arith.constant 0 : index
    %c0_156 = arith.constant 0 : index
    %141 = vector.load %arg14[%c3_154, %c0_155, %c0_156] : memref<4x256x96xf32, #tpu.memory_space<vmem>>, vector<1x256x96xf32>
    %142 = vector.shape_cast %141 : vector<1x256x96xf32> to vector<256x96xf32>
    %cst_157 = arith.constant dense<0.000000e+00> : vector<32x96xf32>
    %143 = tpu.matmul %140, %142, %cst_157 {dimension_numbers = #tpu.dot_dimension_numbers<[1], [0], [0], [1], [0, 0, 1, 1], [], []>} : vector<32x256xf32>, vector<256x96xf32>, vector<32x96xf32> -> vector<32x96xf32>
    %144 = arith.addf %137, %143 : vector<32x96xf32>
    %c0_158 = arith.constant 0 : index
    %c0_159 = arith.constant 0 : index
    %145 = vector.load %arg15[%c0_158, %c0_159] : memref<1x96xf32, #tpu.memory_space<vmem>>, vector<1x96xf32>
    %146 = vector.broadcast %145 : vector<1x96xf32> to vector<32x96xf32>
    %147 = arith.addf %144, %146 : vector<32x96xf32>
    %148 = math.tanh %147 : vector<32x96xf32>
    %c0_160 = arith.constant 0 : index
    %c0_161 = arith.constant 0 : index
    %149 = vector.load %arg16[%c0_160, %c0_161] : memref<32x96xf32, #tpu.memory_space<vmem>>, vector<32x96xf32>
    tpu.vector_store %arg16[%c0_160, %c0_161], %148 {strides = array<i32>} : memref<32x96xf32, #tpu.memory_space<vmem>>, vector<32x96xf32>,
    return
  }
  func.func @transform_0(%arg0: i32) -> (i32, i32) {
    %c0_i32 = arith.constant 0 : i32
    %c0_i32_0 = arith.constant 0 : i32
    return %arg0, %c0_i32 : i32, i32
  }
  func.func @transform_1(%arg0: i32) -> (i32, i32, i32) {
    %c0_i32 = arith.constant 0 : i32
    %c0_i32_0 = arith.constant 0 : i32
    %c0_i32_1 = arith.constant 0 : i32
    %c0_i32_2 = arith.constant 0 : i32
    return %c0_i32, %c0_i32_0, %c0_i32_1 : i32, i32, i32
  }
  func.func @transform_2(%arg0: i32) -> (i32, i32, i32) {
    %c0_i32 = arith.constant 0 : i32
    %c0_i32_0 = arith.constant 0 : i32
    %c0_i32_1 = arith.constant 0 : i32
    %c0_i32_2 = arith.constant 0 : i32
    return %c0_i32, %c0_i32_0, %c0_i32_1 : i32, i32, i32
  }
  func.func @transform_3(%arg0: i32) -> (i32, i32) {
    %c0_i32 = arith.constant 0 : i32
    %c0_i32_0 = arith.constant 0 : i32
    %c0_i32_1 = arith.constant 0 : i32
    return %c0_i32, %c0_i32_0 : i32, i32
  }
  func.func @transform_4(%arg0: i32) -> (i32, i32, i32) {
    %c0_i32 = arith.constant 0 : i32
    %c0_i32_0 = arith.constant 0 : i32
    %c0_i32_1 = arith.constant 0 : i32
    %c0_i32_2 = arith.constant 0 : i32
    return %c0_i32, %c0_i32_0, %c0_i32_1 : i32, i32, i32
  }
  func.func @transform_5(%arg0: i32) -> (i32, i32, i32) {
    %c0_i32 = arith.constant 0 : i32
    %c0_i32_0 = arith.constant 0 : i32
    %c0_i32_1 = arith.constant 0 : i32
    %c0_i32_2 = arith.constant 0 : i32
    return %c0_i32, %c0_i32_0, %c0_i32_1 : i32, i32, i32
  }
  func.func @transform_6(%arg0: i32) -> (i32, i32) {
    %c0_i32 = arith.constant 0 : i32
    %c0_i32_0 = arith.constant 0 : i32
    %c0_i32_1 = arith.constant 0 : i32
    return %c0_i32, %c0_i32_0 : i32, i32
  }
  func.func @transform_7(%arg0: i32) -> (i32, i32, i32) {
    %c0_i32 = arith.constant 0 : i32
    %c0_i32_0 = arith.constant 0 : i32
    %c0_i32_1 = arith.constant 0 : i32
    %c0_i32_2 = arith.constant 0 : i32
    return %c0_i32, %c0_i32_0, %c0_i32_1 : i32, i32, i32
  }
  func.func @transform_8(%arg0: i32) -> (i32, i32, i32) {
    %c0_i32 = arith.constant 0 : i32
    %c0_i32_0 = arith.constant 0 : i32
    %c0_i32_1 = arith.constant 0 : i32
    %c0_i32_2 = arith.constant 0 : i32
    return %c0_i32, %c0_i32_0, %c0_i32_1 : i32, i32, i32
  }
  func.func @transform_9(%arg0: i32) -> (i32, i32, i32) {
    %c0_i32 = arith.constant 0 : i32
    %c0_i32_0 = arith.constant 0 : i32
    %c0_i32_1 = arith.constant 0 : i32
    %c0_i32_2 = arith.constant 0 : i32
    return %c0_i32, %c0_i32_0, %c0_i32_1 : i32, i32, i32
  }
  func.func @transform_10(%arg0: i32) -> (i32, i32, i32) {
    %c0_i32 = arith.constant 0 : i32
    %c0_i32_0 = arith.constant 0 : i32
    %c0_i32_1 = arith.constant 0 : i32
    %c0_i32_2 = arith.constant 0 : i32
    return %c0_i32, %c0_i32_0, %c0_i32_1 : i32, i32, i32
  }
  func.func @transform_11(%arg0: i32) -> (i32, i32) {
    %c0_i32 = arith.constant 0 : i32
    %c0_i32_0 = arith.constant 0 : i32
    %c0_i32_1 = arith.constant 0 : i32
    return %c0_i32, %c0_i32_0 : i32, i32
  }
  func.func @transform_12(%arg0: i32) -> (i32, i32, i32) {
    %c0_i32 = arith.constant 0 : i32
    %c0_i32_0 = arith.constant 0 : i32
    %c0_i32_1 = arith.constant 0 : i32
    %c0_i32_2 = arith.constant 0 : i32
    return %c0_i32, %c0_i32_0, %c0_i32_1 : i32, i32, i32
  }
  func.func @transform_13(%arg0: i32) -> (i32, i32, i32) {
    %c0_i32 = arith.constant 0 : i32
    %c0_i32_0 = arith.constant 0 : i32
    %c0_i32_1 = arith.constant 0 : i32
    %c0_i32_2 = arith.constant 0 : i32
    return %c0_i32, %c0_i32_0, %c0_i32_1 : i32, i32, i32
  }
  func.func @transform_14(%arg0: i32) -> (i32, i32) {
    %c0_i32 = arith.constant 0 : i32
    %c0_i32_0 = arith.constant 0 : i32
    %c0_i32_1 = arith.constant 0 : i32
    return %c0_i32, %c0_i32_0 : i32, i32
  }
  func.func @transform_15(%arg0: i32) -> (i32, i32) {
    %c0_i32 = arith.constant 0 : i32
    %c0_i32_0 = arith.constant 0 : i32
    return %arg0, %c0_i32 : i32, i32
  }
}

</mosaic_0001>

<llo_original>
// kernel: tile.38
$region0: #{tile.38}
  #allocation0 [shape = 's32[1]{0}', space=sflag, size = 0x4, scoped, tag = 'scoped memory for tile.38']
  %s0 = inlined_call_operand.vmem [shape: f32[3], index: 0, kind: input, shape index: {}]
  %s1 = inlined_call_operand.vmem [shape: f32[32,3], index: 1, kind: output, shape index: {}]
  // Predicated region
  $region2: #{tile.38} parent=0 // pred_check
    _
  $region3: #{tile.38} parent=0 // pred_check_branch
    %3 = sbr.rel (0) target = $region5
  $region4: #{tile.38} parent=0 // pred_region
    _
  $region5: #{tile.38} parent=0 // pred_fallthru
    _
  %v4 = vld [vmem:[%s0] ss:$0 sm:$0xff]
  %5 = vst [vmem:[%s1] sm:$0xff] %v4
  %s6 = scalar_lea.vmem %s1, 8
  %7 = vst [vmem:[%s6] sm:$0xff] %v4
  %s8 = scalar_lea.vmem %s1, 16
  %9 = vst [vmem:[%s8] sm:$0xff] %v4
  %s10 = scalar_lea.vmem %s1, 24
  %11 = vst [vmem:[%s10] sm:$0xff] %v4

// kernel: tile.39
$region0: #{tile.39}
  %s0 = inlined_call_operand.vmem [shape: f32[32,3], index: 0, kind: input, shape index: {}]
  %s1 = inlined_call_operand.vmem [shape: f32[1,96], index: 1, kind: output, shape index: {}]
  $region1: #{tile.39} parent=0
    #allocation0 [shape = 'u8[4096]{0}', space=vmem, size = 0x1000, scoped, tag = 'scoped mem for output reshape']
    %v2 = vld [vmem:[%s0] sm:$0x1]
    %vm3 = vcmask 23552
    %4 = vst.msk [vmem:[#allocation0] sm:$0x1] %vm3, %v2
    %s5 = scalar_lea.vmem %s0, 31
    %v6 = vld [vmem:[%s5] sm:$0x1]
    %7 = vrot.lane.b32.xlu0 %v6, 93
    %v8 = vpop.permute.xlu0 %7
    %vm9 = vcmask 786152
    %10 = vst.msk [vmem:[#allocation0] sm:$0x1] %vm9, %v8
    %s11 = scalar_lea.vmem %s0, 30
    %v12 = vld [vmem:[%s11] sm:$0x1]
    %13 = vrot.lane.b32.xlu0 %v12, 90
    %v14 = vpop.permute.xlu0 %13
    %vm15 = vcmask 761552
    %16 = vst.msk [vmem:[#allocation0] sm:$0x1] %vm15, %v14
    %s17 = scalar_lea.vmem %s0, 29
    %v18 = vld [vmem:[%s17] sm:$0x1]
    %19 = vrot.lane.b32.xlu0 %v18, 87
    %v20 = vpop.permute.xlu0 %19
    %vm21 = vcmask 736952
    %22 = vst.msk [vmem:[#allocation0] sm:$0x1] %vm21, %v20
    %s23 = scalar_lea.vmem %s0, 28
    %v24 = vld [vmem:[%s23] sm:$0x1]
    %25 = vrot.lane.b32.xlu0 %v24, 84
    %v26 = vpop.permute.xlu0 %25
    %vm27 = vcmask 712352
    %28 = vst.msk [vmem:[#allocation0] sm:$0x1] %vm27, %v26
    %s29 = scalar_lea.vmem %s0, 27
    %v30 = vld [vmem:[%s29] sm:$0x1]
    %31 = vrot.lane.b32.xlu0 %v30, 81
    %v32 = vpop.permute.xlu0 %31
    %vm33 = vcmask 687752
    %34 = vst.msk [vmem:[#allocation0] sm:$0x1] %vm33, %v32
    %s35 = scalar_lea.vmem %s0, 26
    %v36 = vld [vmem:[%s35] sm:$0x1]
    %37 = vrot.lane.b32.xlu0 %v36, 78
    %v38 = vpop.permute.xlu0 %37
    %vm39 = vcmask 663152
    %40 = vst.msk [vmem:[#allocation0] sm:$0x1] %vm39, %v38
    %s41 = scalar_lea.vmem %s0, 25
    %v42 = vld [vmem:[%s41] sm:$0x1]
    %43 = vrot.lane.b32.xlu0 %v42, 75
    %v44 = vpop.permute.xlu0 %43
    %vm45 = vcmask 638552
    %46 = vst.msk [vmem:[#allocation0] sm:$0x1] %vm45, %v44
    %s47 = scalar_lea.vmem %s0, 24
    %v48 = vld [vmem:[%s47] sm:$0x1]
    %49 = vrot.lane.b32.xlu0 %v48, 72
    %v50 = vpop.permute.xlu0 %49
    %vm51 = vcmask 613952
    %52 = vst.msk [vmem:[#allocation0] sm:$0x1] %vm51, %v50
    %s53 = scalar_lea.vmem %s0, 23
    %v54 = vld [vmem:[%s53] sm:$0x1]
    %55 = vrot.lane.b32.xlu0 %v54, 69
    %v56 = vpop.permute.xlu0 %55
    %vm57 = vcmask 589352
    %58 = vst.msk [vmem:[#allocation0] sm:$0x1] %vm57, %v56
    %s59 = scalar_lea.vmem %s0, 22
    %v60 = vld [vmem:[%s59] sm:$0x1]
    %61 = vrot.lane.b32.xlu0 %v60, 66
    %v62 = vpop.permute.xlu0 %61
    %vm63 = vcmask 564752
    %64 = vst.msk [vmem:[#allocation0] sm:$0x1] %vm63, %v62
    %s65 = scalar_lea.vmem %s0, 21
    %v66 = vld [vmem:[%s65] sm:$0x1]
    %67 = vrot.lane.b32.xlu0 %v66, 63
    %v68 = vpop.permute.xlu0 %67
    %vm69 = vcmask 540152
    %70 = vst.msk [vmem:[#allocation0] sm:$0x1] %vm69, %v68
    %s71 = scalar_lea.vmem %s0, 20
    %v72 = vld [vmem:[%s71] sm:$0x1]
    %73 = vrot.lane.b32.xlu0 %v72, 60
    %v74 = vpop.permute.xlu0 %73
    %vm75 = vcmask 515552
    %76 = vst.msk [vmem:[#allocation0] sm:$0x1] %vm75, %v74
    %s77 = scalar_lea.vmem %s0, 19
    %v78 = vld [vmem:[%s77] sm:$0x1]
    %79 = vrot.lane.b32.xlu0 %v78, 57
    %v80 = vpop.permute.xlu0 %79
    %vm81 = vcmask 490952
    %82 = vst.msk [vmem:[#allocation0] sm:$0x1] %vm81, %v80
    %s83 = scalar_lea.vmem %s0, 18
    %v84 = vld [vmem:[%s83] sm:$0x1]
    %85 = vrot.lane.b32.xlu0 %v84, 54
    %v86 = vpop.permute.xlu0 %85
    %vm87 = vcmask 466352
    %88 = vst.msk [vmem:[#allocation0] sm:$0x1] %vm87, %v86
    %s89 = scalar_lea.vmem %s0, 17
    %v90 = vld [vmem:[%s89] sm:$0x1]
    %91 = vrot.lane.b32.xlu0 %v90, 51
    %v92 = vpop.permute.xlu0 %91
    %vm93 = vcmask 441752
    %94 = vst.msk [vmem:[#allocation0] sm:$0x1] %vm93, %v92
    %s95 = scalar_lea.vmem %s0, 16
    %v96 = vld [vmem:[%s95] sm:$0x1]
    %97 = vrot.lane.b32.xlu0 %v96, 48
    %v98 = vpop.permute.xlu0 %97
    %vm99 = vcmask 417152
    %100 = vst.msk [vmem:[#allocation0] sm:$0x1] %vm99, %v98
    %s101 = scalar_lea.vmem %s0, 15
    %v102 = vld [vmem:[%s101] sm:$0x1]
    %103 = vrot.lane.b32.xlu0 %v102, 45
    %v104 = vpop.permute.xlu0 %103
    %vm105 = vcmask 392552
    %106 = vst.msk [vmem:[#allocation0] sm:$0x1] %vm105, %v104
    %s107 = scalar_lea.vmem %s0, 14
    %v108 = vld [vmem:[%s107] sm:$0x1]
    %109 = vrot.lane.b32.xlu0 %v108, 42
    %v110 = vpop.permute.xlu0 %109
    %vm111 = vcmask 367952
    %112 = vst.msk [vmem:[#allocation0] sm:$0x1] %vm111, %v110
    %s113 = scalar_lea.vmem %s0, 13
    %v114 = vld [vmem:[%s113] sm:$0x1]
    %115 = vrot.lane.b32.xlu0 %v114, 39
    %v116 = vpop.permute.xlu0 %115
    %vm117 = vcmask 343352
    %118 = vst.msk [vmem:[#allocation0] sm:$0x1] %vm117, %v116
    %s119 = scalar_lea.vmem %s0, 12
    %v120 = vld [vmem:[%s119] sm:$0x1]
    %121 = vrot.lane.b32.xlu0 %v120, 36
    %v122 = vpop.permute.xlu0 %121
    %vm123 = vcmask 318752
    %124 = vst.msk [vmem:[#allocation0] sm:$0x1] %vm123, %v122
    %s125 = scalar_lea.vmem %s0, 11
    %v126 = vld [vmem:[%s125] sm:$0x1]
    %127 = vrot.lane.b32.xlu0 %v126, 33
    %v128 = vpop.permute.xlu0 %127
    %vm129 = vcmask 294152
    %130 = vst.msk [vmem:[#allocation0] sm:$0x1] %vm129, %v128
    %s131 = scalar_lea.vmem %s0, 10
    %v132 = vld [vmem:[%s131] sm:$0x1]
    %133 = vrot.lane.b32.xlu0 %v132, 30
    %v134 = vpop.permute.xlu0 %133
    %vm135 = vcmask 269552
    %136 = vst.msk [vmem:[#allocation0] sm:$0x1] %vm135, %v134
    %s137 = scalar_lea.vmem %s0, 9
    %v138 = vld [vmem:[%s137] sm:$0x1]
    %139 = vrot.lane.b32.xlu0 %v138, 27
    %v140 = vpop.permute.xlu0 %139
    %vm141 = vcmask 244952
    %142 = vst.msk [vmem:[#allocation0] sm:$0x1] %vm141, %v140
    %s143 = scalar_lea.vmem %s0, 8
    %v144 = vld [vmem:[%s143] sm:$0x1]
    %145 = vrot.lane.b32.xlu0 %v144, 24
    %v146 = vpop.permute.xlu0 %145
    %vm147 = vcmask 220352
    %148 = vst.msk [vmem:[#allocation0] sm:$0x1] %vm147, %v146
    %s149 = scalar_lea.vmem %s0, 7
    %v150 = vld [vmem:[%s149] sm:$0x1]
    %151 = vrot.lane.b32.xlu0 %v150, 21
    %v152 = vpop.permute.xlu0 %151
    %vm153 = vcmask 195752
    %154 = vst.msk [vmem:[#allocation0] sm:$0x1] %vm153, %v152
    %s155 = scalar_lea.vmem %s0, 6
    %v156 = vld [vmem:[%s155] sm:$0x1]
    %157 = vrot.lane.b32.xlu0 %v156, 18
    %v158 = vpop.permute.xlu0 %157
    %vm159 = vcmask 171152
    %160 = vst.msk [vmem:[#allocation0] sm:$0x1] %vm159, %v158
    %s161 = scalar_lea.vmem %s0, 5
    %v162 = vld [vmem:[%s161] sm:$0x1]
    %163 = vrot.lane.b32.xlu0 %v162, 15
    %v164 = vpop.permute.xlu0 %163
    %vm165 = vcmask 146552
    %166 = vst.msk [vmem:[#allocation0] sm:$0x1] %vm165, %v164
    %s167 = scalar_lea.vmem %s0, 4
    %v168 = vld [vmem:[%s167] sm:$0x1]
    %169 = vrot.lane.b32.xlu0 %v168, 12
    %v170 = vpop.permute.xlu0 %169
    %vm171 = vcmask 121952
    %172 = vst.msk [vmem:[#allocation0] sm:$0x1] %vm171, %v170
    %s173 = scalar_lea.vmem %s0, 3
    %v174 = vld [vmem:[%s173] sm:$0x1]
    %175 = vrot.lane.b32.xlu0 %v174, 9
    %v176 = vpop.permute.xlu0 %175
    %vm177 = vcmask 97352
    %178 = vst.msk [vmem:[#allocation0] sm:$0x1] %vm177, %v176
    %s179 = scalar_lea.vmem %s0, 2
    %v180 = vld [vmem:[%s179] sm:$0x1]
    %181 = vrot.lane.b32.xlu0 %v180, 6
    %v182 = vpop.permute.xlu0 %181
    %vm183 = vcmask 72752
    %184 = vst.msk [vmem:[#allocation0] sm:$0x1] %vm183, %v182
    %s185 = scalar_lea.vmem %s0, 1
    %v186 = vld [vmem:[%s185] sm:$0x1]
    %187 = vrot.lane.b32.xlu0 %v186, 3
    %v188 = vpop.permute.xlu0 %187
    %vm189 = vcmask 48152
    %190 = vst.msk [vmem:[#allocation0] sm:$0x1] %vm189, %v188
    %s192 = ssub.s32 2, 1
    %v193 = vld [vmem:[#allocation0] sm:%s192]
    %s195 = ssub.s32 2, 1
    %196 = vst [vmem:[%s1] sm:%s195] %v193

// kernel: tile.23
$region0: #{tile.23}
  #allocation0 [shape = 's32[1]{0}', space=sflag, size = 0x4, scoped, tag = 'scoped memory for tile.23']
  %s0 = inlined_call_operand.vmem [shape: f32[16], index: 0, kind: input, shape index: {}]
  %s1 = inlined_call_operand.vmem [shape: f32[16,16], index: 1, kind: output, shape index: {}]
  // Predicated region
  $region2: #{tile.23} parent=0 // pred_check
    _
  $region3: #{tile.23} parent=0 // pred_check_branch
    %3 = sbr.rel (0) target = $region5
  $region4: #{tile.23} parent=0 // pred_region
    _
  $region5: #{tile.23} parent=0 // pred_fallthru
    _
  %v4 = vld [vmem:[%s0] ss:$0 sm:$0xff]
  %5 = vst [vmem:[%s1] sm:$0xff] %v4
  %s6 = scalar_lea.vmem %s1, 8
  %7 = vst [vmem:[%s6] sm:$0xff] %v4

// kernel: tile.24
$region0: #{tile.24}
  %s0 = inlined_call_operand.vmem [shape: f32[16,16], index: 0, kind: input, shape index: {}]
  %s1 = inlined_call_operand.vmem [shape: f32[1,256], index: 1, kind: output, shape index: {}]
  $region1: #{tile.24} parent=0
    #allocation0 [shape = 'u8[8192]{0}', space=vmem, size = 0x2000, scoped, tag = 'scoped mem for output reshape']
    %s2 = smov 3
    %v3 = vld [vmem:[%s0] ss:$8 sm:%s2]
    %vm4 = vcmask 130048
    %5 = vst.msk [vmem:[#allocation0] ss:$8 sm:$0x3] %vm4, %v3
    %s6 = scalar_lea.vmem %s0, 7
    %s7 = smov 3
    %v8 = vld [vmem:[%s6] ss:$8 sm:%s7]
    %9 = vrot.lane.b32.xlu0 %v8, 112
    %v10 = vpop.permute.xlu0 %9
    %vm11 = vcmask 1048448
    %12 = vst.msk [vmem:[#allocation0] ss:$8 sm:$0x3] %vm11, %v10
    %s13 = scalar_lea.vmem %s0, 6
    %s14 = smov 3
    %v15 = vld [vmem:[%s13] ss:$8 sm:%s14]
    %16 = vrot.lane.b32.xlu0 %v15, 96
    %v17 = vpop.permute.xlu0 %16
    %vm18 = vcmask 917248
    %19 = vst.msk [vmem:[#allocation0] ss:$8 sm:$0x3] %vm18, %v17
    %s20 = scalar_lea.vmem %s0, 5
    %s21 = smov 3
    %v22 = vld [vmem:[%s20] ss:$8 sm:%s21]
    %23 = vrot.lane.b32.xlu0 %v22, 80
    %v24 = vpop.permute.xlu0 %23
    %vm25 = vcmask 786048
    %26 = vst.msk [vmem:[#allocation0] ss:$8 sm:$0x3] %vm25, %v24
    %s27 = scalar_lea.vmem %s0, 4
    %s28 = smov 3
    %v29 = vld [vmem:[%s27] ss:$8 sm:%s28]
    %30 = vrot.lane.b32.xlu0 %v29, 64
    %v31 = vpop.permute.xlu0 %30
    %vm32 = vcmask 654848
    %33 = vst.msk [vmem:[#allocation0] ss:$8 sm:$0x3] %vm32, %v31
    %s34 = scalar_lea.vmem %s0, 3
    %s35 = smov 3
    %v36 = vld [vmem:[%s34] ss:$8 sm:%s35]
    %37 = vrot.lane.b32.xlu0 %v36, 48
    %v38 = vpop.permute.xlu0 %37
    %vm39 = vcmask 523648
    %40 = vst.msk [vmem:[#allocation0] ss:$8 sm:$0x3] %vm39, %v38
    %s41 = scalar_lea.vmem %s0, 2
    %s42 = smov 3
    %v43 = vld [vmem:[%s41] ss:$8 sm:%s42]
    %44 = vrot.lane.b32.xlu0 %v43, 32
    %v45 = vpop.permute.xlu0 %44
    %vm46 = vcmask 392448
    %47 = vst.msk [vmem:[#allocation0] ss:$8 sm:$0x3] %vm46, %v45
    %s48 = scalar_lea.vmem %s0, 1
    %s49 = smov 3
    %v50 = vld [vmem:[%s48] ss:$8 sm:%s49]
    %51 = vrot.lane.b32.xlu0 %v50, 16
    %v52 = vpop.permute.xlu0 %51
    %vm53 = vcmask 261248
    %54 = vst.msk [vmem:[#allocation0] ss:$8 sm:$0x3] %vm53, %v52
    %s56 = ssub.s32 2, 1
    %v57 = vld [vmem:[#allocation0] sm:%s56]
    %s59 = ssub.s32 2, 1
    %60 = vst [vmem:[%s1] sm:%s59] %v57
    %s61 = scalar_lea.vmem [#allocation0], 8
    %v62 = vld [vmem:[%s61] sm:%s56]
    %s64 = ssub.s32 2, 1
    %s65 = scalar_lea.vmem %s1, 1
    %66 = vst [vmem:[%s65] sm:%s64] %v62

// kernel: tile.28
$region0: #{tile.28}
  #allocation0 [shape = 's32[1]{0}', space=sflag, size = 0x4, scoped, tag = 'scoped memory for tile.28']
  %s0 = inlined_call_operand.vmem [shape: f32[4], index: 0, kind: input, shape index: {}]
  %s1 = inlined_call_operand.vmem [shape: f32[8,4], index: 1, kind: output, shape index: {}]
  // Predicated region
  $region2: #{tile.28} parent=0 // pred_check
    _
  $region3: #{tile.28} parent=0 // pred_check_branch
    %3 = sbr.rel (0) target = $region5
  $region4: #{tile.28} parent=0 // pred_region
    _
  $region5: #{tile.28} parent=0 // pred_fallthru
    _
  %v4 = vld [vmem:[%s0] ss:$0 sm:$0xff]
  %5 = vst [vmem:[%s1] sm:$0xff] %v4

// kernel: tile.29
$region0: #{tile.29}
  %s0 = inlined_call_operand.vmem [shape: f32[8,4], index: 0, kind: input, shape index: {}]
  %s1 = inlined_call_operand.vmem [shape: f32[1,32], index: 1, kind: output, shape index: {}]
  $region1: #{tile.29} parent=0
    #allocation0 [shape = 'u8[4096]{0}', space=vmem, size = 0x1000, scoped, tag = 'scoped mem for output reshape']
    %v2 = vld [vmem:[%s0] sm:$0x1]
    %vm3 = vcmask 31744
    %4 = vst.msk [vmem:[#allocation0] sm:$0x1] %vm3, %v2
    %s5 = scalar_lea.vmem %s0, 7
    %v6 = vld [vmem:[%s5] sm:$0x1]
    %7 = vrot.lane.b32.xlu0 %v6, 28
    %v8 = vpop.permute.xlu0 %7
    %vm9 = vcmask 261344
    %10 = vst.msk [vmem:[#allocation0] sm:$0x1] %vm9, %v8
    %s11 = scalar_lea.vmem %s0, 6
    %v12 = vld [vmem:[%s11] sm:$0x1]
    %13 = vrot.lane.b32.xlu0 %v12, 24
    %v14 = vpop.permute.xlu0 %13
    %vm15 = vcmask 228544
    %16 = vst.msk [vmem:[#allocation0] sm:$0x1] %vm15, %v14
    %s17 = scalar_lea.vmem %s0, 5
    %v18 = vld [vmem:[%s17] sm:$0x1]
    %19 = vrot.lane.b32.xlu0 %v18, 20
    %v20 = vpop.permute.xlu0 %19
    %vm21 = vcmask 195744
    %22 = vst.msk [vmem:[#allocation0] sm:$0x1] %vm21, %v20
    %s23 = scalar_lea.vmem %s0, 4
    %v24 = vld [vmem:[%s23] sm:$0x1]
    %25 = vrot.lane.b32.xlu0 %v24, 16
    %v26 = vpop.permute.xlu0 %25
    %vm27 = vcmask 162944
    %28 = vst.msk [vmem:[#allocation0] sm:$0x1] %vm27, %v26
    %s29 = scalar_lea.vmem %s0, 3
    %v30 = vld [vmem:[%s29] sm:$0x1]
    %31 = vrot.lane.b32.xlu0 %v30, 12
    %v32 = vpop.permute.xlu0 %31
    %vm33 = vcmask 130144
    %34 = vst.msk [vmem:[#allocation0] sm:$0x1] %vm33, %v32
    %s35 = scalar_lea.vmem %s0, 2
    %v36 = vld [vmem:[%s35] sm:$0x1]
    %37 = vrot.lane.b32.xlu0 %v36, 8
    %v38 = vpop.permute.xlu0 %37
    %vm39 = vcmask 97344
    %40 = vst.msk [vmem:[#allocation0] sm:$0x1] %vm39, %v38
    %s41 = scalar_lea.vmem %s0, 1
    %v42 = vld [vmem:[%s41] sm:$0x1]
    %43 = vrot.lane.b32.xlu0 %v42, 4
    %v44 = vpop.permute.xlu0 %43
    %vm45 = vcmask 64544
    %46 = vst.msk [vmem:[#allocation0] sm:$0x1] %vm45, %v44
    %s48 = ssub.s32 2, 1
    %v49 = vld [vmem:[#allocation0] sm:%s48]
    %s51 = ssub.s32 2, 1
    %52 = vst [vmem:[%s1] sm:%s51] %v49

// kernel: conv_autoencoder_forward.1
$region0: #{conv_autoencoder_forward.1}
  #allocation0 [shape = 'u32[]', space=smem, size = 0x4, offset = 0x4, fixed_abs, tag = 'smem constant byte address 0x4 - core index']
  #allocation1 [shape = 'u32[72,128]{1,0:T(1,128)}', space=vmem, size = 0x9000, scoped, tag = 'internal scratch']
  %s0 = inlined_call_operand.vmem [shape: f32[64,96], index: 0, kind: input, shape index: {}]
  %s1 = inlined_call_operand.vmem [shape: f32[4,16,32], index: 1, kind: input, shape index: {}]
  %s2 = inlined_call_operand.vmem [shape: f32[4,96,256], index: 2, kind: input, shape index: {}]
  %s3 = inlined_call_operand.vmem [shape: f32[1,256], index: 3, kind: input, shape index: {}]
  %s4 = inlined_call_operand.vmem [shape: f32[4,8,16], index: 4, kind: input, shape index: {}]
  %s5 = inlined_call_operand.vmem [shape: f32[4,256,32], index: 5, kind: input, shape index: {}]
  %s6 = inlined_call_operand.vmem [shape: f32[1,32], index: 6, kind: input, shape index: {}]
  %s7 = inlined_call_operand.vmem [shape: f32[2,4,8], index: 7, kind: input, shape index: {}]
  %s8 = inlined_call_operand.vmem [shape: f32[2,32,16], index: 8, kind: input, shape index: {}]
  %s9 = inlined_call_operand.vmem [shape: f32[4,16,4], index: 9, kind: input, shape index: {}]
  %s10 = inlined_call_operand.vmem [shape: f32[4,16,256], index: 10, kind: input, shape index: {}]
  %s11 = inlined_call_operand.vmem [shape: f32[1,256], index: 11, kind: input, shape index: {}]
  %s12 = inlined_call_operand.vmem [shape: f32[4,32,16], index: 12, kind: input, shape index: {}]
  %s13 = inlined_call_operand.vmem [shape: f32[4,256,96], index: 13, kind: input, shape index: {}]
  %s14 = inlined_call_operand.vmem [shape: f32[1,96], index: 14, kind: input, shape index: {}]
  %s15 = inlined_call_operand.vmem [shape: f32[64,96], index: 15, kind: output, shape index: {}]
  %s16 = sld [smem:[#allocation0]]
  $region93: #{conv_autoencoder_forward.1} parent=0
    _
  %s18 = ssub.s32 1, %s16
  %s19 = scalar_select 0, %s18, %s16
  loop: start=0, step=1, limit=4
  $region2: #{conv_autoencoder_forward.1} parent=0 // loop_pre_header
    _
  $region3: #{conv_autoencoder_forward.1} parent=0 // loop_header
    %s21 = sphi 0, %s25
    %p22 = scmp.ge.s32.totalorder %s21, 4
    %s31 = sphi 0, %s33
    %s34 = sphi 0, %s31
    %s35 = sphi 0, %s34
    %s51 = sphi 0, %s35
    %s55 = sphi 0, %s55
    %s57 = sphi 0, %s55
    %s58 = sphi 0, %s57
    %s72 = sphi 0, %s58
    %s76 = sphi 0, %s76
    %s78 = sphi 0, %s76
    %s79 = sphi 0, %s78
    %s93 = sphi 0, %s79
    %s97 = sphi 0, %s97
    %s99 = sphi 0, %s97
    %s100 = sphi 0, %s99
    %s114 = sphi 0, %s100
    %s118 = sphi 0, %s118
    %s120 = sphi 0, %s118
    %s121 = sphi 0, %s120
    %s135 = sphi 0, %s121
    %s139 = sphi 0, %s139
    %s141 = sphi 0, %s139
    %s142 = sphi 0, %s141
    %s156 = sphi 0, %s142
    %s160 = sphi 0, %s160
    %s162 = sphi 0, %s160
    %s163 = sphi 0, %s162
    %s177 = sphi 0, %s163
    %s181 = sphi 0, %s181
    %s183 = sphi 0, %s181
    %s184 = sphi 0, %s183
    %s198 = sphi 0, %s184
    %s202 = sphi 0, %s202
    %s204 = sphi 0, %s202
    %s205 = sphi 0, %s204
    %s219 = sphi 0, %s205
    %s223 = sphi 0, %s223
    %s225 = sphi 0, %s223
    %s226 = sphi 0, %s225
    %s240 = sphi 0, %s226
    %s244 = sphi 0, %s244
    %s246 = sphi 0, %s244
    %s247 = sphi 0, %s246
    %s261 = sphi 0, %s247
    %s265 = sphi 0, %s265
    %s267 = sphi 0, %s265
    %s268 = sphi 0, %s267
    %s282 = sphi 0, %s268
    %s286 = sphi 0, %s286
    %s288 = sphi 0, %s286
    %s289 = sphi 0, %s288
    %s303 = sphi 0, %s289
    %s307 = sphi 0, %s307
    %s309 = sphi 0, %s307
    %s310 = sphi 0, %s309
    %s324 = sphi 0, %s310
    %s328 = sphi 0, %s328
    %s330 = sphi 0, %s328
    %s331 = sphi 0, %s330
    %s345 = sphi 0, %s331
    %s351 = sphi 0, %s353
    %s354 = sphi 0, %s351
    %s355 = sphi 0, %s354
    %s371 = sphi 0, %s355
  $region4: #{conv_autoencoder_forward.1} parent=0 // loop_header_branch
    %24 = sbr.rel (%p22) target = $region8
  $region5: #{conv_autoencoder_forward.1} parent=0 // loop_body
    %s26 = ssub.s32 %s21, 1
    %s27 = ssub.s32 %s21, 2
    %s28 = sadd.s32 %s21, 1
    %s29 = ssub.s32 %s21, %s28
    %p30 = scmp.eq.s32.totalorder %s29, 0
    %s32 = sadd.s32 %s31, 1
    %s33 = scalar_select %p30, %s31, %s32
    %p36 = pneg %p30
    %p37 = scmp.eq.s32.totalorder %s21, 1
    %p38 = por %p36, %p37
    %p39 = scmp.ne.s32.totalorder %s31, %s34
    %p40 = scmp.eq.s32.totalorder %s21, 0
    %p41 = por %p39, %p40
    %p42 = scmp.ne.s32.totalorder %s31, %s34
    %p43 = scmp.eq.s32.totalorder %s26, 1
    %p44 = por %p42, %p43
    %p45 = scmp.ne.s32.totalorder %s34, %s35
    %p46 = scmp.eq.s32.totalorder %s26, 0
    %p47 = por %p45, %p46
    %p48 = scmp.ne.s32.totalorder %s34, %s35
    %p49 = scmp.eq.s32.totalorder %s27, 1
    %p50 = por %p48, %p49
    %p52 = scmp.ne.s32.totalorder %s35, %s51
    %p53 = scmp.eq.s32.totalorder %s27, 0
    %p54 = por %p52, %p53
    %s56 = sadd.s32 %s55, 1
    %p59 = scmp.eq.s32.totalorder %s21, 1
    %p60 = scmp.ne.s32.totalorder %s55, %s57
    %p61 = scmp.eq.s32.totalorder %s21, 0
    %p62 = por %p60, %p61
    %p63 = scmp.ne.s32.totalorder %s55, %s57
    %p64 = scmp.eq.s32.totalorder %s26, 1
    %p65 = por %p63, %p64
    %p66 = scmp.ne.s32.totalorder %s57, %s58
    %p67 = scmp.eq.s32.totalorder %s26, 0
    %p68 = por %p66, %p67
    %p69 = scmp.ne.s32.totalorder %s57, %s58
    %p70 = scmp.eq.s32.totalorder %s27, 1
    %p71 = por %p69, %p70
    %p73 = scmp.ne.s32.totalorder %s58, %s72
    %p74 = scmp.eq.s32.totalorder %s27, 0
    %p75 = por %p73, %p74
    %s77 = sadd.s32 %s76, 1
    %p80 = scmp.eq.s32.totalorder %s21, 1
    %p81 = scmp.ne.s32.totalorder %s76, %s78
    %p82 = scmp.eq.s32.totalorder %s21, 0
    %p83 = por %p81, %p82
    %p84 = scmp.ne.s32.totalorder %s76, %s78
    %p85 = scmp.eq.s32.totalorder %s26, 1
    %p86 = por %p84, %p85
    %p87 = scmp.ne.s32.totalorder %s78, %s79
    %p88 = scmp.eq.s32.totalorder %s26, 0
    %p89 = por %p87, %p88
    %p90 = scmp.ne.s32.totalorder %s78, %s79
    %p91 = scmp.eq.s32.totalorder %s27, 1
    %p92 = por %p90, %p91
    %p94 = scmp.ne.s32.totalorder %s79, %s93
    %p95 = scmp.eq.s32.totalorder %s27, 0
    %p96 = por %p94, %p95
    %s98 = sadd.s32 %s97, 1
    %p101 = scmp.eq.s32.totalorder %s21, 1
    %p102 = scmp.ne.s32.totalorder %s97, %s99
    %p103 = scmp.eq.s32.totalorder %s21, 0
    %p104 = por %p102, %p103
    %p105 = scmp.ne.s32.totalorder %s97, %s99
    %p106 = scmp.eq.s32.totalorder %s26, 1
    %p107 = por %p105, %p106
    %p108 = scmp.ne.s32.totalorder %s99, %s100
    %p109 = scmp.eq.s32.totalorder %s26, 0
    %p110 = por %p108, %p109
    %p111 = scmp.ne.s32.totalorder %s99, %s100
    %p112 = scmp.eq.s32.totalorder %s27, 1
    %p113 = por %p111, %p112
    %p115 = scmp.ne.s32.totalorder %s100, %s114
    %p116 = scmp.eq.s32.totalorder %s27, 0
    %p117 = por %p115, %p116
    %s119 = sadd.s32 %s118, 1
    %p122 = scmp.eq.s32.totalorder %s21, 1
    %p123 = scmp.ne.s32.totalorder %s118, %s120
    %p124 = scmp.eq.s32.totalorder %s21, 0
    %p125 = por %p123, %p124
    %p126 = scmp.ne.s32.totalorder %s118, %s120
    %p127 = scmp.eq.s32.totalorder %s26, 1
    %p128 = por %p126, %p127
    %p129 = scmp.ne.s32.totalorder %s120, %s121
    %p130 = scmp.eq.s32.totalorder %s26, 0
    %p131 = por %p129, %p130
    %p132 = scmp.ne.s32.totalorder %s120, %s121
    %p133 = scmp.eq.s32.totalorder %s27, 1
    %p134 = por %p132, %p133
    %p136 = scmp.ne.s32.totalorder %s121, %s135
    %p137 = scmp.eq.s32.totalorder %s27, 0
    %p138 = por %p136, %p137
    %s140 = sadd.s32 %s139, 1
    %p143 = scmp.eq.s32.totalorder %s21, 1
    %p144 = scmp.ne.s32.totalorder %s139, %s141
    %p145 = scmp.eq.s32.totalorder %s21, 0
    %p146 = por %p144, %p145
    %p147 = scmp.ne.s32.totalorder %s139, %s141
    %p148 = scmp.eq.s32.totalorder %s26, 1
    %p149 = por %p147, %p148
    %p150 = scmp.ne.s32.totalorder %s141, %s142
    %p151 = scmp.eq.s32.totalorder %s26, 0
    %p152 = por %p150, %p151
    %p153 = scmp.ne.s32.totalorder %s141, %s142
    %p154 = scmp.eq.s32.totalorder %s27, 1
    %p155 = por %p153, %p154
    %p157 = scmp.ne.s32.totalorder %s142, %s156
    %p158 = scmp.eq.s32.totalorder %s27, 0
    %p159 = por %p157, %p158
    %s161 = sadd.s32 %s160, 1
    %p164 = scmp.eq.s32.totalorder %s21, 1
    %p165 = scmp.ne.s32.totalorder %s160, %s162
    %p166 = scmp.eq.s32.totalorder %s21, 0
    %p167 = por %p165, %p166
    %p168 = scmp.ne.s32.totalorder %s160, %s162
    %p169 = scmp.eq.s32.totalorder %s26, 1
    %p170 = por %p168, %p169
    %p171 = scmp.ne.s32.totalorder %s162, %s163
    %p172 = scmp.eq.s32.totalorder %s26, 0
    %p173 = por %p171, %p172
    %p174 = scmp.ne.s32.totalorder %s162, %s163
    %p175 = scmp.eq.s32.totalorder %s27, 1
    %p176 = por %p174, %p175
    %p178 = scmp.ne.s32.totalorder %s163, %s177
    %p179 = scmp.eq.s32.totalorder %s27, 0
    %p180 = por %p178, %p179
    %s182 = sadd.s32 %s181, 1
    %p185 = scmp.eq.s32.totalorder %s21, 1
    %p186 = scmp.ne.s32.totalorder %s181, %s183
    %p187 = scmp.eq.s32.totalorder %s21, 0
    %p188 = por %p186, %p187
    %p189 = scmp.ne.s32.totalorder %s181, %s183
    %p190 = scmp.eq.s32.totalorder %s26, 1
    %p191 = por %p189, %p190
    %p192 = scmp.ne.s32.totalorder %s183, %s184
    %p193 = scmp.eq.s32.totalorder %s26, 0
    %p194 = por %p192, %p193
    %p195 = scmp.ne.s32.totalorder %s183, %s184
    %p196 = scmp.eq.s32.totalorder %s27, 1
    %p197 = por %p195, %p196
    %p199 = scmp.ne.s32.totalorder %s184, %s198
    %p200 = scmp.eq.s32.totalorder %s27, 0
    %p201 = por %p199, %p200
    %s203 = sadd.s32 %s202, 1
    %p206 = scmp.eq.s32.totalorder %s21, 1
    %p207 = scmp.ne.s32.totalorder %s202, %s204
    %p208 = scmp.eq.s32.totalorder %s21, 0
    %p209 = por %p207, %p208
    %p210 = scmp.ne.s32.totalorder %s202, %s204
    %p211 = scmp.eq.s32.totalorder %s26, 1
    %p212 = por %p210, %p211
    %p213 = scmp.ne.s32.totalorder %s204, %s205
    %p214 = scmp.eq.s32.totalorder %s26, 0
    %p215 = por %p213, %p214
    %p216 = scmp.ne.s32.totalorder %s204, %s205
    %p217 = scmp.eq.s32.totalorder %s27, 1
    %p218 = por %p216, %p217
    %p220 = scmp.ne.s32.totalorder %s205, %s219
    %p221 = scmp.eq.s32.totalorder %s27, 0
    %p222 = por %p220, %p221
    %s224 = sadd.s32 %s223, 1
    %p227 = scmp.eq.s32.totalorder %s21, 1
    %p228 = scmp.ne.s32.totalorder %s223, %s225
    %p229 = scmp.eq.s32.totalorder %s21, 0
    %p230 = por %p228, %p229
    %p231 = scmp.ne.s32.totalorder %s223, %s225
    %p232 = scmp.eq.s32.totalorder %s26, 1
    %p233 = por %p231, %p232
    %p234 = scmp.ne.s32.totalorder %s225, %s226
    %p235 = scmp.eq.s32.totalorder %s26, 0
    %p236 = por %p234, %p235
    %p237 = scmp.ne.s32.totalorder %s225, %s226
    %p238 = scmp.eq.s32.totalorder %s27, 1
    %p239 = por %p237, %p238
    %p241 = scmp.ne.s32.totalorder %s226, %s240
    %p242 = scmp.eq.s32.totalorder %s27, 0
    %p243 = por %p241, %p242
    %s245 = sadd.s32 %s244, 1
    %p248 = scmp.eq.s32.totalorder %s21, 1
    %p249 = scmp.ne.s32.totalorder %s244, %s246
    %p250 = scmp.eq.s32.totalorder %s21, 0
    %p251 = por %p249, %p250
    %p252 = scmp.ne.s32.totalorder %s244, %s246
    %p253 = scmp.eq.s32.totalorder %s26, 1
    %p254 = por %p252, %p253
    %p255 = scmp.ne.s32.totalorder %s246, %s247
    %p256 = scmp.eq.s32.totalorder %s26, 0
    %p257 = por %p255, %p256
    %p258 = scmp.ne.s32.totalorder %s246, %s247
    %p259 = scmp.eq.s32.totalorder %s27, 1
    %p260 = por %p258, %p259
    %p262 = scmp.ne.s32.totalorder %s247, %s261
    %p263 = scmp.eq.s32.totalorder %s27, 0
    %p264 = por %p262, %p263
    %s266 = sadd.s32 %s265, 1
    %p269 = scmp.eq.s32.totalorder %s21, 1
    %p270 = scmp.ne.s32.totalorder %s265, %s267
    %p271 = scmp.eq.s32.totalorder %s21, 0
    %p272 = por %p270, %p271
    %p273 = scmp.ne.s32.totalorder %s265, %s267
    %p274 = scmp.eq.s32.totalorder %s26, 1
    %p275 = por %p273, %p274
    %p276 = scmp.ne.s32.totalorder %s267, %s268
    %p277 = scmp.eq.s32.totalorder %s26, 0
    %p278 = por %p276, %p277
    %p279 = scmp.ne.s32.totalorder %s267, %s268
    %p280 = scmp.eq.s32.totalorder %s27, 1
    %p281 = por %p279, %p280
    %p283 = scmp.ne.s32.totalorder %s268, %s282
    %p284 = scmp.eq.s32.totalorder %s27, 0
    %p285 = por %p283, %p284
    %s287 = sadd.s32 %s286, 1
    %p290 = scmp.eq.s32.totalorder %s21, 1
    %p291 = scmp.ne.s32.totalorder %s286, %s288
    %p292 = scmp.eq.s32.totalorder %s21, 0
    %p293 = por %p291, %p292
    %p294 = scmp.ne.s32.totalorder %s286, %s288
    %p295 = scmp.eq.s32.totalorder %s26, 1
    %p296 = por %p294, %p295
    %p297 = scmp.ne.s32.totalorder %s288, %s289
    %p298 = scmp.eq.s32.totalorder %s26, 0
    %p299 = por %p297, %p298
    %p300 = scmp.ne.s32.totalorder %s288, %s289
    %p301 = scmp.eq.s32.totalorder %s27, 1
    %p302 = por %p300, %p301
    %p304 = scmp.ne.s32.totalorder %s289, %s303
    %p305 = scmp.eq.s32.totalorder %s27, 0
    %p306 = por %p304, %p305
    %s308 = sadd.s32 %s307, 1
    %p311 = scmp.eq.s32.totalorder %s21, 1
    %p312 = scmp.ne.s32.totalorder %s307, %s309
    %p313 = scmp.eq.s32.totalorder %s21, 0
    %p314 = por %p312, %p313
    %p315 = scmp.ne.s32.totalorder %s307, %s309
    %p316 = scmp.eq.s32.totalorder %s26, 1
    %p317 = por %p315, %p316
    %p318 = scmp.ne.s32.totalorder %s309, %s310
    %p319 = scmp.eq.s32.totalorder %s26, 0
    %p320 = por %p318, %p319
    %p321 = scmp.ne.s32.totalorder %s309, %s310
    %p322 = scmp.eq.s32.totalorder %s27, 1
    %p323 = por %p321, %p322
    %p325 = scmp.ne.s32.totalorder %s310, %s324
    %p326 = scmp.eq.s32.totalorder %s27, 0
    %p327 = por %p325, %p326
    %s329 = sadd.s32 %s328, 1
    %p332 = scmp.eq.s32.totalorder %s21, 1
    %p333 = scmp.ne.s32.totalorder %s328, %s330
    %p334 = scmp.eq.s32.totalorder %s21, 0
    %p335 = por %p333, %p334
    %p336 = scmp.ne.s32.totalorder %s328, %s330
    %p337 = scmp.eq.s32.totalorder %s26, 1
    %p338 = por %p336, %p337
    %p339 = scmp.ne.s32.totalorder %s330, %s331
    %p340 = scmp.eq.s32.totalorder %s26, 0
    %p341 = por %p339, %p340
    %p342 = scmp.ne.s32.totalorder %s330, %s331
    %p343 = scmp.eq.s32.totalorder %s27, 1
    %p344 = por %p342, %p343
    %p346 = scmp.ne.s32.totalorder %s331, %s345
    %p347 = scmp.eq.s32.totalorder %s27, 0
    %p348 = por %p346, %p347
    %s349 = ssub.s32 %s21, %s28
    %p350 = scmp.eq.s32.totalorder %s349, 0
    %s352 = sadd.s32 %s351, 1
    %s353 = scalar_select %p350, %s351, %s352
    %p356 = pneg %p350
    %p357 = scmp.eq.s32.totalorder %s21, 1
    %p358 = por %p356, %p357
    %p359 = scmp.ne.s32.totalorder %s351, %s354
    %p360 = scmp.eq.s32.totalorder %s21, 0
    %p361 = por %p359, %p360
    %p362 = scmp.ne.s32.totalorder %s351, %s354
    %p363 = scmp.eq.s32.totalorder %s26, 1
    %p364 = por %p362, %p363
    %p365 = scmp.ne.s32.totalorder %s354, %s355
    %p366 = scmp.eq.s32.totalorder %s26, 0
    %p367 = por %p365, %p366
    %p368 = scmp.ne.s32.totalorder %s354, %s355
    %p369 = scmp.eq.s32.totalorder %s27, 1
    %p370 = por %p368, %p369
    %p372 = scmp.ne.s32.totalorder %s355, %s371
    %p373 = scmp.eq.s32.totalorder %s27, 0
    %p374 = por %p372, %p373
    %p375 = scmp.le.s32.totalorder 1, %s21
    %p376 = scmp.lt.s32.totalorder %s21, 3
    %p377 = pnand %p375, %p376
    %p378 = pneg %p377
    // Predicated region
    $region9: #{conv_autoencoder_forward.1} parent=5 // pred_check
      _
    $region10: #{conv_autoencoder_forward.1} parent=5 // pred_check_branch
      %380 = sbr.rel (%p377) target = $region12
    $region11: #{conv_autoencoder_forward.1} parent=5 // pred_region
      %s381 = ssub.s32 %s21, 1
      // Predicated region
      $region13: #{conv_autoencoder_forward.1} parent=11 // pred_check
        %p382 = pneg %p68
      $region14: #{conv_autoencoder_forward.1} parent=11 // pred_check_branch
        %384 = sbr.rel (%p382) target = $region16
      $region15: #{conv_autoencoder_forward.1} parent=11 // pred_region
        _
      $region16: #{conv_autoencoder_forward.1} parent=11 // pred_fallthru
        _
      // Predicated region
      $region17: #{conv_autoencoder_forward.1} parent=11 // pred_check
        %p385 = pneg %p89
      $region18: #{conv_autoencoder_forward.1} parent=11 // pred_check_branch
        %387 = sbr.rel (%p385) target = $region20
      $region19: #{conv_autoencoder_forward.1} parent=11 // pred_region
        _
      $region20: #{conv_autoencoder_forward.1} parent=11 // pred_fallthru
        _
      // Predicated region
      $region21: #{conv_autoencoder_forward.1} parent=11 // pred_check
        %p388 = pneg %p110
      $region22: #{conv_autoencoder_forward.1} parent=11 // pred_check_branch
        %390 = sbr.rel (%p388) target = $region24
      $region23: #{conv_autoencoder_forward.1} parent=11 // pred_region
        _
      $region24: #{conv_autoencoder_forward.1} parent=11 // pred_fallthru
        _
      // Predicated region
      $region25: #{conv_autoencoder_forward.1} parent=11 // pred_check
        %p391 = pneg %p131
      $region26: #{conv_autoencoder_forward.1} parent=11 // pred_check_branch
        %393 = sbr.rel (%p391) target = $region28
      $region27: #{conv_autoencoder_forward.1} parent=11 // pred_region
        _
      $region28: #{conv_autoencoder_forward.1} parent=11 // pred_fallthru
        _
      // Predicated region
      $region29: #{conv_autoencoder_forward.1} parent=11 // pred_check
        %p394 = pneg %p152
      $region30: #{conv_autoencoder_forward.1} parent=11 // pred_check_branch
        %396 = sbr.rel (%p394) target = $region32
      $region31: #{conv_autoencoder_forward.1} parent=11 // pred_region
        _
      $region32: #{conv_autoencoder_forward.1} parent=11 // pred_fallthru
        _
      // Predicated region
      $region33: #{conv_autoencoder_forward.1} parent=11 // pred_check
        %p397 = pneg %p173
      $region34: #{conv_autoencoder_forward.1} parent=11 // pred_check_branch
        %399 = sbr.rel (%p397) target = $region36
      $region35: #{conv_autoencoder_forward.1} parent=11 // pred_region
        _
      $region36: #{conv_autoencoder_forward.1} parent=11 // pred_fallthru
        _
      // Predicated region
      $region37: #{conv_autoencoder_forward.1} parent=11 // pred_check
        %p400 = pneg %p194
      $region38: #{conv_autoencoder_forward.1} parent=11 // pred_check_branch
        %402 = sbr.rel (%p400) target = $region40
      $region39: #{conv_autoencoder_forward.1} parent=11 // pred_region
        _
      $region40: #{conv_autoencoder_forward.1} parent=11 // pred_fallthru
        _
      // Predicated region
      $region41: #{conv_autoencoder_forward.1} parent=11 // pred_check
        %p403 = pneg %p215
      $region42: #{conv_autoencoder_forward.1} parent=11 // pred_check_branch
        %405 = sbr.rel (%p403) target = $region44
      $region43: #{conv_autoencoder_forward.1} parent=11 // pred_region
        _
      $region44: #{conv_autoencoder_forward.1} parent=11 // pred_fallthru
        _
      // Predicated region
      $region45: #{conv_autoencoder_forward.1} parent=11 // pred_check
        %p406 = pneg %p236
      $region46: #{conv_autoencoder_forward.1} parent=11 // pred_check_branch
        %408 = sbr.rel (%p406) target = $region48
      $region47: #{conv_autoencoder_forward.1} parent=11 // pred_region
        _
      $region48: #{conv_autoencoder_forward.1} parent=11 // pred_fallthru
        _
      // Predicated region
      $region49: #{conv_autoencoder_forward.1} parent=11 // pred_check
        %p409 = pneg %p257
      $region50: #{conv_autoencoder_forward.1} parent=11 // pred_check_branch
        %411 = sbr.rel (%p409) target = $region52
      $region51: #{conv_autoencoder_forward.1} parent=11 // pred_region
        _
      $region52: #{conv_autoencoder_forward.1} parent=11 // pred_fallthru
        _
      // Predicated region
      $region53: #{conv_autoencoder_forward.1} parent=11 // pred_check
        %p412 = pneg %p278
      $region54: #{conv_autoencoder_forward.1} parent=11 // pred_check_branch
        %414 = sbr.rel (%p412) target = $region56
      $region55: #{conv_autoencoder_forward.1} parent=11 // pred_region
        _
      $region56: #{conv_autoencoder_forward.1} parent=11 // pred_fallthru
        _
      // Predicated region
      $region57: #{conv_autoencoder_forward.1} parent=11 // pred_check
        %p415 = pneg %p299
      $region58: #{conv_autoencoder_forward.1} parent=11 // pred_check_branch
        %417 = sbr.rel (%p415) target = $region60
      $region59: #{conv_autoencoder_forward.1} parent=11 // pred_region
        _
      $region60: #{conv_autoencoder_forward.1} parent=11 // pred_fallthru
        _
      // Predicated region
      $region61: #{conv_autoencoder_forward.1} parent=11 // pred_check
        %p418 = pneg %p320
      $region62: #{conv_autoencoder_forward.1} parent=11 // pred_check_branch
        %420 = sbr.rel (%p418) target = $region64
      $region63: #{conv_autoencoder_forward.1} parent=11 // pred_region
        _
      $region64: #{conv_autoencoder_forward.1} parent=11 // pred_fallthru
        _
      // Predicated region
      $region65: #{conv_autoencoder_forward.1} parent=11 // pred_check
        %p421 = pneg %p341
      $region66: #{conv_autoencoder_forward.1} parent=11 // pred_check_branch
        %423 = sbr.rel (%p421) target = $region68
      $region67: #{conv_autoencoder_forward.1} parent=11 // pred_region
        _
      $region68: #{conv_autoencoder_forward.1} parent=11 // pred_fallthru
        _
    $region12: #{conv_autoencoder_forward.1} parent=5 // pred_fallthru
      _
    %p424 = scmp.lt.s32.totalorder %s21, 2
    // Predicated region
    $region69: #{conv_autoencoder_forward.1} parent=5 // pred_check
      %p425 = pneg %p424
    $region70: #{conv_autoencoder_forward.1} parent=5 // pred_check_branch
      %427 = sbr.rel (%p425) target = $region72
    $region71: #{conv_autoencoder_forward.1} parent=5 // pred_region
      // Predicated region
      $region73: #{conv_autoencoder_forward.1} parent=71 // pred_check
        %p428 = pneg %p41
      $region74: #{conv_autoencoder_forward.1} parent=71 // pred_check_branch
        %430 = sbr.rel (%p428) target = $region76
      $region75: #{conv_autoencoder_forward.1} parent=71 // pred_region
        %s431 = smul.u32 4, %s21
        %p432 = scmp.lt.s32.totalorder %s431, 7
        %s433 = scalar_select %p432, %s431, 7
        %s434 = smul.addr %s433, 8
        %s435 = scalar_lea.vmem %s0, %s434
        %s436 = smul.u32 4, %s21
      $region76: #{conv_autoencoder_forward.1} parent=71 // pred_fallthru
        _
    $region72: #{conv_autoencoder_forward.1} parent=5 // pred_fallthru
      _
    %p437 = scmp.le.s32.totalorder 1, %s21
    %p438 = scmp.lt.s32.totalorder %s21, 3
    %p439 = pnand %p437, %p438
    %p440 = pneg %p439
    // Predicated region
    $region77: #{conv_autoencoder_forward.1} parent=5 // pred_check
      _
    $region78: #{conv_autoencoder_forward.1} parent=5 // pred_check_branch
      %442 = sbr.rel (%p439) target = $region80
    $region79: #{conv_autoencoder_forward.1} parent=5 // pred_region
      %s443 = ssub.s32 %s21, 1
      %s444 = smul.u32 4, %s26
      %p445 = scmp.lt.s32.totalorder %s444, 7
      %s446 = scalar_select %p445, %s444, 7
      %s447 = smul.addr %s446, 8
      %s448 = scalar_lea.vmem %s0, %s447
      %p449 = pneg %p47
      %p450 = pneg %p44
      %p451 = pneg %p68
      %p452 = pneg %p65
      %p453 = pneg %p89
      %p454 = pneg %p86
      %p455 = pneg %p110
      %p456 = pneg %p107
      %p457 = pneg %p131
      %p458 = pneg %p128
      %p459 = pneg %p152
      %p460 = pneg %p149
      %p461 = pneg %p173
      %p462 = pneg %p170
      %p463 = pneg %p194
      %p464 = pneg %p191
      %p465 = pneg %p215
      %p466 = pneg %p212
      %p467 = pneg %p236
      %p468 = pneg %p233
      %p469 = pneg %p257
      %p470 = pneg %p254
      %p471 = pneg %p278
      %p472 = pneg %p275
      %p473 = pneg %p299
      %p474 = pneg %p296
      %p475 = pneg %p320
      %p476 = pneg %p317
      %p477 = pneg %p341
      %p478 = pneg %p338
      %p479 = pneg %p367
      %p480 = pneg %p364
      %s481 = smul.u32 4, %s26
      %p482 = scmp.lt.s32.totalorder %s481, 7
      %s483 = scalar_select %p482, %s481, 7
      %s484 = smul.addr %s483, 8
      %s485 = scalar_lea.vmem %s15, %s484
      %s486 = smul.u32 4, %s26
      %p487 = scmp.lt.s32.totalorder %s486, 7
      %s488 = scalar_select %p487, %s486, 7
      %s489 = smul.addr %s488, 8
      %s490 = scalar_lea.vmem %s0, %s489
      %s491 = smul.u32 4, %s26
      %s492 = smul.u32 4, %s26
      %p493 = scmp.lt.s32.totalorder %s492, 7
      %s494 = scalar_select %p493, %s492, 7
      %s495 = smul.addr %s494, 8
      %s496 = scalar_lea.vmem %s15, %s495
      %s497 = smul.u32 4, %s26
      %v498 = vld [vmem:[%s490] sm:$0xff]
      %v499 = vld [vmem:[%s490 + $0x8] sm:$0xff]
      %v500 = vld [vmem:[%s490 + $0x10] sm:$0xff]
      %v501 = vld [vmem:[%s490 + $0x18] sm:$0xff]
      %v502 = vld [vmem:[%s1] sm:$0xff]
      %v503 = vld [vmem:[%s1 + $0x8] sm:$0xff]
      %vm504 = vcmask 261120
      %v506 = vsel %vm504, %v502, 0
      %v509 = vsel %vm504, %v503, 0
      %511 = vmatpush.msra.mxu0 0.0
      %512 = vmatpush.msra.mxu0 0.0
      %513 = vmatpush.msra.mxu0 0.0
      %514 = vmatpush.msra.mxu0 0.0
      %515 = vmatpush.msra.mxu0 0.0
      %516 = vmatpush.msra.mxu0 0.0
      %517 = vmatpush.msra.mxu0 0.0
      %518 = vmatpush.msra.mxu0 0.0
      %519 = vmatpush.msra.mxu0 0.0
      %520 = vmatpush.msra.mxu0 0.0
      %521 = vmatpush.msra.mxu0 0.0
      %522 = vmatpush.msra.mxu0 0.0
      %523 = vmatpush.msra.mxu0 %v501
      %524 = vmatpush.msra.mxu0 %v500
      %525 = vmatpush.msra.mxu0 %v499
      %526 = vmatpush.msra.mxu0 %v498
      %527 = vmatmul.f32.gmra.mxu0 %v506
      %v528 = vpop.f32.mrf.mxu0
      %v529 = vadd.f32 0.0, %v528
      %530 = vmatmul.f32.gmra.mxu0 %v509
      %v531 = vpop.f32.mrf.mxu0
      %v532 = vadd.f32 0.0, %v531
      %533 = vdwg.mxu0
      %v534 = vld [vmem:[%s2] sm:$0xff]
      %v535 = vld [vmem:[%s2 + $0x8] sm:$0xff]
      %v536 = vld [vmem:[%s2 + $0x10] sm:$0xff]
      %v537 = vld [vmem:[%s2 + $0x18] sm:$0xff]
      %v538 = vld [vmem:[%s2 + $0x20] sm:$0xff]
      %v539 = vld [vmem:[%s2 + $0x28] sm:$0xff]
      %v540 = vld [vmem:[%s2 + $0x30] sm:$0xff]
      %v541 = vld [vmem:[%s2 + $0x38] sm:$0xff]
      %v542 = vld [vmem:[%s2 + $0x40] sm:$0xff]
      %v543 = vld [vmem:[%s2 + $0x48] sm:$0xff]
      %v544 = vld [vmem:[%s2 + $0x50] sm:$0xff]
      %v545 = vld [vmem:[%s2 + $0x58] sm:$0xff]
      %v546 = vld [vmem:[%s2 + $0x60] sm:$0xff]
      %v547 = vld [vmem:[%s2 + $0x68] sm:$0xff]
      %v548 = vld [vmem:[%s2 + $0x70] sm:$0xff]
      %v549 = vld [vmem:[%s2 + $0x78] sm:$0xff]
      %v550 = vld [vmem:[%s2 + $0x80] sm:$0xff]
      %v551 = vld [vmem:[%s2 + $0x88] sm:$0xff]
      %v552 = vld [vmem:[%s2 + $0x90] sm:$0xff]
      %v553 = vld [vmem:[%s2 + $0x98] sm:$0xff]
      %v554 = vld [vmem:[%s2 + $0xa0] sm:$0xff]
      %v555 = vld [vmem:[%s2 + $0xa8] sm:$0xff]
      %v556 = vld [vmem:[%s2 + $0xb0] sm:$0xff]
      %v557 = vld [vmem:[%s2 + $0xb8] sm:$0xff]
      %s558 = scalar_lea.vmem %s1, 16
      %v559 = vld [vmem:[%s558] sm:$0xff]
      %v560 = vld [vmem:[%s558 + $0x8] sm:$0xff]
      %v562 = vsel %vm504, %v559, 0
      %v565 = vsel %vm504, %v560, 0
      %567 = vmatpush.msra.mxu0 0.0
      %568 = vmatpush.msra.mxu0 0.0
      %569 = vmatpush.msra.mxu0 0.0
      %570 = vmatpush.msra.mxu0 0.0
      %571 = vmatpush.msra.mxu0 0.0
      %572 = vmatpush.msra.mxu0 0.0
      %573 = vmatpush.msra.mxu0 0.0
      %574 = vmatpush.msra.mxu0 0.0
      %575 = vmatpush.msra.mxu0 0.0
      %576 = vmatpush.msra.mxu0 0.0
      %577 = vmatpush.msra.mxu0 0.0
      %578 = vmatpush.msra.mxu0 0.0
      %579 = vmatpush.msra.mxu0 %v501
      %580 = vmatpush.msra.mxu0 %v500
      %581 = vmatpush.msra.mxu0 %v499
      %582 = vmatpush.msra.mxu0 %v498
      %583 = vmatmul.f32.gmra.mxu0 %v562
      %v584 = vpop.f32.mrf.mxu0
      %v585 = vadd.f32 0.0, %v584
      %586 = vmatmul.f32.gmra.mxu0 %v565
      %v587 = vpop.f32.mrf.mxu0
      %v588 = vadd.f32 0.0, %v587
      %589 = vdwg.mxu0
      %s590 = scalar_lea.vmem %s2, 192
      %v591 = vld [vmem:[%s590] sm:$0xff]
      %v592 = vld [vmem:[%s590 + $0x8] sm:$0xff]
      %v593 = vld [vmem:[%s590 + $0x10] sm:$0xff]
      %v594 = vld [vmem:[%s590 + $0x18] sm:$0xff]
      %v595 = vld [vmem:[%s590 + $0x20] sm:$0xff]
      %v596 = vld [vmem:[%s590 + $0x28] sm:$0xff]
      %v597 = vld [vmem:[%s590 + $0x30] sm:$0xff]
      %v598 = vld [vmem:[%s590 + $0x38] sm:$0xff]
      %v599 = vld [vmem:[%s590 + $0x40] sm:$0xff]
      %v600 = vld [vmem:[%s590 + $0x48] sm:$0xff]
      %v601 = vld [vmem:[%s590 + $0x50] sm:$0xff]
      %v602 = vld [vmem:[%s590 + $0x58] sm:$0xff]
      %v603 = vld [vmem:[%s590 + $0x60] sm:$0xff]
      %v604 = vld [vmem:[%s590 + $0x68] sm:$0xff]
      %v605 = vld [vmem:[%s590 + $0x70] sm:$0xff]
      %v606 = vld [vmem:[%s590 + $0x78] sm:$0xff]
      %v607 = vld [vmem:[%s590 + $0x80] sm:$0xff]
      %v608 = vld [vmem:[%s590 + $0x88] sm:$0xff]
      %v609 = vld [vmem:[%s590 + $0x90] sm:$0xff]
      %v610 = vld [vmem:[%s590 + $0x98] sm:$0xff]
      %v611 = vld [vmem:[%s590 + $0xa0] sm:$0xff]
      %v612 = vld [vmem:[%s590 + $0xa8] sm:$0xff]
      %v613 = vld [vmem:[%s590 + $0xb0] sm:$0xff]
      %v614 = vld [vmem:[%s590 + $0xb8] sm:$0xff]
      %vm615 = vcmask 785408
      %v617 = vsel %vm615, %v585, 0
      %v620 = vsel %vm615, %v588, 0
      %622 = vmatpush.msra.mxu0 0.0
      %623 = vmatpush.msra.mxu0 0.0
      %624 = vmatpush.msra.mxu0 0.0
      %625 = vmatpush.msra.mxu0 0.0
      %626 = vmatpush.msra.mxu0 %v613
      %627 = vmatpush.msra.mxu0 %v611
      %628 = vmatpush.msra.mxu0 %v609
      %629 = vmatpush.msra.mxu0 %v607
      %630 = vmatpush.msra.mxu0 %v605
      %631 = vmatpush.msra.mxu0 %v603
      %632 = vmatpush.msra.mxu0 %v601
      %633 = vmatpush.msra.mxu0 %v599
      %634 = vmatpush.msra.mxu0 %v597
      %635 = vmatpush.msra.mxu0 %v595
      %636 = vmatpush.msra.mxu0 %v593
      %637 = vmatpush.msra.mxu0 %v591
      %638 = vmatmul.f32.gmra.mxu0 %v617
      %v639 = vpop.f32.mrf.mxu0
      %v640 = vadd.f32 0.0, %v639
      %641 = vmatmul.f32.gmra.mxu0 %v620
      %v642 = vpop.f32.mrf.mxu0
      %v643 = vadd.f32 0.0, %v642
      %644 = vdwg.mxu0
      %645 = vmatpush.msra.mxu0 0.0
      %646 = vmatpush.msra.mxu0 0.0
      %647 = vmatpush.msra.mxu0 0.0
      %648 = vmatpush.msra.mxu0 0.0
      %649 = vmatpush.msra.mxu0 %v614
      %650 = vmatpush.msra.mxu0 %v612
      %651 = vmatpush.msra.mxu0 %v610
      %652 = vmatpush.msra.mxu0 %v608
      %653 = vmatpush.msra.mxu0 %v606
      %654 = vmatpush.msra.mxu0 %v604
      %655 = vmatpush.msra.mxu0 %v602
      %656 = vmatpush.msra.mxu0 %v600
      %657 = vmatpush.msra.mxu0 %v598
      %658 = vmatpush.msra.mxu0 %v596
      %659 = vmatpush.msra.mxu0 %v594
      %660 = vmatpush.msra.mxu0 %v592
      %661 = vmatmul.f32.gmra.mxu0 %v617
      %v662 = vpop.f32.mrf.mxu0
      %v663 = vadd.f32 0.0, %v662
      %664 = vmatmul.f32.gmra.mxu0 %v620
      %v665 = vpop.f32.mrf.mxu0
      %v666 = vadd.f32 0.0, %v665
      %667 = vdwg.mxu0
      %v669 = vsel %vm615, %v529, 0
      %v672 = vsel %vm615, %v532, 0
      %674 = vmatpush.msra.mxu0 0.0
      %675 = vmatpush.msra.mxu0 0.0
      %676 = vmatpush.msra.mxu0 0.0
      %677 = vmatpush.msra.mxu0 0.0
      %678 = vmatpush.msra.mxu0 %v556
      %679 = vmatpush.msra.mxu0 %v554
      %680 = vmatpush.msra.mxu0 %v552
      %681 = vmatpush.msra.mxu0 %v550
      %682 = vmatpush.msra.mxu0 %v548
      %683 = vmatpush.msra.mxu0 %v546
      %684 = vmatpush.msra.mxu0 %v544
      %685 = vmatpush.msra.mxu0 %v542
      %686 = vmatpush.msra.mxu0 %v540
      %687 = vmatpush.msra.mxu0 %v538
      %688 = vmatpush.msra.mxu0 %v536
      %689 = vmatpush.msra.mxu0 %v534
      %690 = vmatmul.f32.gmra.mxu0 %v669
      %v691 = vpop.f32.mrf.mxu0
      %v692 = vadd.f32 %v640, %v691
      %693 = vmatmul.f32.gmra.mxu0 %v672
      %v694 = vpop.f32.mrf.mxu0
      %v695 = vadd.f32 %v643, %v694
      %696 = vdwg.mxu0
      %697 = vmatpush.msra.mxu0 0.0
      %698 = vmatpush.msra.mxu0 0.0
      %699 = vmatpush.msra.mxu0 0.0
      %700 = vmatpush.msra.mxu0 0.0
      %701 = vmatpush.msra.mxu0 %v557
      %702 = vmatpush.msra.mxu0 %v555
      %703 = vmatpush.msra.mxu0 %v553
      %704 = vmatpush.msra.mxu0 %v551
      %705 = vmatpush.msra.mxu0 %v549
      %706 = vmatpush.msra.mxu0 %v547
      %707 = vmatpush.msra.mxu0 %v545
      %708 = vmatpush.msra.mxu0 %v543
      %709 = vmatpush.msra.mxu0 %v541
      %710 = vmatpush.msra.mxu0 %v539
      %711 = vmatpush.msra.mxu0 %v537
      %712 = vmatpush.msra.mxu0 %v535
      %713 = vmatmul.f32.gmra.mxu0 %v669
      %v714 = vpop.f32.mrf.mxu0
      %v715 = vadd.f32 %v663, %v714
      %716 = vmatmul.f32.gmra.mxu0 %v672
      %v717 = vpop.f32.mrf.mxu0
      %v718 = vadd.f32 %v666, %v717
      %719 = vdwg.mxu0
      %s720 = scalar_lea.vmem %s1, 32
      %v721 = vld [vmem:[%s720] sm:$0xff]
      %v722 = vld [vmem:[%s720 + $0x8] sm:$0xff]
      %v724 = vsel %vm504, %v721, 0
      %v727 = vsel %vm504, %v722, 0
      %729 = vmatpush.msra.mxu0 0.0
      %730 = vmatpush.msra.mxu0 0.0
      %731 = vmatpush.msra.mxu0 0.0
      %732 = vmatpush.msra.mxu0 0.0
      %733 = vmatpush.msra.mxu0 0.0
      %734 = vmatpush.msra.mxu0 0.0
      %735 = vmatpush.msra.mxu0 0.0
      %736 = vmatpush.msra.mxu0 0.0
      %737 = vmatpush.msra.mxu0 0.0
      %738 = vmatpush.msra.mxu0 0.0
      %739 = vmatpush.msra.mxu0 0.0
      %740 = vmatpush.msra.mxu0 0.0
      %741 = vmatpush.msra.mxu0 %v501
      %742 = vmatpush.msra.mxu0 %v500
      %743 = vmatpush.msra.mxu0 %v499
      %744 = vmatpush.msra.mxu0 %v498
      %745 = vmatmul.f32.gmra.mxu0 %v724
      %v746 = vpop.f32.mrf.mxu0
      %v747 = vadd.f32 0.0, %v746
      %748 = vmatmul.f32.gmra.mxu0 %v727
      %v749 = vpop.f32.mrf.mxu0
      %v750 = vadd.f32 0.0, %v749
      %751 = vdwg.mxu0
      %s752 = scalar_lea.vmem %s2, 384
      %v753 = vld [vmem:[%s752] sm:$0xff]
      %v754 = vld [vmem:[%s752 + $0x8] sm:$0xff]
      %v755 = vld [vmem:[%s752 + $0x10] sm:$0xff]
      %v756 = vld [vmem:[%s752 + $0x18] sm:$0xff]
      %v757 = vld [vmem:[%s752 + $0x20] sm:$0xff]
      %v758 = vld [vmem:[%s752 + $0x28] sm:$0xff]
      %v759 = vld [vmem:[%s752 + $0x30] sm:$0xff]
      %v760 = vld [vmem:[%s752 + $0x38] sm:$0xff]
      %v761 = vld [vmem:[%s752 + $0x40] sm:$0xff]
      %v762 = vld [vmem:[%s752 + $0x48] sm:$0xff]
      %v763 = vld [vmem:[%s752 + $0x50] sm:$0xff]
      %v764 = vld [vmem:[%s752 + $0x58] sm:$0xff]
      %v765 = vld [vmem:[%s752 + $0x60] sm:$0xff]
      %v766 = vld [vmem:[%s752 + $0x68] sm:$0xff]
      %v767 = vld [vmem:[%s752 + $0x70] sm:$0xff]
      %v768 = vld [vmem:[%s752 + $0x78] sm:$0xff]
      %v769 = vld [vmem:[%s752 + $0x80] sm:$0xff]
      %v770 = vld [vmem:[%s752 + $0x88] sm:$0xff]
      %v771 = vld [vmem:[%s752 + $0x90] sm:$0xff]
      %v772 = vld [vmem:[%s752 + $0x98] sm:$0xff]
      %v773 = vld [vmem:[%s752 + $0xa0] sm:$0xff]
      %v774 = vld [vmem:[%s752 + $0xa8] sm:$0xff]
      %v775 = vld [vmem:[%s752 + $0xb0] sm:$0xff]
      %v776 = vld [vmem:[%s752 + $0xb8] sm:$0xff]
      %v778 = vsel %vm615, %v747, 0
      %v781 = vsel %vm615, %v750, 0
      %783 = vmatpush.msra.mxu0 0.0
      %784 = vmatpush.msra.mxu0 0.0
      %785 = vmatpush.msra.mxu0 0.0
      %786 = vmatpush.msra.mxu0 0.0
      %787 = vmatpush.msra.mxu0 %v775
      %788 = vmatpush.msra.mxu0 %v773
      %789 = vmatpush.msra.mxu0 %v771
      %790 = vmatpush.msra.mxu0 %v769
      %791 = vmatpush.msra.mxu0 %v767
      %792 = vmatpush.msra.mxu0 %v765
      %793 = vmatpush.msra.mxu0 %v763
      %794 = vmatpush.msra.mxu0 %v761
      %795 = vmatpush.msra.mxu0 %v759
      %796 = vmatpush.msra.mxu0 %v757
      %797 = vmatpush.msra.mxu0 %v755
      %798 = vmatpush.msra.mxu0 %v753
      %799 = vmatmul.f32.gmra.mxu0 %v778
      %v800 = vpop.f32.mrf.mxu0
      %v801 = vadd.f32 0.0, %v800
      %802 = vmatmul.f32.gmra.mxu0 %v781
      %v803 = vpop.f32.mrf.mxu0
      %v804 = vadd.f32 0.0, %v803
      %805 = vdwg.mxu0
      %806 = vmatpush.msra.mxu0 0.0
      %807 = vmatpush.msra.mxu0 0.0
      %808 = vmatpush.msra.mxu0 0.0
      %809 = vmatpush.msra.mxu0 0.0
      %810 = vmatpush.msra.mxu0 %v776
      %811 = vmatpush.msra.mxu0 %v774
      %812 = vmatpush.msra.mxu0 %v772
      %813 = vmatpush.msra.mxu0 %v770
      %814 = vmatpush.msra.mxu0 %v768
      %815 = vmatpush.msra.mxu0 %v766
      %816 = vmatpush.msra.mxu0 %v764
      %817 = vmatpush.msra.mxu0 %v762
      %818 = vmatpush.msra.mxu0 %v760
      %819 = vmatpush.msra.mxu0 %v758
      %820 = vmatpush.msra.mxu0 %v756
      %821 = vmatpush.msra.mxu0 %v754
      %822 = vmatmul.f32.gmra.mxu0 %v778
      %v823 = vpop.f32.mrf.mxu0
      %v824 = vadd.f32 0.0, %v823
      %825 = vmatmul.f32.gmra.mxu0 %v781
      %v826 = vpop.f32.mrf.mxu0
      %v827 = vadd.f32 0.0, %v826
      %828 = vdwg.mxu0
      %v829 = vadd.f32 %v692, %v801
      %v830 = vadd.f32 %v715, %v824
      %v831 = vadd.f32 %v695, %v804
      %v832 = vadd.f32 %v718, %v827
      %s833 = scalar_lea.vmem %s1, 48
      %v834 = vld [vmem:[%s833] sm:$0xff]
      %v835 = vld [vmem:[%s833 + $0x8] sm:$0xff]
      %v837 = vsel %vm504, %v834, 0
      %v840 = vsel %vm504, %v835, 0
      %842 = vmatpush.msra.mxu0 0.0
      %843 = vmatpush.msra.mxu0 0.0
      %844 = vmatpush.msra.mxu0 0.0
      %845 = vmatpush.msra.mxu0 0.0
      %846 = vmatpush.msra.mxu0 0.0
      %847 = vmatpush.msra.mxu0 0.0
      %848 = vmatpush.msra.mxu0 0.0
      %849 = vmatpush.msra.mxu0 0.0
      %850 = vmatpush.msra.mxu0 0.0
      %851 = vmatpush.msra.mxu0 0.0
      %852 = vmatpush.msra.mxu0 0.0
      %853 = vmatpush.msra.mxu0 0.0
      %854 = vmatpush.msra.mxu0 %v501
      %855 = vmatpush.msra.mxu0 %v500
      %856 = vmatpush.msra.mxu0 %v499
      %857 = vmatpush.msra.mxu0 %v498
      %858 = vmatmul.f32.gmra.mxu0 %v837
      %v859 = vpop.f32.mrf.mxu0
      %v860 = vadd.f32 0.0, %v859
      %861 = vmatmul.f32.gmra.mxu0 %v840
      %v862 = vpop.f32.mrf.mxu0
      %v863 = vadd.f32 0.0, %v862
      %864 = vdwg.mxu0
      %s865 = scalar_lea.vmem %s2, 576
      %v866 = vld [vmem:[%s865] sm:$0xff]
      %v867 = vld [vmem:[%s865 + $0x8] sm:$0xff]
      %v868 = vld [vmem:[%s865 + $0x10] sm:$0xff]
      %v869 = vld [vmem:[%s865 + $0x18] sm:$0xff]
      %v870 = vld [vmem:[%s865 + $0x20] sm:$0xff]
      %v871 = vld [vmem:[%s865 + $0x28] sm:$0xff]
      %v872 = vld [vmem:[%s865 + $0x30] sm:$0xff]
      %v873 = vld [vmem:[%s865 + $0x38] sm:$0xff]
      %v874 = vld [vmem:[%s865 + $0x40] sm:$0xff]
      %v875 = vld [vmem:[%s865 + $0x48] sm:$0xff]
      %v876 = vld [vmem:[%s865 + $0x50] sm:$0xff]
      %v877 = vld [vmem:[%s865 + $0x58] sm:$0xff]
      %v878 = vld [vmem:[%s865 + $0x60] sm:$0xff]
      %v879 = vld [vmem:[%s865 + $0x68] sm:$0xff]
      %v880 = vld [vmem:[%s865 + $0x70] sm:$0xff]
      %v881 = vld [vmem:[%s865 + $0x78] sm:$0xff]
      %v882 = vld [vmem:[%s865 + $0x80] sm:$0xff]
      %v883 = vld [vmem:[%s865 + $0x88] sm:$0xff]
      %v884 = vld [vmem:[%s865 + $0x90] sm:$0xff]
      %v885 = vld [vmem:[%s865 + $0x98] sm:$0xff]
      %v886 = vld [vmem:[%s865 + $0xa0] sm:$0xff]
      %v887 = vld [vmem:[%s865 + $0xa8] sm:$0xff]
      %v888 = vld [vmem:[%s865 + $0xb0] sm:$0xff]
      %v889 = vld [vmem:[%s865 + $0xb8] sm:$0xff]
      %v891 = vsel %vm615, %v860, 0
      %v894 = vsel %vm615, %v863, 0
      %896 = vmatpush.msra.mxu0 0.0
      %897 = vmatpush.msra.mxu0 0.0
      %898 = vmatpush.msra.mxu0 0.0
      %899 = vmatpush.msra.mxu0 0.0
      %900 = vmatpush.msra.mxu0 %v888
      %901 = vmatpush.msra.mxu0 %v886
      %902 = vmatpush.msra.mxu0 %v884
      %903 = vmatpush.msra.mxu0 %v882
      %904 = vmatpush.msra.mxu0 %v880
      %905 = vmatpush.msra.mxu0 %v878
      %906 = vmatpush.msra.mxu0 %v876
      %907 = vmatpush.msra.mxu0 %v874
      %908 = vmatpush.msra.mxu0 %v872
      %909 = vmatpush.msra.mxu0 %v870
      %910 = vmatpush.msra.mxu0 %v868
      %911 = vmatpush.msra.mxu0 %v866
      %912 = vmatmul.f32.gmra.mxu0 %v891
      %v913 = vpop.f32.mrf.mxu0
      %v914 = vadd.f32 0.0, %v913
      %915 = vmatmul.f32.gmra.mxu0 %v894
      %v916 = vpop.f32.mrf.mxu0
      %v917 = vadd.f32 0.0, %v916
      %918 = vdwg.mxu0
      %919 = vmatpush.msra.mxu0 0.0
      %920 = vmatpush.msra.mxu0 0.0
      %921 = vmatpush.msra.mxu0 0.0
      %922 = vmatpush.msra.mxu0 0.0
      %923 = vmatpush.msra.mxu0 %v889
      %924 = vmatpush.msra.mxu0 %v887
      %925 = vmatpush.msra.mxu0 %v885
      %926 = vmatpush.msra.mxu0 %v883
      %927 = vmatpush.msra.mxu0 %v881
      %928 = vmatpush.msra.mxu0 %v879
      %929 = vmatpush.msra.mxu0 %v877
      %930 = vmatpush.msra.mxu0 %v875
      %931 = vmatpush.msra.mxu0 %v873
      %932 = vmatpush.msra.mxu0 %v871
      %933 = vmatpush.msra.mxu0 %v869
      %934 = vmatpush.msra.mxu0 %v867
      %935 = vmatmul.f32.gmra.mxu0 %v891
      %v936 = vpop.f32.mrf.mxu0
      %v937 = vadd.f32 0.0, %v936
      %938 = vmatmul.f32.gmra.mxu0 %v894
      %v939 = vpop.f32.mrf.mxu0
      %v940 = vadd.f32 0.0, %v939
      %941 = vdwg.mxu0
      %v942 = vadd.f32 %v829, %v914
      %v943 = vadd.f32 %v830, %v937
      %v944 = vadd.f32 %v831, %v917
      %v945 = vadd.f32 %v832, %v940
      %v946 = vld [vmem:[%s3] sm:$0x3]
      %v948 = vperm.slane %v946, 0
      %v949 = vperm.slane %v946, 1
      %v952 = vadd.f32 %v942, %v948
      %v953 = vadd.f32 %v943, %v949
      %v954 = vadd.f32 %v944, %v948
      %v955 = vadd.f32 %v945, %v949
      %v956 = vmax.f32 %v952, 0.0
      %v957 = vmax.f32 %v953, 0.0
      %v958 = vmax.f32 %v954, 0.0
      %v959 = vmax.f32 %v955, 0.0
      %v960 = vld [vmem:[%s4] sm:$0xff]
      %vm961 = vcmask 130048
      %v963 = vsel %vm961, %v960, 0
      %965 = vmatpush.msra.mxu0 0.0
      %966 = vmatpush.msra.mxu0 0.0
      %967 = vmatpush.msra.mxu0 0.0
      %968 = vmatpush.msra.mxu0 0.0
      %969 = vmatpush.msra.mxu0 0.0
      %970 = vmatpush.msra.mxu0 0.0
      %971 = vmatpush.msra.mxu0 0.0
      %972 = vmatpush.msra.mxu0 0.0
      %973 = vmatpush.msra.mxu0 0.0
      %974 = vmatpush.msra.mxu0 0.0
      %975 = vmatpush.msra.mxu0 0.0
      %976 = vmatpush.msra.mxu0 0.0
      %977 = vmatpush.msra.mxu0 0.0
      %978 = vmatpush.msra.mxu0 0.0
      %979 = vmatpush.msra.mxu0 %v958
      %980 = vmatpush.msra.mxu0 %v956
      %981 = vmatmul.f32.gmra.mxu0 %v963
      %v982 = vpop.f32.mrf.mxu0
      %v983 = vadd.f32 0.0, %v982
      %984 = vdwg.mxu0
      %985 = vmatpush.msra.mxu0 0.0
      %986 = vmatpush.msra.mxu0 0.0
      %987 = vmatpush.msra.mxu0 0.0
      %988 = vmatpush.msra.mxu0 0.0
      %989 = vmatpush.msra.mxu0 0.0
      %990 = vmatpush.msra.mxu0 0.0
      %991 = vmatpush.msra.mxu0 0.0
      %992 = vmatpush.msra.mxu0 0.0
      %993 = vmatpush.msra.mxu0 0.0
      %994 = vmatpush.msra.mxu0 0.0
      %995 = vmatpush.msra.mxu0 0.0
      %996 = vmatpush.msra.mxu0 0.0
      %997 = vmatpush.msra.mxu0 0.0
      %998 = vmatpush.msra.mxu0 0.0
      %999 = vmatpush.msra.mxu0 %v959
      %1000 = vmatpush.msra.mxu0 %v957
      %1001 = vmatmul.f32.gmra.mxu0 %v963
      %v1002 = vpop.f32.mrf.mxu0
      %v1003 = vadd.f32 0.0, %v1002
      %1004 = vdwg.mxu0
      %v1005 = vld [vmem:[%s5] sm:$0xff]
      %v1006 = vld [vmem:[%s5 + $0x8] sm:$0xff]
      %v1007 = vld [vmem:[%s5 + $0x10] sm:$0xff]
      %v1008 = vld [vmem:[%s5 + $0x18] sm:$0xff]
      %v1009 = vld [vmem:[%s5 + $0x20] sm:$0xff]
      %v1010 = vld [vmem:[%s5 + $0x28] sm:$0xff]
      %v1011 = vld [vmem:[%s5 + $0x30] sm:$0xff]
      %v1012 = vld [vmem:[%s5 + $0x38] sm:$0xff]
      %v1013 = vld [vmem:[%s5 + $0x40] sm:$0xff]
      %v1014 = vld [vmem:[%s5 + $0x48] sm:$0xff]
      %v1015 = vld [vmem:[%s5 + $0x50] sm:$0xff]
      %v1016 = vld [vmem:[%s5 + $0x58] sm:$0xff]
      %v1017 = vld [vmem:[%s5 + $0x60] sm:$0xff]
      %v1018 = vld [vmem:[%s5 + $0x68] sm:$0xff]
      %v1019 = vld [vmem:[%s5 + $0x70] sm:$0xff]
      %v1020 = vld [vmem:[%s5 + $0x78] sm:$0xff]
      %v1021 = vld [vmem:[%s5 + $0x80] sm:$0xff]
      %v1022 = vld [vmem:[%s5 + $0x88] sm:$0xff]
      %v1023 = vld [vmem:[%s5 + $0x90] sm:$0xff]
      %v1024 = vld [vmem:[%s5 + $0x98] sm:$0xff]
      %v1025 = vld [vmem:[%s5 + $0xa0] sm:$0xff]
      %v1026 = vld [vmem:[%s5 + $0xa8] sm:$0xff]
      %v1027 = vld [vmem:[%s5 + $0xb0] sm:$0xff]
      %v1028 = vld [vmem:[%s5 + $0xb8] sm:$0xff]
      %v1029 = vld [vmem:[%s5 + $0xc0] sm:$0xff]
      %v1030 = vld [vmem:[%s5 + $0xc8] sm:$0xff]
      %v1031 = vld [vmem:[%s5 + $0xd0] sm:$0xff]
      %v1032 = vld [vmem:[%s5 + $0xd8] sm:$0xff]
      %v1033 = vld [vmem:[%s5 + $0xe0] sm:$0xff]
      %v1034 = vld [vmem:[%s5 + $0xe8] sm:$0xff]
      %v1035 = vld [vmem:[%s5 + $0xf0] sm:$0xff]
      %v1036 = vld [vmem:[%s5 + $0xf8] sm:$0xff]
      %s1037 = scalar_lea.vmem %s4, 8
      %v1038 = vld [vmem:[%s1037] sm:$0xff]
      %v1040 = vsel %vm961, %v1038, 0
      %1042 = vmatpush.msra.mxu0 0.0
      %1043 = vmatpush.msra.mxu0 0.0
      %1044 = vmatpush.msra.mxu0 0.0
      %1045 = vmatpush.msra.mxu0 0.0
      %1046 = vmatpush.msra.mxu0 0.0
      %1047 = vmatpush.msra.mxu0 0.0
      %1048 = vmatpush.msra.mxu0 0.0
      %1049 = vmatpush.msra.mxu0 0.0
      %1050 = vmatpush.msra.mxu0 0.0
      %1051 = vmatpush.msra.mxu0 0.0
      %1052 = vmatpush.msra.mxu0 0.0
      %1053 = vmatpush.msra.mxu0 0.0
      %1054 = vmatpush.msra.mxu0 0.0
      %1055 = vmatpush.msra.mxu0 0.0
      %1056 = vmatpush.msra.mxu0 %v958
      %1057 = vmatpush.msra.mxu0 %v956
      %1058 = vmatmul.f32.gmra.mxu0 %v1040
      %v1059 = vpop.f32.mrf.mxu0
      %v1060 = vadd.f32 0.0, %v1059
      %1061 = vdwg.mxu0
      %1062 = vmatpush.msra.mxu0 0.0
      %1063 = vmatpush.msra.mxu0 0.0
      %1064 = vmatpush.msra.mxu0 0.0
      %1065 = vmatpush.msra.mxu0 0.0
      %1066 = vmatpush.msra.mxu0 0.0
      %1067 = vmatpush.msra.mxu0 0.0
      %1068 = vmatpush.msra.mxu0 0.0
      %1069 = vmatpush.msra.mxu0 0.0
      %1070 = vmatpush.msra.mxu0 0.0
      %1071 = vmatpush.msra.mxu0 0.0
      %1072 = vmatpush.msra.mxu0 0.0
      %1073 = vmatpush.msra.mxu0 0.0
      %1074 = vmatpush.msra.mxu0 0.0
      %1075 = vmatpush.msra.mxu0 0.0
      %1076 = vmatpush.msra.mxu0 %v959
      %1077 = vmatpush.msra.mxu0 %v957
      %1078 = vmatmul.f32.gmra.mxu0 %v1040
      %v1079 = vpop.f32.mrf.mxu0
      %v1080 = vadd.f32 0.0, %v1079
      %1081 = vdwg.mxu0
      %s1082 = scalar_lea.vmem %s5, 256
      %v1083 = vld [vmem:[%s1082] sm:$0xff]
      %v1084 = vld [vmem:[%s1082 + $0x8] sm:$0xff]
      %v1085 = vld [vmem:[%s1082 + $0x10] sm:$0xff]
      %v1086 = vld [vmem:[%s1082 + $0x18] sm:$0xff]
      %v1087 = vld [vmem:[%s1082 + $0x20] sm:$0xff]
      %v1088 = vld [vmem:[%s1082 + $0x28] sm:$0xff]
      %v1089 = vld [vmem:[%s1082 + $0x30] sm:$0xff]
      %v1090 = vld [vmem:[%s1082 + $0x38] sm:$0xff]
      %v1091 = vld [vmem:[%s1082 + $0x40] sm:$0xff]
      %v1092 = vld [vmem:[%s1082 + $0x48] sm:$0xff]
      %v1093 = vld [vmem:[%s1082 + $0x50] sm:$0xff]
      %v1094 = vld [vmem:[%s1082 + $0x58] sm:$0xff]
      %v1095 = vld [vmem:[%s1082 + $0x60] sm:$0xff]
      %v1096 = vld [vmem:[%s1082 + $0x68] sm:$0xff]
      %v1097 = vld [vmem:[%s1082 + $0x70] sm:$0xff]
      %v1098 = vld [vmem:[%s1082 + $0x78] sm:$0xff]
      %v1099 = vld [vmem:[%s1082 + $0x80] sm:$0xff]
      %v1100 = vld [vmem:[%s1082 + $0x88] sm:$0xff]
      %v1101 = vld [vmem:[%s1082 + $0x90] sm:$0xff]
      %v1102 = vld [vmem:[%s1082 + $0x98] sm:$0xff]
      %v1103 = vld [vmem:[%s1082 + $0xa0] sm:$0xff]
      %v1104 = vld [vmem:[%s1082 + $0xa8] sm:$0xff]
      %v1105 = vld [vmem:[%s1082 + $0xb0] sm:$0xff]
      %v1106 = vld [vmem:[%s1082 + $0xb8] sm:$0xff]
      %v1107 = vld [vmem:[%s1082 + $0xc0] sm:$0xff]
      %v1108 = vld [vmem:[%s1082 + $0xc8] sm:$0xff]
      %v1109 = vld [vmem:[%s1082 + $0xd0] sm:$0xff]
      %v1110 = vld [vmem:[%s1082 + $0xd8] sm:$0xff]
      %v1111 = vld [vmem:[%s1082 + $0xe0] sm:$0xff]
      %v1112 = vld [vmem:[%s1082 + $0xe8] sm:$0xff]
      %v1113 = vld [vmem:[%s1082 + $0xf0] sm:$0xff]
      %v1114 = vld [vmem:[%s1082 + $0xf8] sm:$0xff]
      %1115 = vmatpush.msra.mxu0 %v1098
      %1116 = vmatpush.msra.mxu0 %v1097
      %1117 = vmatpush.msra.mxu0 %v1096
      %1118 = vmatpush.msra.mxu0 %v1095
      %1119 = vmatpush.msra.mxu0 %v1094
      %1120 = vmatpush.msra.mxu0 %v1093
      %1121 = vmatpush.msra.mxu0 %v1092
      %1122 = vmatpush.msra.mxu0 %v1091
      %1123 = vmatpush.msra.mxu0 %v1090
      %1124 = vmatpush.msra.mxu0 %v1089
      %1125 = vmatpush.msra.mxu0 %v1088
      %1126 = vmatpush.msra.mxu0 %v1087
      %1127 = vmatpush.msra.mxu0 %v1086
      %1128 = vmatpush.msra.mxu0 %v1085
      %1129 = vmatpush.msra.mxu0 %v1084
      %1130 = vmatpush.msra.mxu0 %v1083
      %1131 = vmatmul.f32.gmra.mxu0 %v1060
      %v1132 = vpop.f32.mrf.mxu0
      %v1133 = vadd.f32 0.0, %v1132
      %1134 = vdwg.mxu0
      %1135 = vmatpush.msra.mxu0 %v1114
      %1136 = vmatpush.msra.mxu0 %v1113
      %1137 = vmatpush.msra.mxu0 %v1112
      %1138 = vmatpush.msra.mxu0 %v1111
      %1139 = vmatpush.msra.mxu0 %v1110
      %1140 = vmatpush.msra.mxu0 %v1109
      %1141 = vmatpush.msra.mxu0 %v1108
      %1142 = vmatpush.msra.mxu0 %v1107
      %1143 = vmatpush.msra.mxu0 %v1106
      %1144 = vmatpush.msra.mxu0 %v1105
      %1145 = vmatpush.msra.mxu0 %v1104
      %1146 = vmatpush.msra.mxu0 %v1103
      %1147 = vmatpush.msra.mxu0 %v1102
      %1148 = vmatpush.msra.mxu0 %v1101
      %1149 = vmatpush.msra.mxu0 %v1100
      %1150 = vmatpush.msra.mxu0 %v1099
      %1151 = vmatmul.f32.gmra.mxu0 %v1080
      %v1152 = vpop.f32.mrf.mxu0
      %v1153 = vadd.f32 %v1133, %v1152
      %1154 = vdwg.mxu0
      %1155 = vmatpush.msra.mxu0 %v1020
      %1156 = vmatpush.msra.mxu0 %v1019
      %1157 = vmatpush.msra.mxu0 %v1018
      %1158 = vmatpush.msra.mxu0 %v1017
      %1159 = vmatpush.msra.mxu0 %v1016
      %1160 = vmatpush.msra.mxu0 %v1015
      %1161 = vmatpush.msra.mxu0 %v1014
      %1162 = vmatpush.msra.mxu0 %v1013
      %1163 = vmatpush.msra.mxu0 %v1012
      %1164 = vmatpush.msra.mxu0 %v1011
      %1165 = vmatpush.msra.mxu0 %v1010
      %1166 = vmatpush.msra.mxu0 %v1009
      %1167 = vmatpush.msra.mxu0 %v1008
      %1168 = vmatpush.msra.mxu0 %v1007
      %1169 = vmatpush.msra.mxu0 %v1006
      %1170 = vmatpush.msra.mxu0 %v1005
      %1171 = vmatmul.f32.gmra.mxu0 %v983
      %v1172 = vpop.f32.mrf.mxu0
      %v1173 = vadd.f32 %v1153, %v1172
      %1174 = vdwg.mxu0
      %1175 = vmatpush.msra.mxu0 %v1036
      %1176 = vmatpush.msra.mxu0 %v1035
      %1177 = vmatpush.msra.mxu0 %v1034
      %1178 = vmatpush.msra.mxu0 %v1033
      %1179 = vmatpush.msra.mxu0 %v1032
      %1180 = vmatpush.msra.mxu0 %v1031
      %1181 = vmatpush.msra.mxu0 %v1030
      %1182 = vmatpush.msra.mxu0 %v1029
      %1183 = vmatpush.msra.mxu0 %v1028
      %1184 = vmatpush.msra.mxu0 %v1027
      %1185 = vmatpush.msra.mxu0 %v1026
      %1186 = vmatpush.msra.mxu0 %v1025
      %1187 = vmatpush.msra.mxu0 %v1024
      %1188 = vmatpush.msra.mxu0 %v1023
      %1189 = vmatpush.msra.mxu0 %v1022
      %1190 = vmatpush.msra.mxu0 %v1021
      %1191 = vmatmul.f32.gmra.mxu0 %v1003
      %v1192 = vpop.f32.mrf.mxu0
      %v1193 = vadd.f32 %v1173, %v1192
      %1194 = vdwg.mxu0
      %s1195 = scalar_lea.vmem %s4, 16
      %v1196 = vld [vmem:[%s1195] sm:$0xff]
      %v1198 = vsel %vm961, %v1196, 0
      %1200 = vmatpush.msra.mxu0 0.0
      %1201 = vmatpush.msra.mxu0 0.0
      %1202 = vmatpush.msra.mxu0 0.0
      %1203 = vmatpush.msra.mxu0 0.0
      %1204 = vmatpush.msra.mxu0 0.0
      %1205 = vmatpush.msra.mxu0 0.0
      %1206 = vmatpush.msra.mxu0 0.0
      %1207 = vmatpush.msra.mxu0 0.0
      %1208 = vmatpush.msra.mxu0 0.0
      %1209 = vmatpush.msra.mxu0 0.0
      %1210 = vmatpush.msra.mxu0 0.0
      %1211 = vmatpush.msra.mxu0 0.0
      %1212 = vmatpush.msra.mxu0 0.0
      %1213 = vmatpush.msra.mxu0 0.0
      %1214 = vmatpush.msra.mxu0 %v958
      %1215 = vmatpush.msra.mxu0 %v956
      %1216 = vmatmul.f32.gmra.mxu0 %v1198
      %v1217 = vpop.f32.mrf.mxu0
      %v1218 = vadd.f32 0.0, %v1217
      %1219 = vdwg.mxu0
      %1220 = vmatpush.msra.mxu0 0.0
      %1221 = vmatpush.msra.mxu0 0.0
      %1222 = vmatpush.msra.mxu0 0.0
      %1223 = vmatpush.msra.mxu0 0.0
      %1224 = vmatpush.msra.mxu0 0.0
      %1225 = vmatpush.msra.mxu0 0.0
      %1226 = vmatpush.msra.mxu0 0.0
      %1227 = vmatpush.msra.mxu0 0.0
      %1228 = vmatpush.msra.mxu0 0.0
      %1229 = vmatpush.msra.mxu0 0.0
      %1230 = vmatpush.msra.mxu0 0.0
      %1231 = vmatpush.msra.mxu0 0.0
      %1232 = vmatpush.msra.mxu0 0.0
      %1233 = vmatpush.msra.mxu0 0.0
      %1234 = vmatpush.msra.mxu0 %v959
      %1235 = vmatpush.msra.mxu0 %v957
      %1236 = vmatmul.f32.gmra.mxu0 %v1198
      %v1237 = vpop.f32.mrf.mxu0
      %v1238 = vadd.f32 0.0, %v1237
      %1239 = vdwg.mxu0
      %s1240 = scalar_lea.vmem %s5, 512
      %v1241 = vld [vmem:[%s1240] sm:$0xff]
      %v1242 = vld [vmem:[%s1240 + $0x8] sm:$0xff]
      %v1243 = vld [vmem:[%s1240 + $0x10] sm:$0xff]
      %v1244 = vld [vmem:[%s1240 + $0x18] sm:$0xff]
      %v1245 = vld [vmem:[%s1240 + $0x20] sm:$0xff]
      %v1246 = vld [vmem:[%s1240 + $0x28] sm:$0xff]
      %v1247 = vld [vmem:[%s1240 + $0x30] sm:$0xff]
      %v1248 = vld [vmem:[%s1240 + $0x38] sm:$0xff]
      %v1249 = vld [vmem:[%s1240 + $0x40] sm:$0xff]
      %v1250 = vld [vmem:[%s1240 + $0x48] sm:$0xff]
      %v1251 = vld [vmem:[%s1240 + $0x50] sm:$0xff]
      %v1252 = vld [vmem:[%s1240 + $0x58] sm:$0xff]
      %v1253 = vld [vmem:[%s1240 + $0x60] sm:$0xff]
      %v1254 = vld [vmem:[%s1240 + $0x68] sm:$0xff]
      %v1255 = vld [vmem:[%s1240 + $0x70] sm:$0xff]
      %v1256 = vld [vmem:[%s1240 + $0x78] sm:$0xff]
      %v1257 = vld [vmem:[%s1240 + $0x80] sm:$0xff]
      %v1258 = vld [vmem:[%s1240 + $0x88] sm:$0xff]
      %v1259 = vld [vmem:[%s1240 + $0x90] sm:$0xff]
      %v1260 = vld [vmem:[%s1240 + $0x98] sm:$0xff]
      %v1261 = vld [vmem:[%s1240 + $0xa0] sm:$0xff]
      %v1262 = vld [vmem:[%s1240 + $0xa8] sm:$0xff]
      %v1263 = vld [vmem:[%s1240 + $0xb0] sm:$0xff]
      %v1264 = vld [vmem:[%s1240 + $0xb8] sm:$0xff]
      %v1265 = vld [vmem:[%s1240 + $0xc0] sm:$0xff]
      %v1266 = vld [vmem:[%s1240 + $0xc8] sm:$0xff]
      %v1267 = vld [vmem:[%s1240 + $0xd0] sm:$0xff]
      %v1268 = vld [vmem:[%s1240 + $0xd8] sm:$0xff]
      %v1269 = vld [vmem:[%s1240 + $0xe0] sm:$0xff]
      %v1270 = vld [vmem:[%s1240 + $0xe8] sm:$0xff]
      %v1271 = vld [vmem:[%s1240 + $0xf0] sm:$0xff]
      %v1272 = vld [vmem:[%s1240 + $0xf8] sm:$0xff]
      %1273 = vmatpush.msra.mxu0 %v1256
      %1274 = vmatpush.msra.mxu0 %v1255
      %1275 = vmatpush.msra.mxu0 %v1254
      %1276 = vmatpush.msra.mxu0 %v1253
      %1277 = vmatpush.msra.mxu0 %v1252
      %1278 = vmatpush.msra.mxu0 %v1251
      %1279 = vmatpush.msra.mxu0 %v1250
      %1280 = vmatpush.msra.mxu0 %v1249
      %1281 = vmatpush.msra.mxu0 %v1248
      %1282 = vmatpush.msra.mxu0 %v1247
      %1283 = vmatpush.msra.mxu0 %v1246
      %1284 = vmatpush.msra.mxu0 %v1245
      %1285 = vmatpush.msra.mxu0 %v1244
      %1286 = vmatpush.msra.mxu0 %v1243
      %1287 = vmatpush.msra.mxu0 %v1242
      %1288 = vmatpush.msra.mxu0 %v1241
      %1289 = vmatmul.f32.gmra.mxu0 %v1218
      %v1290 = vpop.f32.mrf.mxu0
      %v1291 = vadd.f32 0.0, %v1290
      %1292 = vdwg.mxu0
      %1293 = vmatpush.msra.mxu0 %v1272
      %1294 = vmatpush.msra.mxu0 %v1271
      %1295 = vmatpush.msra.mxu0 %v1270
      %1296 = vmatpush.msra.mxu0 %v1269
      %1297 = vmatpush.msra.mxu0 %v1268
      %1298 = vmatpush.msra.mxu0 %v1267
      %1299 = vmatpush.msra.mxu0 %v1266
      %1300 = vmatpush.msra.mxu0 %v1265
      %1301 = vmatpush.msra.mxu0 %v1264
      %1302 = vmatpush.msra.mxu0 %v1263
      %1303 = vmatpush.msra.mxu0 %v1262
      %1304 = vmatpush.msra.mxu0 %v1261
      %1305 = vmatpush.msra.mxu0 %v1260
      %1306 = vmatpush.msra.mxu0 %v1259
      %1307 = vmatpush.msra.mxu0 %v1258
      %1308 = vmatpush.msra.mxu0 %v1257
      %1309 = vmatmul.f32.gmra.mxu0 %v1238
      %v1310 = vpop.f32.mrf.mxu0
      %v1311 = vadd.f32 %v1291, %v1310
      %1312 = vdwg.mxu0
      %v1313 = vadd.f32 %v1193, %v1311
      %s1314 = scalar_lea.vmem %s4, 24
      %v1315 = vld [vmem:[%s1314] sm:$0xff]
      %v1317 = vsel %vm961, %v1315, 0
      %1319 = vmatpush.msra.mxu0 0.0
      %1320 = vmatpush.msra.mxu0 0.0
      %1321 = vmatpush.msra.mxu0 0.0
      %1322 = vmatpush.msra.mxu0 0.0
      %1323 = vmatpush.msra.mxu0 0.0
      %1324 = vmatpush.msra.mxu0 0.0
      %1325 = vmatpush.msra.mxu0 0.0
      %1326 = vmatpush.msra.mxu0 0.0
      %1327 = vmatpush.msra.mxu0 0.0
      %1328 = vmatpush.msra.mxu0 0.0
      %1329 = vmatpush.msra.mxu0 0.0
      %1330 = vmatpush.msra.mxu0 0.0
      %1331 = vmatpush.msra.mxu0 0.0
      %1332 = vmatpush.msra.mxu0 0.0
      %1333 = vmatpush.msra.mxu0 %v958
      %1334 = vmatpush.msra.mxu0 %v956
      %1335 = vmatmul.f32.gmra.mxu0 %v1317
      %v1336 = vpop.f32.mrf.mxu0
      %v1337 = vadd.f32 0.0, %v1336
      %1338 = vdwg.mxu0
      %1339 = vmatpush.msra.mxu0 0.0
      %1340 = vmatpush.msra.mxu0 0.0
      %1341 = vmatpush.msra.mxu0 0.0
      %1342 = vmatpush.msra.mxu0 0.0
      %1343 = vmatpush.msra.mxu0 0.0
      %1344 = vmatpush.msra.mxu0 0.0
      %1345 = vmatpush.msra.mxu0 0.0
      %1346 = vmatpush.msra.mxu0 0.0
      %1347 = vmatpush.msra.mxu0 0.0
      %1348 = vmatpush.msra.mxu0 0.0
      %1349 = vmatpush.msra.mxu0 0.0
      %1350 = vmatpush.msra.mxu0 0.0
      %1351 = vmatpush.msra.mxu0 0.0
      %1352 = vmatpush.msra.mxu0 0.0
      %1353 = vmatpush.msra.mxu0 %v959
      %1354 = vmatpush.msra.mxu0 %v957
      %1355 = vmatmul.f32.gmra.mxu0 %v1317
      %v1356 = vpop.f32.mrf.mxu0
      %v1357 = vadd.f32 0.0, %v1356
      %1358 = vdwg.mxu0
      %s1359 = scalar_lea.vmem %s5, 768
      %v1360 = vld [vmem:[%s1359] sm:$0xff]
      %v1361 = vld [vmem:[%s1359 + $0x8] sm:$0xff]
      %v1362 = vld [vmem:[%s1359 + $0x10] sm:$0xff]
      %v1363 = vld [vmem:[%s1359 + $0x18] sm:$0xff]
      %v1364 = vld [vmem:[%s1359 + $0x20] sm:$0xff]
      %v1365 = vld [vmem:[%s1359 + $0x28] sm:$0xff]
      %v1366 = vld [vmem:[%s1359 + $0x30] sm:$0xff]
      %v1367 = vld [vmem:[%s1359 + $0x38] sm:$0xff]
      %v1368 = vld [vmem:[%s1359 + $0x40] sm:$0xff]
      %v1369 = vld [vmem:[%s1359 + $0x48] sm:$0xff]
      %v1370 = vld [vmem:[%s1359 + $0x50] sm:$0xff]
      %v1371 = vld [vmem:[%s1359 + $0x58] sm:$0xff]
      %v1372 = vld [vmem:[%s1359 + $0x60] sm:$0xff]
      %v1373 = vld [vmem:[%s1359 + $0x68] sm:$0xff]
      %v1374 = vld [vmem:[%s1359 + $0x70] sm:$0xff]
      %v1375 = vld [vmem:[%s1359 + $0x78] sm:$0xff]
      %v1376 = vld [vmem:[%s1359 + $0x80] sm:$0xff]
      %v1377 = vld [vmem:[%s1359 + $0x88] sm:$0xff]
      %v1378 = vld [vmem:[%s1359 + $0x90] sm:$0xff]
      %v1379 = vld [vmem:[%s1359 + $0x98] sm:$0xff]
      %v1380 = vld [vmem:[%s1359 + $0xa0] sm:$0xff]
      %v1381 = vld [vmem:[%s1359 + $0xa8] sm:$0xff]
      %v1382 = vld [vmem:[%s1359 + $0xb0] sm:$0xff]
      %v1383 = vld [vmem:[%s1359 + $0xb8] sm:$0xff]
      %v1384 = vld [vmem:[%s1359 + $0xc0] sm:$0xff]
      %v1385 = vld [vmem:[%s1359 + $0xc8] sm:$0xff]
      %v1386 = vld [vmem:[%s1359 + $0xd0] sm:$0xff]
      %v1387 = vld [vmem:[%s1359 + $0xd8] sm:$0xff]
      %v1388 = vld [vmem:[%s1359 + $0xe0] sm:$0xff]
      %v1389 = vld [vmem:[%s1359 + $0xe8] sm:$0xff]
      %v1390 = vld [vmem:[%s1359 + $0xf0] sm:$0xff]
      %v1391 = vld [vmem:[%s1359 + $0xf8] sm:$0xff]
      %1392 = vmatpush.msra.mxu0 %v1375
      %1393 = vmatpush.msra.mxu0 %v1374
      %1394 = vmatpush.msra.mxu0 %v1373
      %1395 = vmatpush.msra.mxu0 %v1372
      %1396 = vmatpush.msra.mxu0 %v1371
      %1397 = vmatpush.msra.mxu0 %v1370
      %1398 = vmatpush.msra.mxu0 %v1369
      %1399 = vmatpush.msra.mxu0 %v1368
      %1400 = vmatpush.msra.mxu0 %v1367
      %1401 = vmatpush.msra.mxu0 %v1366
      %1402 = vmatpush.msra.mxu0 %v1365
      %1403 = vmatpush.msra.mxu0 %v1364
      %1404 = vmatpush.msra.mxu0 %v1363
      %1405 = vmatpush.msra.mxu0 %v1362
      %1406 = vmatpush.msra.mxu0 %v1361
      %1407 = vmatpush.msra.mxu0 %v1360
      %1408 = vmatmul.f32.gmra.mxu0 %v1337
      %v1409 = vpop.f32.mrf.mxu0
      %v1410 = vadd.f32 0.0, %v1409
      %1411 = vdwg.mxu0
      %1412 = vmatpush.msra.mxu0 %v1391
      %1413 = vmatpush.msra.mxu0 %v1390
      %1414 = vmatpush.msra.mxu0 %v1389
      %1415 = vmatpush.msra.mxu0 %v1388
      %1416 = vmatpush.msra.mxu0 %v1387
      %1417 = vmatpush.msra.mxu0 %v1386
      %1418 = vmatpush.msra.mxu0 %v1385
      %1419 = vmatpush.msra.mxu0 %v1384
      %1420 = vmatpush.msra.mxu0 %v1383
      %1421 = vmatpush.msra.mxu0 %v1382
      %1422 = vmatpush.msra.mxu0 %v1381
      %1423 = vmatpush.msra.mxu0 %v1380
      %1424 = vmatpush.msra.mxu0 %v1379
      %1425 = vmatpush.msra.mxu0 %v1378
      %1426 = vmatpush.msra.mxu0 %v1377
      %1427 = vmatpush.msra.mxu0 %v1376
      %1428 = vmatmul.f32.gmra.mxu0 %v1357
      %v1429 = vpop.f32.mrf.mxu0
      %v1430 = vadd.f32 %v1410, %v1429
      %1431 = vdwg.mxu0
      %v1432 = vadd.f32 %v1313, %v1430
      %v1433 = vld [vmem:[%s6] sm:$0x1]
      %v1435 = vperm.slane %v1433, 0
      %v1437 = vadd.f32 %v1432, %v1435
      %v1438 = vmax.f32 %v1437, 0.0
      %v1439 = vld [vmem:[%s7] sm:$0xf]
      %vm1440 = vcmask 64512
      %v1442 = vsel %vm1440, %v1439, 0
      %1444 = vmatpush.msra.mxu0 0.0
      %1445 = vmatpush.msra.mxu0 0.0
      %1446 = vmatpush.msra.mxu0 0.0
      %1447 = vmatpush.msra.mxu0 0.0
      %1448 = vmatpush.msra.mxu0 0.0
      %1449 = vmatpush.msra.mxu0 0.0
      %1450 = vmatpush.msra.mxu0 0.0
      %1451 = vmatpush.msra.mxu0 0.0
      %1452 = vmatpush.msra.mxu0 0.0
      %1453 = vmatpush.msra.mxu0 0.0
      %1454 = vmatpush.msra.mxu0 0.0
      %1455 = vmatpush.msra.mxu0 0.0
      %1456 = vmatpush.msra.mxu0 0.0
      %1457 = vmatpush.msra.mxu0 0.0
      %1458 = vmatpush.msra.mxu0 0.0
      %1459 = vmatpush.msra.mxu0 %v1438
      %1460 = vmatmul.f32.gmra.mxu0 %v1442
      %v1461 = vpop.f32.mrf.mxu0
      %v1462 = vadd.f32 0.0, %v1461
      %1463 = vdwg.mxu0
      %v1464 = vld [vmem:[%s8] sm:$0xff]
      %v1465 = vld [vmem:[%s8 + $0x8] sm:$0xff]
      %v1466 = vld [vmem:[%s8 + $0x10] sm:$0xff]
      %v1467 = vld [vmem:[%s8 + $0x18] sm:$0xff]
      %v1469 = vsel %vm504, %v1462, 0
      %1471 = vmatpush.msra.mxu0 0.0
      %1472 = vmatpush.msra.mxu0 0.0
      %1473 = vmatpush.msra.mxu0 0.0
      %1474 = vmatpush.msra.mxu0 0.0
      %1475 = vmatpush.msra.mxu0 0.0
      %1476 = vmatpush.msra.mxu0 0.0
      %1477 = vmatpush.msra.mxu0 0.0
      %1478 = vmatpush.msra.mxu0 0.0
      %1479 = vmatpush.msra.mxu0 0.0
      %1480 = vmatpush.msra.mxu0 0.0
      %1481 = vmatpush.msra.mxu0 0.0
      %1482 = vmatpush.msra.mxu0 0.0
      %1483 = vmatpush.msra.mxu0 %v1467
      %1484 = vmatpush.msra.mxu0 %v1466
      %1485 = vmatpush.msra.mxu0 %v1465
      %1486 = vmatpush.msra.mxu0 %v1464
      %1487 = vmatmul.f32.gmra.mxu0 %v1469
      %v1488 = vpop.f32.mrf.mxu0
      %v1489 = vadd.f32 0.0, %v1488
      %1490 = vdwg.mxu0
      %s1491 = scalar_lea.vmem %s8, 32
      %v1492 = vld [vmem:[%s1491] sm:$0xff]
      %v1493 = vld [vmem:[%s1491 + $0x8] sm:$0xff]
      %v1494 = vld [vmem:[%s1491 + $0x10] sm:$0xff]
      %v1495 = vld [vmem:[%s1491 + $0x18] sm:$0xff]
      %1496 = vmatpush.msra.mxu0 0.0
      %1497 = vmatpush.msra.mxu0 0.0
      %1498 = vmatpush.msra.mxu0 0.0
      %1499 = vmatpush.msra.mxu0 0.0
      %1500 = vmatpush.msra.mxu0 0.0
      %1501 = vmatpush.msra.mxu0 0.0
      %1502 = vmatpush.msra.mxu0 0.0
      %1503 = vmatpush.msra.mxu0 0.0
      %1504 = vmatpush.msra.mxu0 0.0
      %1505 = vmatpush.msra.mxu0 0.0
      %1506 = vmatpush.msra.mxu0 0.0
      %1507 = vmatpush.msra.mxu0 0.0
      %1508 = vmatpush.msra.mxu0 %v1495
      %1509 = vmatpush.msra.mxu0 %v1494
      %1510 = vmatpush.msra.mxu0 %v1493
      %1511 = vmatpush.msra.mxu0 %v1492
      %1512 = vmatmul.f32.gmra.mxu0 %v1469
      %v1513 = vpop.f32.mrf.mxu0
      %v1514 = vadd.f32 0.0, %v1513
      %1515 = vdwg.mxu0
      %v1516 = vmax.f32 %v1489, %v1514
      %s1517 = scalar_lea.vmem %s7, 4
      %v1518 = vld [vmem:[%s1517] sm:$0xf]
      %v1520 = vsel %vm1440, %v1518, 0
      %1522 = vmatpush.msra.mxu0 0.0
      %1523 = vmatpush.msra.mxu0 0.0
      %1524 = vmatpush.msra.mxu0 0.0
      %1525 = vmatpush.msra.mxu0 0.0
      %1526 = vmatpush.msra.mxu0 0.0
      %1527 = vmatpush.msra.mxu0 0.0
      %1528 = vmatpush.msra.mxu0 0.0
      %1529 = vmatpush.msra.mxu0 0.0
      %1530 = vmatpush.msra.mxu0 0.0
      %1531 = vmatpush.msra.mxu0 0.0
      %1532 = vmatpush.msra.mxu0 0.0
      %1533 = vmatpush.msra.mxu0 0.0
      %1534 = vmatpush.msra.mxu0 0.0
      %1535 = vmatpush.msra.mxu0 0.0
      %1536 = vmatpush.msra.mxu0 0.0
      %1537 = vmatpush.msra.mxu0 %v1438
      %1538 = vmatmul.f32.gmra.mxu0 %v1520
      %v1539 = vpop.f32.mrf.mxu0
      %v1540 = vadd.f32 0.0, %v1539
      %1541 = vdwg.mxu0
      %v1543 = vsel %vm504, %v1540, 0
      %1545 = vmatpush.msra.mxu0 0.0
      %1546 = vmatpush.msra.mxu0 0.0
      %1547 = vmatpush.msra.mxu0 0.0
      %1548 = vmatpush.msra.mxu0 0.0
      %1549 = vmatpush.msra.mxu0 0.0
      %1550 = vmatpush.msra.mxu0 0.0
      %1551 = vmatpush.msra.mxu0 0.0
      %1552 = vmatpush.msra.mxu0 0.0
      %1553 = vmatpush.msra.mxu0 0.0
      %1554 = vmatpush.msra.mxu0 0.0
      %1555 = vmatpush.msra.mxu0 0.0
      %1556 = vmatpush.msra.mxu0 0.0
      %1557 = vmatpush.msra.mxu0 %v1467
      %1558 = vmatpush.msra.mxu0 %v1466
      %1559 = vmatpush.msra.mxu0 %v1465
      %1560 = vmatpush.msra.mxu0 %v1464
      %1561 = vmatmul.f32.gmra.mxu0 %v1543
      %v1562 = vpop.f32.mrf.mxu0
      %v1563 = vadd.f32 0.0, %v1562
      %1564 = vdwg.mxu0
      %v1565 = vmax.f32 %v1516, %v1563
      %1566 = vmatpush.msra.mxu0 0.0
      %1567 = vmatpush.msra.mxu0 0.0
      %1568 = vmatpush.msra.mxu0 0.0
      %1569 = vmatpush.msra.mxu0 0.0
      %1570 = vmatpush.msra.mxu0 0.0
      %1571 = vmatpush.msra.mxu0 0.0
      %1572 = vmatpush.msra.mxu0 0.0
      %1573 = vmatpush.msra.mxu0 0.0
      %1574 = vmatpush.msra.mxu0 0.0
      %1575 = vmatpush.msra.mxu0 0.0
      %1576 = vmatpush.msra.mxu0 0.0
      %1577 = vmatpush.msra.mxu0 0.0
      %1578 = vmatpush.msra.mxu0 %v1495
      %1579 = vmatpush.msra.mxu0 %v1494
      %1580 = vmatpush.msra.mxu0 %v1493
      %1581 = vmatpush.msra.mxu0 %v1492
      %1582 = vmatmul.f32.gmra.mxu0 %v1543
      %v1583 = vpop.f32.mrf.mxu0
      %v1584 = vadd.f32 0.0, %v1583
      %1585 = vdwg.mxu0
      %v1586 = vmax.f32 %v1565, %v1584
      %v1587 = vld [vmem:[%s9] sm:$0xff]
      %v1588 = vld [vmem:[%s9 + $0x8] sm:$0xff]
      %vm1589 = vcmask 31744
      %v1591 = vsel %vm1589, %v1587, 0
      %v1594 = vsel %vm1589, %v1588, 0
      %vm1596 = vcmask 1043456
      %v1598 = vsel %vm1596, %v1586, 0
      %1600 = vmatpush.msra.mxu0 0.0
      %1601 = vmatpush.msra.mxu0 0.0
      %1602 = vmatpush.msra.mxu0 0.0
      %1603 = vmatpush.msra.mxu0 0.0
      %1604 = vmatpush.msra.mxu0 0.0
      %1605 = vmatpush.msra.mxu0 0.0
      %1606 = vmatpush.msra.mxu0 0.0
      %1607 = vmatpush.msra.mxu0 0.0
      %1608 = vmatpush.msra.mxu0 0.0
      %1609 = vmatpush.msra.mxu0 0.0
      %1610 = vmatpush.msra.mxu0 0.0
      %1611 = vmatpush.msra.mxu0 0.0
      %1612 = vmatpush.msra.mxu0 0.0
      %1613 = vmatpush.msra.mxu0 0.0
      %1614 = vmatpush.msra.mxu0 0.0
      %1615 = vmatpush.msra.mxu0 %v1598
      %1616 = vmatmul.f32.gmra.mxu0 %v1591
      %v1617 = vpop.f32.mrf.mxu0
      %v1618 = vadd.f32 0.0, %v1617
      %1619 = vmatmul.f32.gmra.mxu0 %v1594
      %v1620 = vpop.f32.mrf.mxu0
      %v1621 = vadd.f32 0.0, %v1620
      %1622 = vdwg.mxu0
      %v1623 = vld [vmem:[%s10] sm:$0xff]
      %v1624 = vld [vmem:[%s10 + $0x8] sm:$0xff]
      %v1625 = vld [vmem:[%s10 + $0x10] sm:$0xff]
      %v1626 = vld [vmem:[%s10 + $0x18] sm:$0xff]
      %s1627 = scalar_lea.vmem %s9, 16
      %v1628 = vld [vmem:[%s1627] sm:$0xff]
      %v1629 = vld [vmem:[%s1627 + $0x8] sm:$0xff]
      %v1631 = vsel %vm1589, %v1628, 0
      %v1634 = vsel %vm1589, %v1629, 0
      %1636 = vmatpush.msra.mxu0 0.0
      %1637 = vmatpush.msra.mxu0 0.0
      %1638 = vmatpush.msra.mxu0 0.0
      %1639 = vmatpush.msra.mxu0 0.0
      %1640 = vmatpush.msra.mxu0 0.0
      %1641 = vmatpush.msra.mxu0 0.0
      %1642 = vmatpush.msra.mxu0 0.0
      %1643 = vmatpush.msra.mxu0 0.0
      %1644 = vmatpush.msra.mxu0 0.0
      %1645 = vmatpush.msra.mxu0 0.0
      %1646 = vmatpush.msra.mxu0 0.0
      %1647 = vmatpush.msra.mxu0 0.0
      %1648 = vmatpush.msra.mxu0 0.0
      %1649 = vmatpush.msra.mxu0 0.0
      %1650 = vmatpush.msra.mxu0 0.0
      %1651 = vmatpush.msra.mxu0 %v1598
      %1652 = vmatmul.f32.gmra.mxu0 %v1631
      %v1653 = vpop.f32.mrf.mxu0
      %v1654 = vadd.f32 0.0, %v1653
      %1655 = vmatmul.f32.gmra.mxu0 %v1634
      %v1656 = vpop.f32.mrf.mxu0
      %v1657 = vadd.f32 0.0, %v1656
      %1658 = vdwg.mxu0
      %s1659 = scalar_lea.vmem %s10, 32
      %v1660 = vld [vmem:[%s1659] sm:$0xff]
      %v1661 = vld [vmem:[%s1659 + $0x8] sm:$0xff]
      %v1662 = vld [vmem:[%s1659 + $0x10] sm:$0xff]
      %v1663 = vld [vmem:[%s1659 + $0x18] sm:$0xff]
      %v1665 = vsel %vm961, %v1654, 0
      %v1668 = vsel %vm961, %v1657, 0
      %1670 = vmatpush.msra.mxu0 0.0
      %1671 = vmatpush.msra.mxu0 0.0
      %1672 = vmatpush.msra.mxu0 0.0
      %1673 = vmatpush.msra.mxu0 0.0
      %1674 = vmatpush.msra.mxu0 0.0
      %1675 = vmatpush.msra.mxu0 0.0
      %1676 = vmatpush.msra.mxu0 0.0
      %1677 = vmatpush.msra.mxu0 0.0
      %1678 = vmatpush.msra.mxu0 0.0
      %1679 = vmatpush.msra.mxu0 0.0
      %1680 = vmatpush.msra.mxu0 0.0
      %1681 = vmatpush.msra.mxu0 0.0
      %1682 = vmatpush.msra.mxu0 0.0
      %1683 = vmatpush.msra.mxu0 0.0
      %1684 = vmatpush.msra.mxu0 %v1662
      %1685 = vmatpush.msra.mxu0 %v1660
      %1686 = vmatmul.f32.gmra.mxu0 %v1665
      %v1687 = vpop.f32.mrf.mxu0
      %v1688 = vadd.f32 0.0, %v1687
      %1689 = vmatmul.f32.gmra.mxu0 %v1668
      %v1690 = vpop.f32.mrf.mxu0
      %v1691 = vadd.f32 0.0, %v1690
      %1692 = vdwg.mxu0
      %1693 = vmatpush.msra.mxu0 0.0
      %1694 = vmatpush.msra.mxu0 0.0
      %1695 = vmatpush.msra.mxu0 0.0
      %1696 = vmatpush.msra.mxu0 0.0
      %1697 = vmatpush.msra.mxu0 0.0
      %1698 = vmatpush.msra.mxu0 0.0
      %1699 = vmatpush.msra.mxu0 0.0
      %1700 = vmatpush.msra.mxu0 0.0
      %1701 = vmatpush.msra.mxu0 0.0
      %1702 = vmatpush.msra.mxu0 0.0
      %1703 = vmatpush.msra.mxu0 0.0
      %1704 = vmatpush.msra.mxu0 0.0
      %1705 = vmatpush.msra.mxu0 0.0
      %1706 = vmatpush.msra.mxu0 0.0
      %1707 = vmatpush.msra.mxu0 %v1663
      %1708 = vmatpush.msra.mxu0 %v1661
      %1709 = vmatmul.f32.gmra.mxu0 %v1665
      %v1710 = vpop.f32.mrf.mxu0
      %v1711 = vadd.f32 0.0, %v1710
      %1712 = vmatmul.f32.gmra.mxu0 %v1668
      %v1713 = vpop.f32.mrf.mxu0
      %v1714 = vadd.f32 0.0, %v1713
      %1715 = vdwg.mxu0
      %v1717 = vsel %vm961, %v1618, 0
      %v1720 = vsel %vm961, %v1621, 0
      %1722 = vmatpush.msra.mxu0 0.0
      %1723 = vmatpush.msra.mxu0 0.0
      %1724 = vmatpush.msra.mxu0 0.0
      %1725 = vmatpush.msra.mxu0 0.0
      %1726 = vmatpush.msra.mxu0 0.0
      %1727 = vmatpush.msra.mxu0 0.0
      %1728 = vmatpush.msra.mxu0 0.0
      %1729 = vmatpush.msra.mxu0 0.0
      %1730 = vmatpush.msra.mxu0 0.0
      %1731 = vmatpush.msra.mxu0 0.0
      %1732 = vmatpush.msra.mxu0 0.0
      %1733 = vmatpush.msra.mxu0 0.0
      %1734 = vmatpush.msra.mxu0 0.0
      %1735 = vmatpush.msra.mxu0 0.0
      %1736 = vmatpush.msra.mxu0 %v1625
      %1737 = vmatpush.msra.mxu0 %v1623
      %1738 = vmatmul.f32.gmra.mxu0 %v1717
      %v1739 = vpop.f32.mrf.mxu0
      %v1740 = vadd.f32 %v1688, %v1739
      %1741 = vmatmul.f32.gmra.mxu0 %v1720
      %v1742 = vpop.f32.mrf.mxu0
      %v1743 = vadd.f32 %v1691, %v1742
      %1744 = vdwg.mxu0
      %1745 = vmatpush.msra.mxu0 0.0
      %1746 = vmatpush.msra.mxu0 0.0
      %1747 = vmatpush.msra.mxu0 0.0
      %1748 = vmatpush.msra.mxu0 0.0
      %1749 = vmatpush.msra.mxu0 0.0
      %1750 = vmatpush.msra.mxu0 0.0
      %1751 = vmatpush.msra.mxu0 0.0
      %1752 = vmatpush.msra.mxu0 0.0
      %1753 = vmatpush.msra.mxu0 0.0
      %1754 = vmatpush.msra.mxu0 0.0
      %1755 = vmatpush.msra.mxu0 0.0
      %1756 = vmatpush.msra.mxu0 0.0
      %1757 = vmatpush.msra.mxu0 0.0
      %1758 = vmatpush.msra.mxu0 0.0
      %1759 = vmatpush.msra.mxu0 %v1626
      %1760 = vmatpush.msra.mxu0 %v1624
      %1761 = vmatmul.f32.gmra.mxu0 %v1717
      %v1762 = vpop.f32.mrf.mxu0
      %v1763 = vadd.f32 %v1711, %v1762
      %1764 = vmatmul.f32.gmra.mxu0 %v1720
      %v1765 = vpop.f32.mrf.mxu0
      %v1766 = vadd.f32 %v1714, %v1765
      %1767 = vdwg.mxu0
      %s1768 = scalar_lea.vmem %s9, 32
      %v1769 = vld [vmem:[%s1768] sm:$0xff]
      %v1770 = vld [vmem:[%s1768 + $0x8] sm:$0xff]
      %v1772 = vsel %vm1589, %v1769, 0
      %v1775 = vsel %vm1589, %v1770, 0
      %1777 = vmatpush.msra.mxu0 0.0
      %1778 = vmatpush.msra.mxu0 0.0
      %1779 = vmatpush.msra.mxu0 0.0
      %1780 = vmatpush.msra.mxu0 0.0
      %1781 = vmatpush.msra.mxu0 0.0
      %1782 = vmatpush.msra.mxu0 0.0
      %1783 = vmatpush.msra.mxu0 0.0
      %1784 = vmatpush.msra.mxu0 0.0
      %1785 = vmatpush.msra.mxu0 0.0
      %1786 = vmatpush.msra.mxu0 0.0
      %1787 = vmatpush.msra.mxu0 0.0
      %1788 = vmatpush.msra.mxu0 0.0
      %1789 = vmatpush.msra.mxu0 0.0
      %1790 = vmatpush.msra.mxu0 0.0
      %1791 = vmatpush.msra.mxu0 0.0
      %1792 = vmatpush.msra.mxu0 %v1598
      %1793 = vmatmul.f32.gmra.mxu0 %v1772
      %v1794 = vpop.f32.mrf.mxu0
      %v1795 = vadd.f32 0.0, %v1794
      %1796 = vmatmul.f32.gmra.mxu0 %v1775
      %v1797 = vpop.f32.mrf.mxu0
      %v1798 = vadd.f32 0.0, %v1797
      %1799 = vdwg.mxu0
      %s1800 = scalar_lea.vmem %s10, 64
      %v1801 = vld [vmem:[%s1800] sm:$0xff]
      %v1802 = vld [vmem:[%s1800 + $0x8] sm:$0xff]
      %v1803 = vld [vmem:[%s1800 + $0x10] sm:$0xff]
      %v1804 = vld [vmem:[%s1800 + $0x18] sm:$0xff]
      %v1806 = vsel %vm961, %v1795, 0
      %v1809 = vsel %vm961, %v1798, 0
      %1811 = vmatpush.msra.mxu0 0.0
      %1812 = vmatpush.msra.mxu0 0.0
      %1813 = vmatpush.msra.mxu0 0.0
      %1814 = vmatpush.msra.mxu0 0.0
      %1815 = vmatpush.msra.mxu0 0.0
      %1816 = vmatpush.msra.mxu0 0.0
      %1817 = vmatpush.msra.mxu0 0.0
      %1818 = vmatpush.msra.mxu0 0.0
      %1819 = vmatpush.msra.mxu0 0.0
      %1820 = vmatpush.msra.mxu0 0.0
      %1821 = vmatpush.msra.mxu0 0.0
      %1822 = vmatpush.msra.mxu0 0.0
      %1823 = vmatpush.msra.mxu0 0.0
      %1824 = vmatpush.msra.mxu0 0.0
      %1825 = vmatpush.msra.mxu0 %v1803
      %1826 = vmatpush.msra.mxu0 %v1801
      %1827 = vmatmul.f32.gmra.mxu0 %v1806
      %v1828 = vpop.f32.mrf.mxu0
      %v1829 = vadd.f32 0.0, %v1828
      %1830 = vmatmul.f32.gmra.mxu0 %v1809
      %v1831 = vpop.f32.mrf.mxu0
      %v1832 = vadd.f32 0.0, %v1831
      %1833 = vdwg.mxu0
      %1834 = vmatpush.msra.mxu0 0.0
      %1835 = vmatpush.msra.mxu0 0.0
      %1836 = vmatpush.msra.mxu0 0.0
      %1837 = vmatpush.msra.mxu0 0.0
      %1838 = vmatpush.msra.mxu0 0.0
      %1839 = vmatpush.msra.mxu0 0.0
      %1840 = vmatpush.msra.mxu0 0.0
      %1841 = vmatpush.msra.mxu0 0.0
      %1842 = vmatpush.msra.mxu0 0.0
      %1843 = vmatpush.msra.mxu0 0.0
      %1844 = vmatpush.msra.mxu0 0.0
      %1845 = vmatpush.msra.mxu0 0.0
      %1846 = vmatpush.msra.mxu0 0.0
      %1847 = vmatpush.msra.mxu0 0.0
      %1848 = vmatpush.msra.mxu0 %v1804
      %1849 = vmatpush.msra.mxu0 %v1802
      %1850 = vmatmul.f32.gmra.mxu0 %v1806
      %v1851 = vpop.f32.mrf.mxu0
      %v1852 = vadd.f32 0.0, %v1851
      %1853 = vmatmul.f32.gmra.mxu0 %v1809
      %v1854 = vpop.f32.mrf.mxu0
      %v1855 = vadd.f32 0.0, %v1854
      %1856 = vdwg.mxu0
      %v1857 = vadd.f32 %v1740, %v1829
      %v1858 = vadd.f32 %v1763, %v1852
      %v1859 = vadd.f32 %v1743, %v1832
      %v1860 = vadd.f32 %v1766, %v1855
      %s1861 = scalar_lea.vmem %s9, 48
      %v1862 = vld [vmem:[%s1861] sm:$0xff]
      %v1863 = vld [vmem:[%s1861 + $0x8] sm:$0xff]
      %v1865 = vsel %vm1589, %v1862, 0
      %v1868 = vsel %vm1589, %v1863, 0
      %1870 = vmatpush.msra.mxu0 0.0
      %1871 = vmatpush.msra.mxu0 0.0
      %1872 = vmatpush.msra.mxu0 0.0
      %1873 = vmatpush.msra.mxu0 0.0
      %1874 = vmatpush.msra.mxu0 0.0
      %1875 = vmatpush.msra.mxu0 0.0
      %1876 = vmatpush.msra.mxu0 0.0
      %1877 = vmatpush.msra.mxu0 0.0
      %1878 = vmatpush.msra.mxu0 0.0
      %1879 = vmatpush.msra.mxu0 0.0
      %1880 = vmatpush.msra.mxu0 0.0
      %1881 = vmatpush.msra.mxu0 0.0
      %1882 = vmatpush.msra.mxu0 0.0
      %1883 = vmatpush.msra.mxu0 0.0
      %1884 = vmatpush.msra.mxu0 0.0
      %1885 = vmatpush.msra.mxu0 %v1598
      %1886 = vmatmul.f32.gmra.mxu0 %v1865
      %v1887 = vpop.f32.mrf.mxu0
      %v1888 = vadd.f32 0.0, %v1887
      %1889 = vmatmul.f32.gmra.mxu0 %v1868
      %v1890 = vpop.f32.mrf.mxu0
      %v1891 = vadd.f32 0.0, %v1890
      %1892 = vdwg.mxu0
      %s1893 = scalar_lea.vmem %s10, 96
      %v1894 = vld [vmem:[%s1893] sm:$0xff]
      %v1895 = vld [vmem:[%s1893 + $0x8] sm:$0xff]
      %v1896 = vld [vmem:[%s1893 + $0x10] sm:$0xff]
      %v1897 = vld [vmem:[%s1893 + $0x18] sm:$0xff]
      %v1899 = vsel %vm961, %v1888, 0
      %v1902 = vsel %vm961, %v1891, 0
      %1904 = vmatpush.msra.mxu0 0.0
      %1905 = vmatpush.msra.mxu0 0.0
      %1906 = vmatpush.msra.mxu0 0.0
      %1907 = vmatpush.msra.mxu0 0.0
      %1908 = vmatpush.msra.mxu0 0.0
      %1909 = vmatpush.msra.mxu0 0.0
      %1910 = vmatpush.msra.mxu0 0.0
      %1911 = vmatpush.msra.mxu0 0.0
      %1912 = vmatpush.msra.mxu0 0.0
      %1913 = vmatpush.msra.mxu0 0.0
      %1914 = vmatpush.msra.mxu0 0.0
      %1915 = vmatpush.msra.mxu0 0.0
      %1916 = vmatpush.msra.mxu0 0.0
      %1917 = vmatpush.msra.mxu0 0.0
      %1918 = vmatpush.msra.mxu0 %v1896
      %1919 = vmatpush.msra.mxu0 %v1894
      %1920 = vmatmul.f32.gmra.mxu0 %v1899
      %v1921 = vpop.f32.mrf.mxu0
      %v1922 = vadd.f32 0.0, %v1921
      %1923 = vmatmul.f32.gmra.mxu0 %v1902
      %v1924 = vpop.f32.mrf.mxu0
      %v1925 = vadd.f32 0.0, %v1924
      %1926 = vdwg.mxu0
      %1927 = vmatpush.msra.mxu0 0.0
      %1928 = vmatpush.msra.mxu0 0.0
      %1929 = vmatpush.msra.mxu0 0.0
      %1930 = vmatpush.msra.mxu0 0.0
      %1931 = vmatpush.msra.mxu0 0.0
      %1932 = vmatpush.msra.mxu0 0.0
      %1933 = vmatpush.msra.mxu0 0.0
      %1934 = vmatpush.msra.mxu0 0.0
      %1935 = vmatpush.msra.mxu0 0.0
      %1936 = vmatpush.msra.mxu0 0.0
      %1937 = vmatpush.msra.mxu0 0.0
      %1938 = vmatpush.msra.mxu0 0.0
      %1939 = vmatpush.msra.mxu0 0.0
      %1940 = vmatpush.msra.mxu0 0.0
      %1941 = vmatpush.msra.mxu0 %v1897
      %1942 = vmatpush.msra.mxu0 %v1895
      %1943 = vmatmul.f32.gmra.mxu0 %v1899
      %v1944 = vpop.f32.mrf.mxu0
      %v1945 = vadd.f32 0.0, %v1944
      %1946 = vmatmul.f32.gmra.mxu0 %v1902
      %v1947 = vpop.f32.mrf.mxu0
      %v1948 = vadd.f32 0.0, %v1947
      %1949 = vdwg.mxu0
      %v1950 = vadd.f32 %v1857, %v1922
      %v1951 = vadd.f32 %v1858, %v1945
      %v1952 = vadd.f32 %v1859, %v1925
      %v1953 = vadd.f32 %v1860, %v1948
      %v1954 = vld [vmem:[%s11] sm:$0x3]
      %v1956 = vperm.slane %v1954, 0
      %v1957 = vperm.slane %v1954, 1
      %v1960 = vadd.f32 %v1950, %v1956
      %v1961 = vadd.f32 %v1951, %v1957
      %v1962 = vadd.f32 %v1952, %v1956
      %v1963 = vadd.f32 %v1953, %v1957
      %v1964 = vmax.f32 %v1960, 0.0
      %v1965 = vmax.f32 %v1961, 0.0
      %v1966 = vmax.f32 %v1962, 0.0
      %v1967 = vmax.f32 %v1963, 0.0
      %v1968 = vld [vmem:[%s12] sm:$0xff]
      %v1969 = vld [vmem:[%s12 + $0x8] sm:$0xff]
      %v1970 = vld [vmem:[%s12 + $0x10] sm:$0xff]
      %v1971 = vld [vmem:[%s12 + $0x18] sm:$0xff]
      %v1973 = vsel %vm961, %v1968, 0
      %v1976 = vsel %vm961, %v1969, 0
      %v1979 = vsel %vm961, %v1970, 0
      %v1982 = vsel %vm961, %v1971, 0
      %1984 = vmatpush.msra.mxu0 0.0
      %1985 = vmatpush.msra.mxu0 0.0
      %1986 = vmatpush.msra.mxu0 0.0
      %1987 = vmatpush.msra.mxu0 0.0
      %1988 = vmatpush.msra.mxu0 0.0
      %1989 = vmatpush.msra.mxu0 0.0
      %1990 = vmatpush.msra.mxu0 0.0
      %1991 = vmatpush.msra.mxu0 0.0
      %1992 = vmatpush.msra.mxu0 0.0
      %1993 = vmatpush.msra.mxu0 0.0
      %1994 = vmatpush.msra.mxu0 0.0
      %1995 = vmatpush.msra.mxu0 0.0
      %1996 = vmatpush.msra.mxu0 0.0
      %1997 = vmatpush.msra.mxu0 0.0
      %1998 = vmatpush.msra.mxu0 %v1966
      %1999 = vmatpush.msra.mxu0 %v1964
      %2000 = vmatmul.f32.gmra.mxu0 %v1973
      %v2001 = vpop.f32.mrf.mxu0
      %v2002 = vadd.f32 0.0, %v2001
      %2003 = vmatmul.f32.gmra.mxu0 %v1976
      %v2004 = vpop.f32.mrf.mxu0
      %v2005 = vadd.f32 0.0, %v2004
      %2006 = vmatmul.f32.gmra.mxu0 %v1979
      %v2007 = vpop.f32.mrf.mxu0
      %v2008 = vadd.f32 0.0, %v2007
      %2009 = vmatmul.f32.gmra.mxu0 %v1982
      %v2010 = vpop.f32.mrf.mxu0
      %v2011 = vadd.f32 0.0, %v2010
      %2012 = vdwg.mxu0
      %2013 = vmatpush.msra.mxu0 0.0
      %2014 = vmatpush.msra.mxu0 0.0
      %2015 = vmatpush.msra.mxu0 0.0
      %2016 = vmatpush.msra.mxu0 0.0
      %2017 = vmatpush.msra.mxu0 0.0
      %2018 = vmatpush.msra.mxu0 0.0
      %2019 = vmatpush.msra.mxu0 0.0
      %2020 = vmatpush.msra.mxu0 0.0
      %2021 = vmatpush.msra.mxu0 0.0
      %2022 = vmatpush.msra.mxu0 0.0
      %2023 = vmatpush.msra.mxu0 0.0
      %2024 = vmatpush.msra.mxu0 0.0
      %2025 = vmatpush.msra.mxu0 0.0
      %2026 = vmatpush.msra.mxu0 0.0
      %2027 = vmatpush.msra.mxu0 %v1967
      %2028 = vmatpush.msra.mxu0 %v1965
      %2029 = vmatmul.f32.gmra.mxu0 %v1973
      %v2030 = vpop.f32.mrf.mxu0
      %v2031 = vadd.f32 0.0, %v2030
      %2032 = vmatmul.f32.gmra.mxu0 %v1976
      %v2033 = vpop.f32.mrf.mxu0
      %v2034 = vadd.f32 0.0, %v2033
      %2035 = vmatmul.f32.gmra.mxu0 %v1979
      %v2036 = vpop.f32.mrf.mxu0
      %v2037 = vadd.f32 0.0, %v2036
      %2038 = vmatmul.f32.gmra.mxu0 %v1982
      %v2039 = vpop.f32.mrf.mxu0
      %v2040 = vadd.f32 0.0, %v2039
      %2041 = vdwg.mxu0
      %v2042 = vld [vmem:[%s13] sm:$0xff]
      %v2043 = vld [vmem:[%s13 + $0x8] sm:$0xff]
      %v2044 = vld [vmem:[%s13 + $0x10] sm:$0xff]
      %v2045 = vld [vmem:[%s13 + $0x18] sm:$0xff]
      %v2046 = vld [vmem:[%s13 + $0x20] sm:$0xff]
      %v2047 = vld [vmem:[%s13 + $0x28] sm:$0xff]
      %v2048 = vld [vmem:[%s13 + $0x30] sm:$0xff]
      %v2049 = vld [vmem:[%s13 + $0x38] sm:$0xff]
      %v2050 = vld [vmem:[%s13 + $0x40] sm:$0xff]
      %v2051 = vld [vmem:[%s13 + $0x48] sm:$0xff]
      %v2052 = vld [vmem:[%s13 + $0x50] sm:$0xff]
      %v2053 = vld [vmem:[%s13 + $0x58] sm:$0xff]
      %v2054 = vld [vmem:[%s13 + $0x60] sm:$0xff]
      %v2055 = vld [vmem:[%s13 + $0x68] sm:$0xff]
      %v2056 = vld [vmem:[%s13 + $0x70] sm:$0xff]
      %v2057 = vld [vmem:[%s13 + $0x78] sm:$0xff]
      %v2058 = vld [vmem:[%s13 + $0x80] sm:$0xff]
      %v2059 = vld [vmem:[%s13 + $0x88] sm:$0xff]
      %v2060 = vld [vmem:[%s13 + $0x90] sm:$0xff]
      %v2061 = vld [vmem:[%s13 + $0x98] sm:$0xff]
      %v2062 = vld [vmem:[%s13 + $0xa0] sm:$0xff]
      %v2063 = vld [vmem:[%s13 + $0xa8] sm:$0xff]
      %v2064 = vld [vmem:[%s13 + $0xb0] sm:$0xff]
      %v2065 = vld [vmem:[%s13 + $0xb8] sm:$0xff]
      %v2066 = vld [vmem:[%s13 + $0xc0] sm:$0xff]
      %v2067 = vld [vmem:[%s13 + $0xc8] sm:$0xff]
      %v2068 = vld [vmem:[%s13 + $0xd0] sm:$0xff]
      %v2069 = vld [vmem:[%s13 + $0xd8] sm:$0xff]
      %v2070 = vld [vmem:[%s13 + $0xe0] sm:$0xff]
      %v2071 = vld [vmem:[%s13 + $0xe8] sm:$0xff]
      %v2072 = vld [vmem:[%s13 + $0xf0] sm:$0xff]
      %v2073 = vld [vmem:[%s13 + $0xf8] sm:$0xff]
      %s2074 = scalar_lea.vmem %s12, 32
      %v2075 = vld [vmem:[%s2074] sm:$0xff]
      %v2076 = vld [vmem:[%s2074 + $0x8] sm:$0xff]
      %v2077 = vld [vmem:[%s2074 + $0x10] sm:$0xff]
      %v2078 = vld [vmem:[%s2074 + $0x18] sm:$0xff]
      %v2080 = vsel %vm961, %v2075, 0
      %v2083 = vsel %vm961, %v2076, 0
      %v2086 = vsel %vm961, %v2077, 0
      %v2089 = vsel %vm961, %v2078, 0
      %2091 = vmatpush.msra.mxu0 0.0
      %2092 = vmatpush.msra.mxu0 0.0
      %2093 = vmatpush.msra.mxu0 0.0
      %2094 = vmatpush.msra.mxu0 0.0
      %2095 = vmatpush.msra.mxu0 0.0
      %2096 = vmatpush.msra.mxu0 0.0
      %2097 = vmatpush.msra.mxu0 0.0
      %2098 = vmatpush.msra.mxu0 0.0
      %2099 = vmatpush.msra.mxu0 0.0
      %2100 = vmatpush.msra.mxu0 0.0
      %2101 = vmatpush.msra.mxu0 0.0
      %2102 = vmatpush.msra.mxu0 0.0
      %2103 = vmatpush.msra.mxu0 0.0
      %2104 = vmatpush.msra.mxu0 0.0
      %2105 = vmatpush.msra.mxu0 %v1966
      %2106 = vmatpush.msra.mxu0 %v1964
      %2107 = vmatmul.f32.gmra.mxu0 %v2080
      %v2108 = vpop.f32.mrf.mxu0
      %v2109 = vadd.f32 0.0, %v2108
      %2110 = vmatmul.f32.gmra.mxu0 %v2083
      %v2111 = vpop.f32.mrf.mxu0
      %v2112 = vadd.f32 0.0, %v2111
      %2113 = vmatmul.f32.gmra.mxu0 %v2086
      %v2114 = vpop.f32.mrf.mxu0
      %v2115 = vadd.f32 0.0, %v2114
      %2116 = vmatmul.f32.gmra.mxu0 %v2089
      %v2117 = vpop.f32.mrf.mxu0
      %v2118 = vadd.f32 0.0, %v2117
      %2119 = vdwg.mxu0
      %2120 = vmatpush.msra.mxu0 0.0
      %2121 = vmatpush.msra.mxu0 0.0
      %2122 = vmatpush.msra.mxu0 0.0
      %2123 = vmatpush.msra.mxu0 0.0
      %2124 = vmatpush.msra.mxu0 0.0
      %2125 = vmatpush.msra.mxu0 0.0
      %2126 = vmatpush.msra.mxu0 0.0
      %2127 = vmatpush.msra.mxu0 0.0
      %2128 = vmatpush.msra.mxu0 0.0
      %2129 = vmatpush.msra.mxu0 0.0
      %2130 = vmatpush.msra.mxu0 0.0
      %2131 = vmatpush.msra.mxu0 0.0
      %2132 = vmatpush.msra.mxu0 0.0
      %2133 = vmatpush.msra.mxu0 0.0
      %2134 = vmatpush.msra.mxu0 %v1967
      %2135 = vmatpush.msra.mxu0 %v1965
      %2136 = vmatmul.f32.gmra.mxu0 %v2080
      %v2137 = vpop.f32.mrf.mxu0
      %v2138 = vadd.f32 0.0, %v2137
      %2139 = vmatmul.f32.gmra.mxu0 %v2083
      %v2140 = vpop.f32.mrf.mxu0
      %v2141 = vadd.f32 0.0, %v2140
      %2142 = vmatmul.f32.gmra.mxu0 %v2086
      %v2143 = vpop.f32.mrf.mxu0
      %v2144 = vadd.f32 0.0, %v2143
      %2145 = vmatmul.f32.gmra.mxu0 %v2089
      %v2146 = vpop.f32.mrf.mxu0
      %v2147 = vadd.f32 0.0, %v2146
      %2148 = vdwg.mxu0
      %s2149 = scalar_lea.vmem %s13, 256
      %v2150 = vld [vmem:[%s2149] sm:$0xff]
      %v2151 = vld [vmem:[%s2149 + $0x8] sm:$0xff]
      %v2152 = vld [vmem:[%s2149 + $0x10] sm:$0xff]
      %v2153 = vld [vmem:[%s2149 + $0x18] sm:$0xff]
      %v2154 = vld [vmem:[%s2149 + $0x20] sm:$0xff]
      %v2155 = vld [vmem:[%s2149 + $0x28] sm:$0xff]
      %v2156 = vld [vmem:[%s2149 + $0x30] sm:$0xff]
      %v2157 = vld [vmem:[%s2149 + $0x38] sm:$0xff]
      %v2158 = vld [vmem:[%s2149 + $0x40] sm:$0xff]
      %v2159 = vld [vmem:[%s2149 + $0x48] sm:$0xff]
      %v2160 = vld [vmem:[%s2149 + $0x50] sm:$0xff]
      %v2161 = vld [vmem:[%s2149 + $0x58] sm:$0xff]
      %v2162 = vld [vmem:[%s2149 + $0x60] sm:$0xff]
      %v2163 = vld [vmem:[%s2149 + $0x68] sm:$0xff]
      %v2164 = vld [vmem:[%s2149 + $0x70] sm:$0xff]
      %v2165 = vld [vmem:[%s2149 + $0x78] sm:$0xff]
      %v2166 = vld [vmem:[%s2149 + $0x80] sm:$0xff]
      %v2167 = vld [vmem:[%s2149 + $0x88] sm:$0xff]
      %v2168 = vld [vmem:[%s2149 + $0x90] sm:$0xff]
      %v2169 = vld [vmem:[%s2149 + $0x98] sm:$0xff]
      %v2170 = vld [vmem:[%s2149 + $0xa0] sm:$0xff]
      %v2171 = vld [vmem:[%s2149 + $0xa8] sm:$0xff]
      %v2172 = vld [vmem:[%s2149 + $0xb0] sm:$0xff]
      %v2173 = vld [vmem:[%s2149 + $0xb8] sm:$0xff]
      %v2174 = vld [vmem:[%s2149 + $0xc0] sm:$0xff]
      %v2175 = vld [vmem:[%s2149 + $0xc8] sm:$0xff]
      %v2176 = vld [vmem:[%s2149 + $0xd0] sm:$0xff]
      %v2177 = vld [vmem:[%s2149 + $0xd8] sm:$0xff]
      %v2178 = vld [vmem:[%s2149 + $0xe0] sm:$0xff]
      %v2179 = vld [vmem:[%s2149 + $0xe8] sm:$0xff]
      %v2180 = vld [vmem:[%s2149 + $0xf0] sm:$0xff]
      %v2181 = vld [vmem:[%s2149 + $0xf8] sm:$0xff]
      %2182 = vmatpush.msra.mxu0 %v2165
      %2183 = vmatpush.msra.mxu0 %v2164
      %2184 = vmatpush.msra.mxu0 %v2163
      %2185 = vmatpush.msra.mxu0 %v2162
      %2186 = vmatpush.msra.mxu0 %v2161
      %2187 = vmatpush.msra.mxu0 %v2160
      %2188 = vmatpush.msra.mxu0 %v2159
      %2189 = vmatpush.msra.mxu0 %v2158
      %2190 = vmatpush.msra.mxu0 %v2157
      %2191 = vmatpush.msra.mxu0 %v2156
      %2192 = vmatpush.msra.mxu0 %v2155
      %2193 = vmatpush.msra.mxu0 %v2154
      %2194 = vmatpush.msra.mxu0 %v2153
      %2195 = vmatpush.msra.mxu0 %v2152
      %2196 = vmatpush.msra.mxu0 %v2151
      %2197 = vmatpush.msra.mxu0 %v2150
      %2198 = vmatmul.f32.gmra.mxu0 %v2109
      %v2199 = vpop.f32.mrf.mxu0
      %v2200 = vadd.f32 0.0, %v2199
      %2201 = vmatmul.f32.gmra.mxu0 %v2112
      %v2202 = vpop.f32.mrf.mxu0
      %v2203 = vadd.f32 0.0, %v2202
      %2204 = vmatmul.f32.gmra.mxu0 %v2115
      %v2205 = vpop.f32.mrf.mxu0
      %v2206 = vadd.f32 0.0, %v2205
      %2207 = vmatmul.f32.gmra.mxu0 %v2118
      %v2208 = vpop.f32.mrf.mxu0
      %v2209 = vadd.f32 0.0, %v2208
      %2210 = vdwg.mxu0
      %2211 = vmatpush.msra.mxu0 %v2181
      %2212 = vmatpush.msra.mxu0 %v2180
      %2213 = vmatpush.msra.mxu0 %v2179
      %2214 = vmatpush.msra.mxu0 %v2178
      %2215 = vmatpush.msra.mxu0 %v2177
      %2216 = vmatpush.msra.mxu0 %v2176
      %2217 = vmatpush.msra.mxu0 %v2175
      %2218 = vmatpush.msra.mxu0 %v2174
      %2219 = vmatpush.msra.mxu0 %v2173
      %2220 = vmatpush.msra.mxu0 %v2172
      %2221 = vmatpush.msra.mxu0 %v2171
      %2222 = vmatpush.msra.mxu0 %v2170
      %2223 = vmatpush.msra.mxu0 %v2169
      %2224 = vmatpush.msra.mxu0 %v2168
      %2225 = vmatpush.msra.mxu0 %v2167
      %2226 = vmatpush.msra.mxu0 %v2166
      %2227 = vmatmul.f32.gmra.mxu0 %v2138
      %v2228 = vpop.f32.mrf.mxu0
      %v2229 = vadd.f32 %v2200, %v2228
      %2230 = vmatmul.f32.gmra.mxu0 %v2141
      %v2231 = vpop.f32.mrf.mxu0
      %v2232 = vadd.f32 %v2203, %v2231
      %2233 = vmatmul.f32.gmra.mxu0 %v2144
      %v2234 = vpop.f32.mrf.mxu0
      %v2235 = vadd.f32 %v2206, %v2234
      %2236 = vmatmul.f32.gmra.mxu0 %v2147
      %v2237 = vpop.f32.mrf.mxu0
      %v2238 = vadd.f32 %v2209, %v2237
      %2239 = vdwg.mxu0
      %2240 = vmatpush.msra.mxu0 %v2057
      %2241 = vmatpush.msra.mxu0 %v2056
      %2242 = vmatpush.msra.mxu0 %v2055
      %2243 = vmatpush.msra.mxu0 %v2054
      %2244 = vmatpush.msra.mxu0 %v2053
      %2245 = vmatpush.msra.mxu0 %v2052
      %2246 = vmatpush.msra.mxu0 %v2051
      %2247 = vmatpush.msra.mxu0 %v2050
      %2248 = vmatpush.msra.mxu0 %v2049
      %2249 = vmatpush.msra.mxu0 %v2048
      %2250 = vmatpush.msra.mxu0 %v2047
      %2251 = vmatpush.msra.mxu0 %v2046
      %2252 = vmatpush.msra.mxu0 %v2045
      %2253 = vmatpush.msra.mxu0 %v2044
      %2254 = vmatpush.msra.mxu0 %v2043
      %2255 = vmatpush.msra.mxu0 %v2042
      %2256 = vmatmul.f32.gmra.mxu0 %v2002
      %v2257 = vpop.f32.mrf.mxu0
      %v2258 = vadd.f32 %v2229, %v2257
      %2259 = vmatmul.f32.gmra.mxu0 %v2005
      %v2260 = vpop.f32.mrf.mxu0
      %v2261 = vadd.f32 %v2232, %v2260
      %2262 = vmatmul.f32.gmra.mxu0 %v2008
      %v2263 = vpop.f32.mrf.mxu0
      %v2264 = vadd.f32 %v2235, %v2263
      %2265 = vmatmul.f32.gmra.mxu0 %v2011
      %v2266 = vpop.f32.mrf.mxu0
      %v2267 = vadd.f32 %v2238, %v2266
      %2268 = vdwg.mxu0
      %2269 = vmatpush.msra.mxu0 %v2073
      %2270 = vmatpush.msra.mxu0 %v2072
      %2271 = vmatpush.msra.mxu0 %v2071
      %2272 = vmatpush.msra.mxu0 %v2070
      %2273 = vmatpush.msra.mxu0 %v2069
      %2274 = vmatpush.msra.mxu0 %v2068
      %2275 = vmatpush.msra.mxu0 %v2067
      %2276 = vmatpush.msra.mxu0 %v2066
      %2277 = vmatpush.msra.mxu0 %v2065
      %2278 = vmatpush.msra.mxu0 %v2064
      %2279 = vmatpush.msra.mxu0 %v2063
      %2280 = vmatpush.msra.mxu0 %v2062
      %2281 = vmatpush.msra.mxu0 %v2061
      %2282 = vmatpush.msra.mxu0 %v2060
      %2283 = vmatpush.msra.mxu0 %v2059
      %2284 = vmatpush.msra.mxu0 %v2058
      %2285 = vmatmul.f32.gmra.mxu0 %v2031
      %v2286 = vpop.f32.mrf.mxu0
      %v2287 = vadd.f32 %v2258, %v2286
      %2288 = vmatmul.f32.gmra.mxu0 %v2034
      %v2289 = vpop.f32.mrf.mxu0
      %v2290 = vadd.f32 %v2261, %v2289
      %2291 = vmatmul.f32.gmra.mxu0 %v2037
      %v2292 = vpop.f32.mrf.mxu0
      %v2293 = vadd.f32 %v2264, %v2292
      %2294 = vmatmul.f32.gmra.mxu0 %v2040
      %v2295 = vpop.f32.mrf.mxu0
      %v2296 = vadd.f32 %v2267, %v2295
      %2297 = vdwg.mxu0
      %s2298 = scalar_lea.vmem %s12, 64
      %v2299 = vld [vmem:[%s2298] sm:$0xff]
      %v2300 = vld [vmem:[%s2298 + $0x8] sm:$0xff]
      %v2301 = vld [vmem:[%s2298 + $0x10] sm:$0xff]
      %v2302 = vld [vmem:[%s2298 + $0x18] sm:$0xff]
      %v2304 = vsel %vm961, %v2299, 0
      %v2307 = vsel %vm961, %v2300, 0
      %v2310 = vsel %vm961, %v2301, 0
      %v2313 = vsel %vm961, %v2302, 0
      %2315 = vmatpush.msra.mxu0 0.0
      %2316 = vmatpush.msra.mxu0 0.0
      %2317 = vmatpush.msra.mxu0 0.0
      %2318 = vmatpush.msra.mxu0 0.0
      %2319 = vmatpush.msra.mxu0 0.0
      %2320 = vmatpush.msra.mxu0 0.0
      %2321 = vmatpush.msra.mxu0 0.0
      %2322 = vmatpush.msra.mxu0 0.0
      %2323 = vmatpush.msra.mxu0 0.0
      %2324 = vmatpush.msra.mxu0 0.0
      %2325 = vmatpush.msra.mxu0 0.0
      %2326 = vmatpush.msra.mxu0 0.0
      %2327 = vmatpush.msra.mxu0 0.0
      %2328 = vmatpush.msra.mxu0 0.0
      %2329 = vmatpush.msra.mxu0 %v1966
      %2330 = vmatpush.msra.mxu0 %v1964
      %2331 = vmatmul.f32.gmra.mxu0 %v2304
      %v2332 = vpop.f32.mrf.mxu0
      %v2333 = vadd.f32 0.0, %v2332
      %2334 = vmatmul.f32.gmra.mxu0 %v2307
      %v2335 = vpop.f32.mrf.mxu0
      %v2336 = vadd.f32 0.0, %v2335
      %2337 = vmatmul.f32.gmra.mxu0 %v2310
      %v2338 = vpop.f32.mrf.mxu0
      %v2339 = vadd.f32 0.0, %v2338
      %2340 = vmatmul.f32.gmra.mxu0 %v2313
      %v2341 = vpop.f32.mrf.mxu0
      %v2342 = vadd.f32 0.0, %v2341
      %2343 = vdwg.mxu0
      %2344 = vmatpush.msra.mxu0 0.0
      %2345 = vmatpush.msra.mxu0 0.0
      %2346 = vmatpush.msra.mxu0 0.0
      %2347 = vmatpush.msra.mxu0 0.0
      %2348 = vmatpush.msra.mxu0 0.0
      %2349 = vmatpush.msra.mxu0 0.0
      %2350 = vmatpush.msra.mxu0 0.0
      %2351 = vmatpush.msra.mxu0 0.0
      %2352 = vmatpush.msra.mxu0 0.0
      %2353 = vmatpush.msra.mxu0 0.0
      %2354 = vmatpush.msra.mxu0 0.0
      %2355 = vmatpush.msra.mxu0 0.0
      %2356 = vmatpush.msra.mxu0 0.0
      %2357 = vmatpush.msra.mxu0 0.0
      %2358 = vmatpush.msra.mxu0 %v1967
      %2359 = vmatpush.msra.mxu0 %v1965
      %2360 = vmatmul.f32.gmra.mxu0 %v2304
      %v2361 = vpop.f32.mrf.mxu0
      %v2362 = vadd.f32 0.0, %v2361
      %2363 = vmatmul.f32.gmra.mxu0 %v2307
      %v2364 = vpop.f32.mrf.mxu0
      %v2365 = vadd.f32 0.0, %v2364
      %2366 = vmatmul.f32.gmra.mxu0 %v2310
      %v2367 = vpop.f32.mrf.mxu0
      %v2368 = vadd.f32 0.0, %v2367
      %2369 = vmatmul.f32.gmra.mxu0 %v2313
      %v2370 = vpop.f32.mrf.mxu0
      %v2371 = vadd.f32 0.0, %v2370
      %2372 = vdwg.mxu0
      %s2373 = scalar_lea.vmem %s13, 512
      %v2374 = vld [vmem:[%s2373] sm:$0xff]
      %v2375 = vld [vmem:[%s2373 + $0x8] sm:$0xff]
      %v2376 = vld [vmem:[%s2373 + $0x10] sm:$0xff]
      %v2377 = vld [vmem:[%s2373 + $0x18] sm:$0xff]
      %v2378 = vld [vmem:[%s2373 + $0x20] sm:$0xff]
      %v2379 = vld [vmem:[%s2373 + $0x28] sm:$0xff]
      %v2380 = vld [vmem:[%s2373 + $0x30] sm:$0xff]
      %v2381 = vld [vmem:[%s2373 + $0x38] sm:$0xff]
      %v2382 = vld [vmem:[%s2373 + $0x40] sm:$0xff]
      %v2383 = vld [vmem:[%s2373 + $0x48] sm:$0xff]
      %v2384 = vld [vmem:[%s2373 + $0x50] sm:$0xff]
      %v2385 = vld [vmem:[%s2373 + $0x58] sm:$0xff]
      %v2386 = vld [vmem:[%s2373 + $0x60] sm:$0xff]
      %v2387 = vld [vmem:[%s2373 + $0x68] sm:$0xff]
      %v2388 = vld [vmem:[%s2373 + $0x70] sm:$0xff]
      %v2389 = vld [vmem:[%s2373 + $0x78] sm:$0xff]
      %v2390 = vld [vmem:[%s2373 + $0x80] sm:$0xff]
      %v2391 = vld [vmem:[%s2373 + $0x88] sm:$0xff]
      %v2392 = vld [vmem:[%s2373 + $0x90] sm:$0xff]
      %v2393 = vld [vmem:[%s2373 + $0x98] sm:$0xff]
      %v2394 = vld [vmem:[%s2373 + $0xa0] sm:$0xff]
      %v2395 = vld [vmem:[%s2373 + $0xa8] sm:$0xff]
      %v2396 = vld [vmem:[%s2373 + $0xb0] sm:$0xff]
      %v2397 = vld [vmem:[%s2373 + $0xb8] sm:$0xff]
      %v2398 = vld [vmem:[%s2373 + $0xc0] sm:$0xff]
      %v2399 = vld [vmem:[%s2373 + $0xc8] sm:$0xff]
      %v2400 = vld [vmem:[%s2373 + $0xd0] sm:$0xff]
      %v2401 = vld [vmem:[%s2373 + $0xd8] sm:$0xff]
      %v2402 = vld [vmem:[%s2373 + $0xe0] sm:$0xff]
      %v2403 = vld [vmem:[%s2373 + $0xe8] sm:$0xff]
      %v2404 = vld [vmem:[%s2373 + $0xf0] sm:$0xff]
      %v2405 = vld [vmem:[%s2373 + $0xf8] sm:$0xff]
      %2406 = vmatpush.msra.mxu0 %v2389
      %2407 = vmatpush.msra.mxu0 %v2388
      %2408 = vmatpush.msra.mxu0 %v2387
      %2409 = vmatpush.msra.mxu0 %v2386
      %2410 = vmatpush.msra.mxu0 %v2385
      %2411 = vmatpush.msra.mxu0 %v2384
      %2412 = vmatpush.msra.mxu0 %v2383
      %2413 = vmatpush.msra.mxu0 %v2382
      %2414 = vmatpush.msra.mxu0 %v2381
      %2415 = vmatpush.msra.mxu0 %v2380
      %2416 = vmatpush.msra.mxu0 %v2379
      %2417 = vmatpush.msra.mxu0 %v2378
      %2418 = vmatpush.msra.mxu0 %v2377
      %2419 = vmatpush.msra.mxu0 %v2376
      %2420 = vmatpush.msra.mxu0 %v2375
      %2421 = vmatpush.msra.mxu0 %v2374
      %2422 = vmatmul.f32.gmra.mxu0 %v2333
      %v2423 = vpop.f32.mrf.mxu0
      %v2424 = vadd.f32 0.0, %v2423
      %2425 = vmatmul.f32.gmra.mxu0 %v2336
      %v2426 = vpop.f32.mrf.mxu0
      %v2427 = vadd.f32 0.0, %v2426
      %2428 = vmatmul.f32.gmra.mxu0 %v2339
      %v2429 = vpop.f32.mrf.mxu0
      %v2430 = vadd.f32 0.0, %v2429
      %2431 = vmatmul.f32.gmra.mxu0 %v2342
      %v2432 = vpop.f32.mrf.mxu0
      %v2433 = vadd.f32 0.0, %v2432
      %2434 = vdwg.mxu0
      %2435 = vmatpush.msra.mxu0 %v2405
      %2436 = vmatpush.msra.mxu0 %v2404
      %2437 = vmatpush.msra.mxu0 %v2403
      %2438 = vmatpush.msra.mxu0 %v2402
      %2439 = vmatpush.msra.mxu0 %v2401
      %2440 = vmatpush.msra.mxu0 %v2400
      %2441 = vmatpush.msra.mxu0 %v2399
      %2442 = vmatpush.msra.mxu0 %v2398
      %2443 = vmatpush.msra.mxu0 %v2397
      %2444 = vmatpush.msra.mxu0 %v2396
      %2445 = vmatpush.msra.mxu0 %v2395
      %2446 = vmatpush.msra.mxu0 %v2394
      %2447 = vmatpush.msra.mxu0 %v2393
      %2448 = vmatpush.msra.mxu0 %v2392
      %2449 = vmatpush.msra.mxu0 %v2391
      %2450 = vmatpush.msra.mxu0 %v2390
      %2451 = vmatmul.f32.gmra.mxu0 %v2362
      %v2452 = vpop.f32.mrf.mxu0
      %v2453 = vadd.f32 %v2424, %v2452
      %2454 = vmatmul.f32.gmra.mxu0 %v2365
      %v2455 = vpop.f32.mrf.mxu0
      %v2456 = vadd.f32 %v2427, %v2455
      %2457 = vmatmul.f32.gmra.mxu0 %v2368
      %v2458 = vpop.f32.mrf.mxu0
      %v2459 = vadd.f32 %v2430, %v2458
      %2460 = vmatmul.f32.gmra.mxu0 %v2371
      %v2461 = vpop.f32.mrf.mxu0
      %v2462 = vadd.f32 %v2433, %v2461
      %2463 = vdwg.mxu0
      %v2464 = vadd.f32 %v2287, %v2453
      %v2465 = vadd.f32 %v2290, %v2456
      %v2466 = vadd.f32 %v2293, %v2459
      %v2467 = vadd.f32 %v2296, %v2462
      %s2468 = scalar_lea.vmem %s12, 96
      %v2469 = vld [vmem:[%s2468] sm:$0xff]
      %v2470 = vld [vmem:[%s2468 + $0x8] sm:$0xff]
      %v2471 = vld [vmem:[%s2468 + $0x10] sm:$0xff]
      %v2472 = vld [vmem:[%s2468 + $0x18] sm:$0xff]
      %v2474 = vsel %vm961, %v2469, 0
      %v2477 = vsel %vm961, %v2470, 0
      %v2480 = vsel %vm961, %v2471, 0
      %v2483 = vsel %vm961, %v2472, 0
      %2485 = vmatpush.msra.mxu0 0.0
      %2486 = vmatpush.msra.mxu0 0.0
      %2487 = vmatpush.msra.mxu0 0.0
      %2488 = vmatpush.msra.mxu0 0.0
      %2489 = vmatpush.msra.mxu0 0.0
      %2490 = vmatpush.msra.mxu0 0.0
      %2491 = vmatpush.msra.mxu0 0.0
      %2492 = vmatpush.msra.mxu0 0.0
      %2493 = vmatpush.msra.mxu0 0.0
      %2494 = vmatpush.msra.mxu0 0.0
      %2495 = vmatpush.msra.mxu0 0.0
      %2496 = vmatpush.msra.mxu0 0.0
      %2497 = vmatpush.msra.mxu0 0.0
      %2498 = vmatpush.msra.mxu0 0.0
      %2499 = vmatpush.msra.mxu0 %v1966
      %2500 = vmatpush.msra.mxu0 %v1964
      %2501 = vmatmul.f32.gmra.mxu0 %v2474
      %v2502 = vpop.f32.mrf.mxu0
      %v2503 = vadd.f32 0.0, %v2502
      %2504 = vmatmul.f32.gmra.mxu0 %v2477
      %v2505 = vpop.f32.mrf.mxu0
      %v2506 = vadd.f32 0.0, %v2505
      %2507 = vmatmul.f32.gmra.mxu0 %v2480
      %v2508 = vpop.f32.mrf.mxu0
      %v2509 = vadd.f32 0.0, %v2508
      %2510 = vmatmul.f32.gmra.mxu0 %v2483
      %v2511 = vpop.f32.mrf.mxu0
      %v2512 = vadd.f32 0.0, %v2511
      %2513 = vdwg.mxu0
      %2514 = vmatpush.msra.mxu0 0.0
      %2515 = vmatpush.msra.mxu0 0.0
      %2516 = vmatpush.msra.mxu0 0.0
      %2517 = vmatpush.msra.mxu0 0.0
      %2518 = vmatpush.msra.mxu0 0.0
      %2519 = vmatpush.msra.mxu0 0.0
      %2520 = vmatpush.msra.mxu0 0.0
      %2521 = vmatpush.msra.mxu0 0.0
      %2522 = vmatpush.msra.mxu0 0.0
      %2523 = vmatpush.msra.mxu0 0.0
      %2524 = vmatpush.msra.mxu0 0.0
      %2525 = vmatpush.msra.mxu0 0.0
      %2526 = vmatpush.msra.mxu0 0.0
      %2527 = vmatpush.msra.mxu0 0.0
      %2528 = vmatpush.msra.mxu0 %v1967
      %2529 = vmatpush.msra.mxu0 %v1965
      %2530 = vmatmul.f32.gmra.mxu0 %v2474
      %v2531 = vpop.f32.mrf.mxu0
      %v2532 = vadd.f32 0.0, %v2531
      %2533 = vmatmul.f32.gmra.mxu0 %v2477
      %v2534 = vpop.f32.mrf.mxu0
      %v2535 = vadd.f32 0.0, %v2534
      %2536 = vmatmul.f32.gmra.mxu0 %v2480
      %v2537 = vpop.f32.mrf.mxu0
      %v2538 = vadd.f32 0.0, %v2537
      %2539 = vmatmul.f32.gmra.mxu0 %v2483
      %v2540 = vpop.f32.mrf.mxu0
      %v2541 = vadd.f32 0.0, %v2540
      %2542 = vdwg.mxu0
      %s2543 = scalar_lea.vmem %s13, 768
      %v2544 = vld [vmem:[%s2543] sm:$0xff]
      %v2545 = vld [vmem:[%s2543 + $0x8] sm:$0xff]
      %v2546 = vld [vmem:[%s2543 + $0x10] sm:$0xff]
      %v2547 = vld [vmem:[%s2543 + $0x18] sm:$0xff]
      %v2548 = vld [vmem:[%s2543 + $0x20] sm:$0xff]
      %v2549 = vld [vmem:[%s2543 + $0x28] sm:$0xff]
      %v2550 = vld [vmem:[%s2543 + $0x30] sm:$0xff]
      %v2551 = vld [vmem:[%s2543 + $0x38] sm:$0xff]
      %v2552 = vld [vmem:[%s2543 + $0x40] sm:$0xff]
      %v2553 = vld [vmem:[%s2543 + $0x48] sm:$0xff]
      %v2554 = vld [vmem:[%s2543 + $0x50] sm:$0xff]
      %v2555 = vld [vmem:[%s2543 + $0x58] sm:$0xff]
      %v2556 = vld [vmem:[%s2543 + $0x60] sm:$0xff]
      %v2557 = vld [vmem:[%s2543 + $0x68] sm:$0xff]
      %v2558 = vld [vmem:[%s2543 + $0x70] sm:$0xff]
      %v2559 = vld [vmem:[%s2543 + $0x78] sm:$0xff]
      %v2560 = vld [vmem:[%s2543 + $0x80] sm:$0xff]
      %v2561 = vld [vmem:[%s2543 + $0x88] sm:$0xff]
      %v2562 = vld [vmem:[%s2543 + $0x90] sm:$0xff]
      %v2563 = vld [vmem:[%s2543 + $0x98] sm:$0xff]
      %v2564 = vld [vmem:[%s2543 + $0xa0] sm:$0xff]
      %v2565 = vld [vmem:[%s2543 + $0xa8] sm:$0xff]
      %v2566 = vld [vmem:[%s2543 + $0xb0] sm:$0xff]
      %v2567 = vld [vmem:[%s2543 + $0xb8] sm:$0xff]
      %v2568 = vld [vmem:[%s2543 + $0xc0] sm:$0xff]
      %v2569 = vld [vmem:[%s2543 + $0xc8] sm:$0xff]
      %v2570 = vld [vmem:[%s2543 + $0xd0] sm:$0xff]
      %v2571 = vld [vmem:[%s2543 + $0xd8] sm:$0xff]
      %v2572 = vld [vmem:[%s2543 + $0xe0] sm:$0xff]
      %v2573 = vld [vmem:[%s2543 + $0xe8] sm:$0xff]
      %v2574 = vld [vmem:[%s2543 + $0xf0] sm:$0xff]
      %v2575 = vld [vmem:[%s2543 + $0xf8] sm:$0xff]
      %2576 = vmatpush.msra.mxu0 %v2559
      %2577 = vmatpush.msra.mxu0 %v2558
      %2578 = vmatpush.msra.mxu0 %v2557
      %2579 = vmatpush.msra.mxu0 %v2556
      %2580 = vmatpush.msra.mxu0 %v2555
      %2581 = vmatpush.msra.mxu0 %v2554
      %2582 = vmatpush.msra.mxu0 %v2553
      %2583 = vmatpush.msra.mxu0 %v2552
      %2584 = vmatpush.msra.mxu0 %v2551
      %2585 = vmatpush.msra.mxu0 %v2550
      %2586 = vmatpush.msra.mxu0 %v2549
      %2587 = vmatpush.msra.mxu0 %v2548
      %2588 = vmatpush.msra.mxu0 %v2547
      %2589 = vmatpush.msra.mxu0 %v2546
      %2590 = vmatpush.msra.mxu0 %v2545
      %2591 = vmatpush.msra.mxu0 %v2544
      %2592 = vmatmul.f32.gmra.mxu0 %v2503
      %v2593 = vpop.f32.mrf.mxu0
      %v2594 = vadd.f32 0.0, %v2593
      %2595 = vmatmul.f32.gmra.mxu0 %v2506
      %v2596 = vpop.f32.mrf.mxu0
      %v2597 = vadd.f32 0.0, %v2596
      %2598 = vmatmul.f32.gmra.mxu0 %v2509
      %v2599 = vpop.f32.mrf.mxu0
      %v2600 = vadd.f32 0.0, %v2599
      %2601 = vmatmul.f32.gmra.mxu0 %v2512
      %v2602 = vpop.f32.mrf.mxu0
      %v2603 = vadd.f32 0.0, %v2602
      %2604 = vdwg.mxu0
      %2605 = vmatpush.msra.mxu0 %v2575
      %2606 = vmatpush.msra.mxu0 %v2574
      %2607 = vmatpush.msra.mxu0 %v2573
      %2608 = vmatpush.msra.mxu0 %v2572
      %2609 = vmatpush.msra.mxu0 %v2571
      %2610 = vmatpush.msra.mxu0 %v2570
      %2611 = vmatpush.msra.mxu0 %v2569
      %2612 = vmatpush.msra.mxu0 %v2568
      %2613 = vmatpush.msra.mxu0 %v2567
      %2614 = vmatpush.msra.mxu0 %v2566
      %2615 = vmatpush.msra.mxu0 %v2565
      %2616 = vmatpush.msra.mxu0 %v2564
      %2617 = vmatpush.msra.mxu0 %v2563
      %2618 = vmatpush.msra.mxu0 %v2562
      %2619 = vmatpush.msra.mxu0 %v2561
      %2620 = vmatpush.msra.mxu0 %v2560
      %2621 = vmatmul.f32.gmra.mxu0 %v2532
      %v2622 = vpop.f32.mrf.mxu0
      %v2623 = vadd.f32 %v2594, %v2622
      %2624 = vmatmul.f32.gmra.mxu0 %v2535
      %v2625 = vpop.f32.mrf.mxu0
      %v2626 = vadd.f32 %v2597, %v2625
      %2627 = vmatmul.f32.gmra.mxu0 %v2538
      %v2628 = vpop.f32.mrf.mxu0
      %v2629 = vadd.f32 %v2600, %v2628
      %2630 = vmatmul.f32.gmra.mxu0 %v2541
      %v2631 = vpop.f32.mrf.mxu0
      %v2632 = vadd.f32 %v2603, %v2631
      %2633 = vdwg.mxu0
      %v2634 = vadd.f32 %v2464, %v2623
      %v2635 = vadd.f32 %v2465, %v2626
      %v2636 = vadd.f32 %v2466, %v2629
      %v2637 = vadd.f32 %v2467, %v2632
      %v2638 = vld [vmem:[%s14] sm:$0x1]
      %v2640 = vperm.slane %v2638, 0
      %v2642 = vadd.f32 %v2634, %v2640
      %v2643 = vadd.f32 %v2635, %v2640
      %v2644 = vadd.f32 %v2636, %v2640
      %v2645 = vadd.f32 %v2637, %v2640
      %v2646 = vtanh.pop %v2642
      %v2647 = vtanh.pop %v2643
      %v2648 = vtanh.pop %v2644
      %v2649 = vtanh.pop %v2645
      %2650 = vst.msk [vmem:[%s496] sm:$0xff] %vm615, %v2646
      %2651 = vst.msk [vmem:[%s496 + $0x8] sm:$0xff] %vm615, %v2647
      %2652 = vst.msk [vmem:[%s496 + $0x10] sm:$0xff] %vm615, %v2648
      %2653 = vst.msk [vmem:[%s496 + $0x18] sm:$0xff] %vm615, %v2649
      %s2654 = smul.u32 4, %s26
      %p2655 = scmp.lt.s32.totalorder %s2654, 7
      %s2656 = scalar_select %p2655, %s2654, 7
      %s2657 = smul.addr %s2656, 8
      %s2658 = scalar_lea.vmem %s15, %s2657
      // Predicated region
      $region81: #{conv_autoencoder_forward.1} parent=79 // pred_check
        %p2659 = pneg %p364
      $region82: #{conv_autoencoder_forward.1} parent=79 // pred_check_branch
        %2661 = sbr.rel (%p2659) target = $region84
      $region83: #{conv_autoencoder_forward.1} parent=79 // pred_region
        %s2662 = smul.u32 4, %s26
      $region84: #{conv_autoencoder_forward.1} parent=79 // pred_fallthru
        _
    $region80: #{conv_autoencoder_forward.1} parent=5 // pred_fallthru
      _
    %p2663 = scmp.le.s32.totalorder 2, %s21
    // Predicated region
    $region85: #{conv_autoencoder_forward.1} parent=5 // pred_check
      %p2664 = pneg %p2663
    $region86: #{conv_autoencoder_forward.1} parent=5 // pred_check_branch
      %2666 = sbr.rel (%p2664) target = $region88
    $region87: #{conv_autoencoder_forward.1} parent=5 // pred_region
      %s2667 = ssub.s32 %s21, 2
      // Predicated region
      $region89: #{conv_autoencoder_forward.1} parent=87 // pred_check
        %p2668 = pneg %p370
      $region90: #{conv_autoencoder_forward.1} parent=87 // pred_check_branch
        %2670 = sbr.rel (%p2668) target = $region92
      $region91: #{conv_autoencoder_forward.1} parent=87 // pred_region
        %s2671 = smul.u32 4, %s27
        %p2672 = scmp.lt.s32.totalorder %s2671, 7
        %s2673 = scalar_select %p2672, %s2671, 7
        %s2674 = smul.addr %s2673, 8
        %s2675 = scalar_lea.vmem %s15, %s2674
      $region92: #{conv_autoencoder_forward.1} parent=87 // pred_fallthru
        _
    $region88: #{conv_autoencoder_forward.1} parent=5 // pred_fallthru
      _
  $region6: #{conv_autoencoder_forward.1} parent=0 // loop_footer
    %s25 = sadd.s32 1, %s21
  $region7: #{conv_autoencoder_forward.1} parent=0 // loop_footer_branch
    %20 = sbr.rel target = $region3
  $region8: #{conv_autoencoder_forward.1} parent=0 // loop_exit
    _

</llo_original>
